<compile_context>
chip_gen: v7x
topology: tpu7x:2x2x1
jax: 0.10.0
libtpu: 0.0.40
codegen_flags: <defaults>
</compile_context>

<pallas_src>
import math

import numpy as np

import jax
import jax.numpy as jnp
from jax.experimental import pallas as pl
from jax.experimental.pallas import tpu as pltpu

BN_EPS = 1e-5
DILATIONS = (1, 3, 5, 7)
PB = 7   # halo for the multi-dilation convs (max dilation)
PS = 1   # halo for the plain 3x3 convs


# ---------------------------------------------------------------------------
# Deterministic parameter construction (PyTorch kaiming-uniform defaults)
# ---------------------------------------------------------------------------
def _init_conv(key, cout, cin_per_g):
    k1, k2 = jax.random.split(key)
    fan_in = cin_per_g * 9
    bound = 1.0 / math.sqrt(fan_in)
    w = jax.random.uniform(k1, (cout, cin_per_g, 3, 3), jnp.float32, -bound, bound)
    b = jax.random.uniform(k2, (cout,), jnp.float32, -bound, bound)
    return w, b


def _bn_fold(bias, cout):
    # BatchNorm2d at default init / running stats: gamma=1, beta=0, mean=0, var=1.
    scale = jnp.full((cout,), 1.0 / math.sqrt(1.0 + BN_EPS), jnp.float32)
    shift = bias * scale
    return scale.reshape(1, cout), shift.reshape(1, cout)


def _pack_dense(w, groups, ndil, cfeed, src=None):
    """Repack a PyTorch-layout conv weight (Cout, Cin//G, 3, 3) into per-dilation
    dense slabs (ndil, 9, cfeed, Cout//ndil) expressed against the *feed* tensor.

    src[g, r] gives the feed channel read by group g's r-th input row; this is
    where channel replication (repeat) and permutations (insert_cat/rearrange)
    are folded in.  Rows a group does not read stay zero (block-diagonal)."""
    w = np.asarray(w, np.float32)                     # (Cout, icg, 3, 3)
    cout, icg = w.shape[0], w.shape[1]
    ocg = cout // groups
    gpd = groups // ndil                              # groups per dilation
    nout = gpd * ocg                                  # output cols per dilation
    if src is None:
        src = np.arange(groups)[:, None] * icg + np.arange(icg)[None, :]
    dense = np.zeros((ndil, 9, cfeed, nout), np.float32)
    for g in range(groups):
        di, col0 = g // gpd, (g % gpd) * ocg
        blk = w[g * ocg:(g + 1) * ocg].reshape(ocg, icg, 9).transpose(2, 1, 0)
        view = dense[di]                              # (9, cfeed, nout)
        view[:, np.asarray(src[g]), col0:col0 + ocg] = blk   # blk: (9, icg, ocg)
    return dense


def _bf16(a):
    return jnp.asarray(a, jnp.bfloat16)


def _scale1d_src(cm):
    """Feed-channel map for scale1d: folds
    insert_cat([scale1, rearrange(scale2, '(n g c)->(g n c)', n=4, g=4)], groups=4)
    into the weight's input rows.  Feed = plain cat([scale1, scale2])."""
    c1, c2 = cm // 4, cm // 16
    src = np.empty(2 * cm, np.int64)
    for p in range(2 * cm):
        g_i, rem = divmod(p, 2 * c1)                  # insert_cat output '(g n c)'
        n_i, c_i = divmod(rem, c1)
        s = n_i * cm + g_i * c1 + c_i                 # index in cat([s1, rearr(s2)])
        if s < cm:
            src[p] = s                                # comes from scale1
        else:
            q = s - cm                                # rearr(s2) channel '(g n c)'
            g2, rem2 = divmod(q, 4 * c2)
            n2, c2i = divmod(rem2, c2)
            src[p] = cm + n2 * 4 * c2 + g2 * c2 + c2i  # back to scale2 '(n g c)'
    return src.reshape(4, cm // 2)                    # (groups, icg)


# ---------------------------------------------------------------------------
# Plain 3x3 conv (+ folded bias/BN, optional ReLU) -- encoder stub & side head
# ---------------------------------------------------------------------------
def _make_conv_kernel(H, W, Cin, Cout, act):
    HW = H * W

    def kernel(x_ref, w_ref, sc_ref, sh_ref, o_ref, xpad):
        # halo padding done in VMEM (no host-side jnp.pad HBM round trip)
        xpad[...] = jnp.zeros(xpad.shape, xpad.dtype)
        xpad[PS:PS + H, PS:PS + W, :] = x_ref[...].astype(xpad.dtype)
        acc = jnp.zeros((HW, Cout), jnp.float32)
        for t in range(9):
            ky, kx = divmod(t, 3)
            tap = xpad[ky:ky + H, kx:kx + W, :].reshape(HW, Cin)
            acc = acc + jnp.dot(tap, w_ref[0, t], preferred_element_type=jnp.float32)
        y = acc * sc_ref[...] + sh_ref[...]
        if act == "relu":
            y = jnp.maximum(y, 0.0)
        o_ref[...] = y.reshape(H, W, Cout).astype(o_ref.dtype)

    return kernel


def conv3x3(x, w, scale, shift, act=None):
    """x: (B,H,W,Cin) bf16.  w: (1,9,Cin,Cout) bf16.  scale/shift: (1,Cout) f32."""
    B, H, W, Cin = x.shape
    Cout = w.shape[-1]
    return pl.pallas_call(
        _make_conv_kernel(H, W, Cin, Cout, act),
        out_shape=jax.ShapeDtypeStruct((B, H, W, Cout), jnp.bfloat16),
        grid=(B,),
        in_specs=[
            pl.BlockSpec((None, H, W, Cin), lambda b: (b, 0, 0, 0)),
            pl.BlockSpec(w.shape, lambda b: (0, 0, 0, 0)),
            pl.BlockSpec((1, Cout), lambda b: (0, 0)),
            pl.BlockSpec((1, Cout), lambda b: (0, 0)),
        ],
        out_specs=pl.BlockSpec((None, H, W, Cout), lambda b: (b, 0, 0, 0)),
        scratch_shapes=[pltpu.VMEM((H + 2 * PS, W + 2 * PS, Cin), jnp.bfloat16)],
        compiler_params=pltpu.CompilerParams(dimension_semantics=("parallel",)),
    )(x, w, scale, shift)


def make_rebnconv(key, in_ch, out_ch, fold_repeat2=False):
    w, b = _init_conv(key, out_ch, in_ch)
    if fold_repeat2:
        # fold hx.repeat(1, 2, 1, 1): both input halves read the same tensor
        w = w[:, :in_ch // 2] + w[:, in_ch // 2:]
        in_ch //= 2
    sc, sh = _bn_fold(b, out_ch)
    return {"w": _bf16(_pack_dense(w, 1, 1, in_ch)), "scale": sc, "shift": sh,
            "act": "relu"}


def make_plain_conv(key, in_ch, out_ch):          # bare Conv2d (side head)
    w, b = _init_conv(key, out_ch, in_ch)
    return {"w": _bf16(_pack_dense(w, 1, 1, in_ch)),
            "scale": jnp.ones((1, out_ch), jnp.float32),
            "shift": b.reshape(1, out_ch), "act": None}


def apply_conv(p, x):
    return conv3x3(x, p["w"], p["scale"], p["shift"], act=p["act"])


# ---------------------------------------------------------------------------
# Fused ResASPP2_test block: 6 convs, one pallas_call, intermediates in VMEM
# ---------------------------------------------------------------------------
def make_resaspp(key, in_ch, mid_ch, out_ch):
    assert mid_ch % 16 == 0
    ks = jax.random.split(key, 6)
    cm = mid_ch
    w_res, b_res = _init_conv(ks[0], out_ch, in_ch)            # REBNCONV(in, out)
    w_in,  b_in  = _init_conv(ks[1], cm, out_ch)               # REBNCONV(out, mid)
    w_s1,  b_s1  = _init_conv(ks[2], cm, (cm * 4) // 4)        # MergeConv2d G=4
    w_s2,  b_s2  = _init_conv(ks[3], cm, (cm * 4) // 16)       # MergeConv2d G=16
    w_s1d, b_s1d = _init_conv(ks[4], cm, (cm * 2) // 4)        # MergeConv2d G=4
    w_out, b_out = _init_conv(ks[5], out_ch, cm * 2)           # REBNCONV(2mid, out)

    # Per-dilation dense packs expressed against the *unreplicated* feeds.
    src_s1 = np.tile(np.arange(cm), (4, 1))                    # x4 repeat folded
    icg2 = cm // 4
    src_s2 = (np.arange(16)[:, None] * icg2 + np.arange(icg2)[None, :]) % cm
    p_s1d = _pack_dense(w_s1d, 4, 4, 2 * cm, _scale1d_src(cm))  # permutation folded
    p_out = _pack_dense(w_out, 1, 1, 2 * cm)
    weights = [
        _bf16(_pack_dense(w_res, 1, 1, in_ch)),
        _bf16(_pack_dense(w_in, 1, 1, out_ch)),
        _bf16(_pack_dense(w_s1, 4, 4, cm, src_s1)),
        _bf16(_pack_dense(w_s2, 16, 4, cm, src_s2)),
        _bf16(p_s1d[:, :, :cm, :]), _bf16(p_s1d[:, :, cm:, :]),  # K-split: s1 | s2
        _bf16(p_out[:, :, :cm, :]), _bf16(p_out[:, :, cm:, :]),  # K-split: hxin | s1d
    ]
    affine = []
    for b, c in ((b_res, out_ch), (b_in, cm), (b_s1, cm),
                 (b_s2, cm), (b_s1d, cm), (b_out, out_ch)):
        affine += list(_bn_fold(b, c))
    return {"dims": (in_ch, cm, out_ch), "w": weights, "affine": affine}


def _make_resaspp_kernel(H, W, cins, Cm, Co):
    nx, HW = len(cins), H * W

    def kernel(*refs):
        xs = refs[:nx]
        (w_res, w_in, w_s1, w_s2, w_s1da, w_s1db, w_outa, w_outb,
         sc_res, sh_res, sc_in, sh_in, sc_s1, sh_s1, sc_s2, sh_s2,
         sc_s1d, sh_s1d, sc_out, sh_out) = refs[nx:nx + 20]
        o_ref = refs[nx + 20]
        xpad, respad, hxinpad, s1pad, s2pad, s1dpad = refs[nx + 21:]

        def zero(ref):
            ref[...] = jnp.zeros(ref.shape, ref.dtype)

        def store_into(pad_ref, P):
            def st(di, n, y):
                pad_ref[P:P + H, P:P + W, di * n:(di + 1) * n] = (
                    y.reshape(H, W, n).astype(pad_ref.dtype))
            return st

        def conv(feeds, ws, dils, sc_ref, sh_ref, consume):
            """feeds: [(padded_ref, halo)] (K-split pieces), ws: matching weight refs
            of shape (ndil, 9, Cfeed_piece, N).  One f32 accumulator per dilation;
            scale/shift/ReLU applied per output strip and stored immediately."""
            sc, sh = sc_ref[...], sh_ref[...]
            ndil, n = ws[0].shape[0], ws[0].shape[-1]
            for di in range(ndil):
                d = dils[di]
                acc = jnp.zeros((HW, n), jnp.float32)
                for t in range(9):
                    ky, kx = divmod(t, 3)
                    for (pref, P), wref in zip(feeds, ws):
                        r0, c0 = P + (ky - 1) * d, P + (kx - 1) * d
                        tap = pref[r0:r0 + H, c0:c0 + W, :].reshape(
                            HW, pref.shape[-1])
                        acc = acc + jnp.dot(tap, wref[di, t],
                                            preferred_element_type=jnp.float32)
                y = acc * sc[:, di * n:(di + 1) * n] + sh[:, di * n:(di + 1) * n]
                consume(di, n, jnp.maximum(y, 0.0))

        # Stage input: skip-connection concat assembled in VMEM (never in HBM).
        zero(xpad)
        off = 0
        for xr in xs:
            c = xr.shape[-1]
            xpad[PS:PS + H, PS:PS + W, off:off + c] = xr[...].astype(xpad.dtype)
            off += c

        # residual = REBNCONV(in_ch, out_ch)(x)
        zero(respad)
        conv([(xpad, PS)], [w_res], (1,), sc_res, sh_res, store_into(respad, PS))
        # hxin = REBNCONV(out_ch, mid_ch)(residual)
        zero(hxinpad)
        conv([(respad, PS)], [w_in], (1,), sc_in, sh_in, store_into(hxinpad, PB))
        # scale1 = REBN(MergeConv2d G=4)(hxin.repeat x4)   -- repeat folded in weights
        zero(s1pad)
        conv([(hxinpad, PB)], [w_s1], DILATIONS, sc_s1, sh_s1, store_into(s1pad, PB))
        # scale2 = REBN(MergeConv2d G=16)(scale1.repeat x4)
        zero(s2pad)
        conv([(s1pad, PB)], [w_s2], DILATIONS, sc_s2, sh_s2, store_into(s2pad, PB))
        # scale1d = REBN(MergeConv2d G=4)(insert_cat([scale1, rearr(scale2)]))
        #   -- channel permutation folded in weights, K split across the two feeds
        zero(s1dpad)
        conv([(s1pad, PB), (s2pad, PB)], [w_s1da, w_s1db], DILATIONS,
             sc_s1d, sh_s1d, store_into(s1dpad, PS))
        # hxout = REBNCONV(2*mid, out)(cat([hxin, scale1d])) + residual (fused add)
        res = respad[PS:PS + H, PS:PS + W, :].astype(jnp.float32).reshape(HW, Co)

        def st_out(di, n, y):
            o_ref[...] = (y + res).reshape(H, W, Co).astype(o_ref.dtype)

        conv([(hxinpad, PB), (s1dpad, PS)], [w_outa, w_outb], (1,),
             sc_out, sh_out, st_out)

    return kernel


def _full_map(ndim):
    return lambda b: (0,) * ndim


def apply_resaspp(p, *xs):
    """Fused ResASPP2_test: all 6 convs in one pallas_call.  xs are the
    (already upsampled) skip inputs; their channel concat happens in VMEM."""
    B, H, W = xs[0].shape[:3]
    cins = tuple(int(x.shape[-1]) for x in xs)
    Cin, Cm, Co = p["dims"]
    assert sum(cins) == Cin
    ops = p["w"] + p["affine"]
    in_specs = [pl.BlockSpec((None, H, W, c), lambda b: (b, 0, 0, 0)) for c in cins]
    in_specs += [pl.BlockSpec(a.shape, _full_map(a.ndim)) for a in ops]
    scratch = [
        pltpu.VMEM((H + 2 * PS, W + 2 * PS, Cin), jnp.bfloat16),   # x (concat)
        pltpu.VMEM((H + 2 * PS, W + 2 * PS, Co), jnp.bfloat16),    # residual
        pltpu.VMEM((H + 2 * PB, W + 2 * PB, Cm), jnp.bfloat16),    # hxin
        pltpu.VMEM((H + 2 * PB, W + 2 * PB, Cm), jnp.bfloat16),    # scale1
        pltpu.VMEM((H + 2 * PB, W + 2 * PB, Cm), jnp.bfloat16),    # scale2
        pltpu.VMEM((H + 2 * PS, W + 2 * PS, Cm), jnp.bfloat16),    # scale1d
    ]
    return pl.pallas_call(
        _make_resaspp_kernel(H, W, cins, Cm, Co),
        out_shape=jax.ShapeDtypeStruct((B, H, W, Co), jnp.bfloat16),
        grid=(B,),
        in_specs=in_specs,
        out_specs=pl.BlockSpec((None, H, W, Co), lambda b: (b, 0, 0, 0)),
        scratch_shapes=scratch,
        compiler_params=pltpu.CompilerParams(
            dimension_semantics=("parallel",),
            vmem_limit_bytes=48 * 1024 * 1024),   # headroom on v7x's 64 MiB VMEM
    )(*xs, *ops)


# ---------------------------------------------------------------------------
# Glue ops: maxpool (ceil_mode), bilinear upsample (align_corners=False)
# ---------------------------------------------------------------------------
def maxpool2x2_ceil(x):
    B, H, W, C = x.shape
    Hp, Wp = ((H + 1) // 2) * 2, ((W + 1) // 2) * 2
    xp = jnp.pad(x, ((0, 0), (0, Hp - H), (0, Wp - W), (0, 0)),
                 constant_values=-jnp.inf)
    return jnp.max(xp.reshape(B, Hp // 2, 2, Wp // 2, 2, C), axis=(2, 4))


def upsample_like(src, tar):
    B, _, _, C = src.shape
    return jax.image.resize(src, (B, tar.shape[1], tar.shape[2], C),
                            method="bilinear", antialias=False)


def _avgpool(x, s):
    B, H, W, C = x.shape
    return jnp.mean(x.reshape(B, H // s, s, W // s, s, C), axis=(2, 4))


# ---------------------------------------------------------------------------
# Encoder stub + full network
# ---------------------------------------------------------------------------
# TODO(synk): `parallel_swin_transformer` is an external module whose source is
# not provided; substituted by a deterministic stub (average-pool downsampling
# + Pallas 3x3 conv/BN/ReLU projection) producing features at the strides and
# channel counts the decoder expects.  The hx.repeat(1, 2, 1, 1) at the encoder
# input is folded into the stub conv weights instead of being materialized.
def make_encoder_stub(key, in_ch, chans):
    ks = jax.random.split(key, len(chans))
    return [make_rebnconv(k, in_ch * 2, c, fold_repeat2=True)
            for k, c in zip(ks, chans)]


def apply_encoder_stub(params, x):
    feats = [apply_conv(p, _avgpool(x, s)) for p, s in zip(params, (4, 8, 16, 32))]
    return (x, *feats)            # (hxin, hx1, hx2, hx3, hx4); hxin unused downstream


def make_dcnet(key, in_ch=3, out_ch=1, cs=4):
    """cs: channel divisor vs. the full-size model (cs=1 gives the 2048-ch net)."""
    ks = jax.random.split(key, 7)
    c = lambda n: n // cs
    return {
        "encoder": make_encoder_stub(ks[0], in_ch, (c(256), c(512), c(1024), c(2048))),
        "stageB":  make_resaspp(ks[1], c(2048), c(1024), c(2048)),
        "stage4d": make_resaspp(ks[2], c(4096), c(512),  c(1024)),
        "stage3d": make_resaspp(ks[3], c(2048), c(256),  c(512)),
        "stage2d": make_resaspp(ks[4], c(1024), c(128),  c(256)),
        "stage1d": make_resaspp(ks[5], c(512),  c(64),   c(128)),
        "side1d":  make_plain_conv(ks[6], c(128), out_ch),
    }


def dcnet_forward(params, x):
    # x: (B, H, W, in_ch) NHWC
    x = x.astype(jnp.bfloat16)
    _, hx1, hx2, hx3, hx4 = apply_encoder_stub(params["encoder"], x)
    hx = maxpool2x2_ceil(hx4)
    hxB = apply_resaspp(params["stageB"], hx)
    hx4d = apply_resaspp(params["stage4d"], upsample_like(hxB, hx4), hx4)
    hx3d = apply_resaspp(params["stage3d"], upsample_like(hx4d, hx3), hx3)
    hx2d = apply_resaspp(params["stage2d"], upsample_like(hx3d, hx2), hx2)
    hx1d = apply_resaspp(params["stage1d"], upsample_like(hx2d, hx1), hx1)
    d1d = apply_conv(params["side1d"], hx1d)
    d1d = upsample_like(d1d, x)
    return [jax.nn.sigmoid(d1d.astype(jnp.float32))]


if __name__ == "__main__":
    key = jax.random.PRNGKey(0)
    kp, kx = jax.random.split(key)
    params = make_dcnet(kp, in_ch=3, out_ch=1, cs=4)
    # NHWC input, equivalent to NCHW (1, 3, 64, 64)
    x = jax.random.normal(kx, (1, 64, 64, 3), jnp.float32)
    out = dcnet_forward(params, x)
    out = [jax.block_until_ready(o) for o in out]
    assert out[0].shape == (1, 64, 64, 1)
    assert bool(jnp.all(jnp.isfinite(out[0])))
    print("KERNEL_OK")
</pallas_src>

<mosaic_0001>
module attributes {stable_mosaic.version = 11 : i64} {
  func.func @kernel(%arg0: i32, %arg1: memref<1x16x16x3xbf16, #tpu.memory_space<vmem>>, %arg2: memref<1x9x3x64xbf16, #tpu.memory_space<vmem>>, %arg3: memref<1x64xf32, #tpu.memory_space<vmem>>, %arg4: memref<1x64xf32, #tpu.memory_space<vmem>>, %arg5: memref<1x16x16x64xbf16, #tpu.memory_space<vmem>>, %arg6: memref<18x18x3xbf16, #tpu.memory_space<vmem>>) attributes {dimension_semantics = [#tpu.dimension_semantics<parallel>], iteration_bounds = array<i64: 1>, scalar_prefetch = 0 : i64, scratch_operands = 1 : i64, tpu.core_type = #tpu.core_type<tc>, window_params = [{transform_indices = @transform_0, window_bounds = array<i64: 1, 16, 16, 3>}, {pipeline_mode = #tpu.pipeline_mode<synchronous>, transform_indices = @transform_1, window_bounds = array<i64: 1, 9, 3, 64>}, {pipeline_mode = #tpu.pipeline_mode<synchronous>, transform_indices = @transform_2, window_bounds = array<i64: 1, 64>}, {pipeline_mode = #tpu.pipeline_mode<synchronous>, transform_indices = @transform_3, window_bounds = array<i64: 1, 64>}, {transform_indices = @transform_4, window_bounds = array<i64: 1, 16, 16, 64>}]} {
    %cst = arith.constant 0.000000e+00 : bf16
    %0 = vector.broadcast %cst : bf16 to vector<18x18x3xbf16>
    %c0 = arith.constant 0 : index
    %c0_0 = arith.constant 0 : index
    %c0_1 = arith.constant 0 : index
    %1 = vector.load %arg6[%c0, %c0_0, %c0_1] : memref<18x18x3xbf16, #tpu.memory_space<vmem>>, vector<18x18x3xbf16>
    tpu.vector_store %arg6[%c0, %c0_0, %c0_1], %0 {strides = array<i32>} : memref<18x18x3xbf16, #tpu.memory_space<vmem>>, vector<18x18x3xbf16>,
    %c0_2 = arith.constant 0 : index
    %c0_3 = arith.constant 0 : index
    %c0_4 = arith.constant 0 : index
    %c0_5 = arith.constant 0 : index
    %2 = vector.load %arg1[%c0_2, %c0_3, %c0_4, %c0_5] : memref<1x16x16x3xbf16, #tpu.memory_space<vmem>>, vector<1x16x16x3xbf16>
    %3 = vector.shape_cast %2 : vector<1x16x16x3xbf16> to vector<16x16x3xbf16>
    %c1 = arith.constant 1 : index
    %c1_6 = arith.constant 1 : index
    %c0_7 = arith.constant 0 : index
    %4 = vector.load %arg6[%c1, %c1_6, %c0_7] : memref<18x18x3xbf16, #tpu.memory_space<vmem>>, vector<16x16x3xbf16>
    tpu.vector_store %arg6[%c1, %c1_6, %c0_7], %3 {strides = array<i32>} : memref<18x18x3xbf16, #tpu.memory_space<vmem>>, vector<16x16x3xbf16>,
    %cst_8 = arith.constant 0.000000e+00 : f32
    %5 = vector.broadcast %cst_8 : f32 to vector<256x64xf32>
    %c0_9 = arith.constant 0 : index
    %c0_10 = arith.constant 0 : index
    %c0_11 = arith.constant 0 : index
    %6 = vector.load %arg6[%c0_9, %c0_10, %c0_11] : memref<18x18x3xbf16, #tpu.memory_space<vmem>>, vector<16x16x3xbf16>
    %7 = vector.shape_cast %6 : vector<16x16x3xbf16> to vector<256x3xbf16>
    %c0_12 = arith.constant 0 : index
    %c0_13 = arith.constant 0 : index
    %c0_14 = arith.constant 0 : index
    %c0_15 = arith.constant 0 : index
    %8 = vector.load %arg2[%c0_12, %c0_13, %c0_14, %c0_15] : memref<1x9x3x64xbf16, #tpu.memory_space<vmem>>, vector<1x1x3x64xbf16>
    %9 = vector.shape_cast %8 : vector<1x1x3x64xbf16> to vector<3x64xbf16>
    %cst_16 = arith.constant dense<0.000000e+00> : vector<256x64xf32>
    %10 = tpu.matmul %7, %9, %cst_16 {dimension_numbers = #tpu.dot_dimension_numbers<[1], [0], [0], [1], [0, 0, 1, 1], [], []>} : vector<256x3xbf16>, vector<3x64xbf16>, vector<256x64xf32> -> vector<256x64xf32>
    %11 = arith.addf %5, %10 : vector<256x64xf32>
    %c0_17 = arith.constant 0 : index
    %c1_18 = arith.constant 1 : index
    %c0_19 = arith.constant 0 : index
    %12 = vector.load %arg6[%c0_17, %c1_18, %c0_19] : memref<18x18x3xbf16, #tpu.memory_space<vmem>>, vector<16x16x3xbf16>
    %13 = vector.shape_cast %12 : vector<16x16x3xbf16> to vector<256x3xbf16>
    %c0_20 = arith.constant 0 : index
    %c1_21 = arith.constant 1 : index
    %c0_22 = arith.constant 0 : index
    %c0_23 = arith.constant 0 : index
    %14 = vector.load %arg2[%c0_20, %c1_21, %c0_22, %c0_23] : memref<1x9x3x64xbf16, #tpu.memory_space<vmem>>, vector<1x1x3x64xbf16>
    %15 = vector.shape_cast %14 : vector<1x1x3x64xbf16> to vector<3x64xbf16>
    %cst_24 = arith.constant dense<0.000000e+00> : vector<256x64xf32>
    %16 = tpu.matmul %13, %15, %cst_24 {dimension_numbers = #tpu.dot_dimension_numbers<[1], [0], [0], [1], [0, 0, 1, 1], [], []>} : vector<256x3xbf16>, vector<3x64xbf16>, vector<256x64xf32> -> vector<256x64xf32>
    %17 = arith.addf %11, %16 : vector<256x64xf32>
    %c0_25 = arith.constant 0 : index
    %c2 = arith.constant 2 : index
    %c0_26 = arith.constant 0 : index
    %18 = vector.load %arg6[%c0_25, %c2, %c0_26] : memref<18x18x3xbf16, #tpu.memory_space<vmem>>, vector<16x16x3xbf16>
    %19 = vector.shape_cast %18 : vector<16x16x3xbf16> to vector<256x3xbf16>
    %c0_27 = arith.constant 0 : index
    %c2_28 = arith.constant 2 : index
    %c0_29 = arith.constant 0 : index
    %c0_30 = arith.constant 0 : index
    %20 = vector.load %arg2[%c0_27, %c2_28, %c0_29, %c0_30] : memref<1x9x3x64xbf16, #tpu.memory_space<vmem>>, vector<1x1x3x64xbf16>
    %21 = vector.shape_cast %20 : vector<1x1x3x64xbf16> to vector<3x64xbf16>
    %cst_31 = arith.constant dense<0.000000e+00> : vector<256x64xf32>
    %22 = tpu.matmul %19, %21, %cst_31 {dimension_numbers = #tpu.dot_dimension_numbers<[1], [0], [0], [1], [0, 0, 1, 1], [], []>} : vector<256x3xbf16>, vector<3x64xbf16>, vector<256x64xf32> -> vector<256x64xf32>
    %23 = arith.addf %17, %22 : vector<256x64xf32>
    %c1_32 = arith.constant 1 : index
    %c0_33 = arith.constant 0 : index
    %c0_34 = arith.constant 0 : index
    %24 = vector.load %arg6[%c1_32, %c0_33, %c0_34] : memref<18x18x3xbf16, #tpu.memory_space<vmem>>, vector<16x16x3xbf16>
    %25 = vector.shape_cast %24 : vector<16x16x3xbf16> to vector<256x3xbf16>
    %c0_35 = arith.constant 0 : index
    %c3 = arith.constant 3 : index
    %c0_36 = arith.constant 0 : index
    %c0_37 = arith.constant 0 : index
    %26 = vector.load %arg2[%c0_35, %c3, %c0_36, %c0_37] : memref<1x9x3x64xbf16, #tpu.memory_space<vmem>>, vector<1x1x3x64xbf16>
    %27 = vector.shape_cast %26 : vector<1x1x3x64xbf16> to vector<3x64xbf16>
    %cst_38 = arith.constant dense<0.000000e+00> : vector<256x64xf32>
    %28 = tpu.matmul %25, %27, %cst_38 {dimension_numbers = #tpu.dot_dimension_numbers<[1], [0], [0], [1], [0, 0, 1, 1], [], []>} : vector<256x3xbf16>, vector<3x64xbf16>, vector<256x64xf32> -> vector<256x64xf32>
    %29 = arith.addf %23, %28 : vector<256x64xf32>
    %c1_39 = arith.constant 1 : index
    %c1_40 = arith.constant 1 : index
    %c0_41 = arith.constant 0 : index
    %30 = vector.load %arg6[%c1_39, %c1_40, %c0_41] : memref<18x18x3xbf16, #tpu.memory_space<vmem>>, vector<16x16x3xbf16>
    %31 = vector.shape_cast %30 : vector<16x16x3xbf16> to vector<256x3xbf16>
    %c0_42 = arith.constant 0 : index
    %c4 = arith.constant 4 : index
    %c0_43 = arith.constant 0 : index
    %c0_44 = arith.constant 0 : index
    %32 = vector.load %arg2[%c0_42, %c4, %c0_43, %c0_44] : memref<1x9x3x64xbf16, #tpu.memory_space<vmem>>, vector<1x1x3x64xbf16>
    %33 = vector.shape_cast %32 : vector<1x1x3x64xbf16> to vector<3x64xbf16>
    %cst_45 = arith.constant dense<0.000000e+00> : vector<256x64xf32>
    %34 = tpu.matmul %31, %33, %cst_45 {dimension_numbers = #tpu.dot_dimension_numbers<[1], [0], [0], [1], [0, 0, 1, 1], [], []>} : vector<256x3xbf16>, vector<3x64xbf16>, vector<256x64xf32> -> vector<256x64xf32>
    %35 = arith.addf %29, %34 : vector<256x64xf32>
    %c1_46 = arith.constant 1 : index
    %c2_47 = arith.constant 2 : index
    %c0_48 = arith.constant 0 : index
    %36 = vector.load %arg6[%c1_46, %c2_47, %c0_48] : memref<18x18x3xbf16, #tpu.memory_space<vmem>>, vector<16x16x3xbf16>
    %37 = vector.shape_cast %36 : vector<16x16x3xbf16> to vector<256x3xbf16>
    %c0_49 = arith.constant 0 : index
    %c5 = arith.constant 5 : index
    %c0_50 = arith.constant 0 : index
    %c0_51 = arith.constant 0 : index
    %38 = vector.load %arg2[%c0_49, %c5, %c0_50, %c0_51] : memref<1x9x3x64xbf16, #tpu.memory_space<vmem>>, vector<1x1x3x64xbf16>
    %39 = vector.shape_cast %38 : vector<1x1x3x64xbf16> to vector<3x64xbf16>
    %cst_52 = arith.constant dense<0.000000e+00> : vector<256x64xf32>
    %40 = tpu.matmul %37, %39, %cst_52 {dimension_numbers = #tpu.dot_dimension_numbers<[1], [0], [0], [1], [0, 0, 1, 1], [], []>} : vector<256x3xbf16>, vector<3x64xbf16>, vector<256x64xf32> -> vector<256x64xf32>
    %41 = arith.addf %35, %40 : vector<256x64xf32>
    %c2_53 = arith.constant 2 : index
    %c0_54 = arith.constant 0 : index
    %c0_55 = arith.constant 0 : index
    %42 = vector.load %arg6[%c2_53, %c0_54, %c0_55] : memref<18x18x3xbf16, #tpu.memory_space<vmem>>, vector<16x16x3xbf16>
    %43 = vector.shape_cast %42 : vector<16x16x3xbf16> to vector<256x3xbf16>
    %c0_56 = arith.constant 0 : index
    %c6 = arith.constant 6 : index
    %c0_57 = arith.constant 0 : index
    %c0_58 = arith.constant 0 : index
    %44 = vector.load %arg2[%c0_56, %c6, %c0_57, %c0_58] : memref<1x9x3x64xbf16, #tpu.memory_space<vmem>>, vector<1x1x3x64xbf16>
    %45 = vector.shape_cast %44 : vector<1x1x3x64xbf16> to vector<3x64xbf16>
    %cst_59 = arith.constant dense<0.000000e+00> : vector<256x64xf32>
    %46 = tpu.matmul %43, %45, %cst_59 {dimension_numbers = #tpu.dot_dimension_numbers<[1], [0], [0], [1], [0, 0, 1, 1], [], []>} : vector<256x3xbf16>, vector<3x64xbf16>, vector<256x64xf32> -> vector<256x64xf32>
    %47 = arith.addf %41, %46 : vector<256x64xf32>
    %c2_60 = arith.constant 2 : index
    %c1_61 = arith.constant 1 : index
    %c0_62 = arith.constant 0 : index
    %48 = vector.load %arg6[%c2_60, %c1_61, %c0_62] : memref<18x18x3xbf16, #tpu.memory_space<vmem>>, vector<16x16x3xbf16>
    %49 = vector.shape_cast %48 : vector<16x16x3xbf16> to vector<256x3xbf16>
    %c0_63 = arith.constant 0 : index
    %c7 = arith.constant 7 : index
    %c0_64 = arith.constant 0 : index
    %c0_65 = arith.constant 0 : index
    %50 = vector.load %arg2[%c0_63, %c7, %c0_64, %c0_65] : memref<1x9x3x64xbf16, #tpu.memory_space<vmem>>, vector<1x1x3x64xbf16>
    %51 = vector.shape_cast %50 : vector<1x1x3x64xbf16> to vector<3x64xbf16>
    %cst_66 = arith.constant dense<0.000000e+00> : vector<256x64xf32>
    %52 = tpu.matmul %49, %51, %cst_66 {dimension_numbers = #tpu.dot_dimension_numbers<[1], [0], [0], [1], [0, 0, 1, 1], [], []>} : vector<256x3xbf16>, vector<3x64xbf16>, vector<256x64xf32> -> vector<256x64xf32>
    %53 = arith.addf %47, %52 : vector<256x64xf32>
    %c2_67 = arith.constant 2 : index
    %c2_68 = arith.constant 2 : index
    %c0_69 = arith.constant 0 : index
    %54 = vector.load %arg6[%c2_67, %c2_68, %c0_69] : memref<18x18x3xbf16, #tpu.memory_space<vmem>>, vector<16x16x3xbf16>
    %55 = vector.shape_cast %54 : vector<16x16x3xbf16> to vector<256x3xbf16>
    %c0_70 = arith.constant 0 : index
    %c8 = arith.constant 8 : index
    %c0_71 = arith.constant 0 : index
    %c0_72 = arith.constant 0 : index
    %56 = vector.load %arg2[%c0_70, %c8, %c0_71, %c0_72] : memref<1x9x3x64xbf16, #tpu.memory_space<vmem>>, vector<1x1x3x64xbf16>
    %57 = vector.shape_cast %56 : vector<1x1x3x64xbf16> to vector<3x64xbf16>
    %cst_73 = arith.constant dense<0.000000e+00> : vector<256x64xf32>
    %58 = tpu.matmul %55, %57, %cst_73 {dimension_numbers = #tpu.dot_dimension_numbers<[1], [0], [0], [1], [0, 0, 1, 1], [], []>} : vector<256x3xbf16>, vector<3x64xbf16>, vector<256x64xf32> -> vector<256x64xf32>
    %59 = arith.addf %53, %58 : vector<256x64xf32>
    %c0_74 = arith.constant 0 : index
    %c0_75 = arith.constant 0 : index
    %60 = vector.load %arg3[%c0_74, %c0_75] : memref<1x64xf32, #tpu.memory_space<vmem>>, vector<1x64xf32>
    %61 = vector.broadcast %60 : vector<1x64xf32> to vector<256x64xf32>
    %62 = arith.mulf %59, %61 : vector<256x64xf32>
    %c0_76 = arith.constant 0 : index
    %c0_77 = arith.constant 0 : index
    %63 = vector.load %arg4[%c0_76, %c0_77] : memref<1x64xf32, #tpu.memory_space<vmem>>, vector<1x64xf32>
    %64 = vector.broadcast %63 : vector<1x64xf32> to vector<256x64xf32>
    %65 = arith.addf %62, %64 : vector<256x64xf32>
    %cst_78 = arith.constant 0.000000e+00 : f32
    %66 = vector.broadcast %cst_78 : f32 to vector<256x64xf32>
    %67 = arith.maximumf %65, %66 : vector<256x64xf32>
    %68 = vector.shape_cast %67 : vector<256x64xf32> to vector<16x16x64xf32>
    %69 = arith.truncf %68 : vector<16x16x64xf32> to vector<16x16x64xbf16>
    %c0_79 = arith.constant 0 : index
    %c0_80 = arith.constant 0 : index
    %c0_81 = arith.constant 0 : index
    %c0_82 = arith.constant 0 : index
    %70 = vector.load %arg5[%c0_79, %c0_80, %c0_81, %c0_82] : memref<1x16x16x64xbf16, #tpu.memory_space<vmem>>, vector<1x16x16x64xbf16>
    %71 = vector.shape_cast %70 : vector<1x16x16x64xbf16> to vector<16x16x64xbf16>
    %72 = vector.shape_cast %69 : vector<16x16x64xbf16> to vector<1x16x16x64xbf16>
    tpu.vector_store %arg5[%c0_79, %c0_80, %c0_81, %c0_82], %72 {strides = array<i32>} : memref<1x16x16x64xbf16, #tpu.memory_space<vmem>>, vector<1x16x16x64xbf16>,
    return
  }
  func.func @transform_0(%arg0: i32) -> (i32, i32, i32, i32) {
    %c0_i32 = arith.constant 0 : i32
    %c0_i32_0 = arith.constant 0 : i32
    %c0_i32_1 = arith.constant 0 : i32
    %c0_i32_2 = arith.constant 0 : i32
    return %arg0, %c0_i32, %c0_i32_0, %c0_i32_1 : i32, i32, i32, i32
  }
  func.func @transform_1(%arg0: i32) -> (i32, i32, i32, i32) {
    %c0_i32 = arith.constant 0 : i32
    %c0_i32_0 = arith.constant 0 : i32
    %c0_i32_1 = arith.constant 0 : i32
    %c0_i32_2 = arith.constant 0 : i32
    %c0_i32_3 = arith.constant 0 : i32
    return %c0_i32, %c0_i32_0, %c0_i32_1, %c0_i32_2 : i32, i32, i32, i32
  }
  func.func @transform_2(%arg0: i32) -> (i32, i32) {
    %c0_i32 = arith.constant 0 : i32
    %c0_i32_0 = arith.constant 0 : i32
    %c0_i32_1 = arith.constant 0 : i32
    return %c0_i32, %c0_i32_0 : i32, i32
  }
  func.func @transform_3(%arg0: i32) -> (i32, i32) {
    %c0_i32 = arith.constant 0 : i32
    %c0_i32_0 = arith.constant 0 : i32
    %c0_i32_1 = arith.constant 0 : i32
    return %c0_i32, %c0_i32_0 : i32, i32
  }
  func.func @transform_4(%arg0: i32) -> (i32, i32, i32, i32) {
    %c0_i32 = arith.constant 0 : i32
    %c0_i32_0 = arith.constant 0 : i32
    %c0_i32_1 = arith.constant 0 : i32
    %c0_i32_2 = arith.constant 0 : i32
    return %arg0, %c0_i32, %c0_i32_0, %c0_i32_1 : i32, i32, i32, i32
  }
}

</mosaic_0001>

<llo_original>
// kernel: tpu_custom_call.1
$region0: #{tpu_custom_call.1}
  #allocation0 [shape = 'u32[]', space=smem, size = 0x4, offset = 0x4, fixed_abs, tag = 'smem constant byte address 0x4 - core index']
  #allocation1 [shape = 'u32[144,128]{1,0:T(1,128)}', space=vmem, size = 0x12000, scoped, tag = 'internal scratch']
  #allocation2 [shape = 'bf16[18,18,3]{2,1,0:T(8,128)(2,1)}', space=vmem, size = 0x1b000, scoped, tag = 'scratch operand']
  %s0 = inlined_call_operand.vmem [shape: bf16[1,16,16,3], index: 0, kind: input, shape index: {}]
  %s1 = inlined_call_operand.vmem [shape: bf16[1,9,3,64], index: 1, kind: input, shape index: {}]
  %s2 = inlined_call_operand.vmem [shape: f32[1,64], index: 2, kind: input, shape index: {}]
  %s3 = inlined_call_operand.vmem [shape: f32[1,64], index: 3, kind: input, shape index: {}]
  %s4 = inlined_call_operand.hbm [shape: bf16[1,16,16,64], index: 4, kind: output, shape index: {}]
  %s5 = sld [smem:[#allocation0]]
  $region26: #{tpu_custom_call.1} parent=0
    _
  %s7 = ssub.s32 1, %s5
  %s8 = scalar_select 0, %s7, %s5
  $region1: #{tpu_custom_call.1} parent=0
    #allocation3 [shape = 'u8[65536]{0}', space=vmem, size = 0x10000, scoped, tag = 'output window, operand 0, single buffered']
    #allocation4 [shape = 's32[1]{0}', space=sflag, size = 0x4, scoped, tag = 'scoped memory for tpu_custom_call.1']
    %9 = vsyncpa [#allocation4], 0
    // Predicated region
    $region2: #{tpu_custom_call.1} parent=1 // pred_check
      _
    $region3: #{tpu_custom_call.1} parent=1 // pred_check_branch
      %11 = sbr.rel (0) target = $region5
    $region4: #{tpu_custom_call.1} parent=1 // pred_region
      _
    $region5: #{tpu_custom_call.1} parent=1 // pred_fallthru
      _
    // Predicated region
    $region6: #{tpu_custom_call.1} parent=1 // pred_check
      _
    $region7: #{tpu_custom_call.1} parent=1 // pred_check_branch
      %13 = sbr.rel (0) target = $region9
    $region8: #{tpu_custom_call.1} parent=1 // pred_region
      _
    $region9: #{tpu_custom_call.1} parent=1 // pred_fallthru
      _
    // Predicated region
    $region10: #{tpu_custom_call.1} parent=1 // pred_check
      _
    $region11: #{tpu_custom_call.1} parent=1 // pred_check_branch
      %15 = sbr.rel (0) target = $region13
    $region12: #{tpu_custom_call.1} parent=1 // pred_region
      _
    $region13: #{tpu_custom_call.1} parent=1 // pred_fallthru
      _
    // Predicated region
    $region14: #{tpu_custom_call.1} parent=1 // pred_check
      _
    $region15: #{tpu_custom_call.1} parent=1 // pred_check_branch
      %17 = sbr.rel (0) target = $region17
    $region16: #{tpu_custom_call.1} parent=1 // pred_region
      _
    $region17: #{tpu_custom_call.1} parent=1 // pred_fallthru
      _
    %vm19 = vcmask 19456
    %20 = vst.msk [vmem:[#allocation2] sm:$0xf] %vm19, 0
    %21 = vst.msk [vmem:[#allocation2 + $0x4] sm:$0xf] %vm19, 0
    %vm22 = vcmask 16384
    %23 = vst.msk [vmem:[#allocation2 + $0x8] sm:$0x1] %vm22, 0
    %24 = vst.msk [vmem:[#allocation2 + $0xc] sm:$0xf] %vm19, 0
    %25 = vst.msk [vmem:[#allocation2 + $0x10] sm:$0xf] %vm19, 0
    %26 = vst.msk [vmem:[#allocation2 + $0x14] sm:$0x1] %vm22, 0
    %27 = vst.msk [vmem:[#allocation2 + $0x18] sm:$0xf] %vm19, 0
    %28 = vst.msk [vmem:[#allocation2 + $0x1c] sm:$0xf] %vm19, 0
    %29 = vst.msk [vmem:[#allocation2 + $0x20] sm:$0x1] %vm22, 0
    %30 = vst.msk [vmem:[#allocation2 + $0x24] sm:$0xf] %vm19, 0
    %31 = vst.msk [vmem:[#allocation2 + $0x28] sm:$0xf] %vm19, 0
    %32 = vst.msk [vmem:[#allocation2 + $0x2c] sm:$0x1] %vm22, 0
    %33 = vst.msk [vmem:[#allocation2 + $0x30] sm:$0xf] %vm19, 0
    %34 = vst.msk [vmem:[#allocation2 + $0x34] sm:$0xf] %vm19, 0
    %35 = vst.msk [vmem:[#allocation2 + $0x38] sm:$0x1] %vm22, 0
    %36 = vst.msk [vmem:[#allocation2 + $0x3c] sm:$0xf] %vm19, 0
    %37 = vst.msk [vmem:[#allocation2 + $0x40] sm:$0xf] %vm19, 0
    %38 = vst.msk [vmem:[#allocation2 + $0x44] sm:$0x1] %vm22, 0
    %39 = vst.msk [vmem:[#allocation2 + $0x48] sm:$0xf] %vm19, 0
    %40 = vst.msk [vmem:[#allocation2 + $0x4c] sm:$0xf] %vm19, 0
    %41 = vst.msk [vmem:[#allocation2 + $0x50] sm:$0x1] %vm22, 0
    %42 = vst.msk [vmem:[#allocation2 + $0x54] sm:$0xf] %vm19, 0
    %43 = vst.msk [vmem:[#allocation2 + $0x58] sm:$0xf] %vm19, 0
    %44 = vst.msk [vmem:[#allocation2 + $0x5c] sm:$0x1] %vm22, 0
    %45 = vst.msk [vmem:[#allocation2 + $0x60] sm:$0xf] %vm19, 0
    %46 = vst.msk [vmem:[#allocation2 + $0x64] sm:$0xf] %vm19, 0
    %47 = vst.msk [vmem:[#allocation2 + $0x68] sm:$0x1] %vm22, 0
    %48 = vst.msk [vmem:[#allocation2 + $0x6c] sm:$0xf] %vm19, 0
    %49 = vst.msk [vmem:[#allocation2 + $0x70] sm:$0xf] %vm19, 0
    %50 = vst.msk [vmem:[#allocation2 + $0x74] sm:$0x1] %vm22, 0
    %51 = vst.msk [vmem:[#allocation2 + $0x78] sm:$0xf] %vm19, 0
    %52 = vst.msk [vmem:[#allocation2 + $0x7c] sm:$0xf] %vm19, 0
    %53 = vst.msk [vmem:[#allocation2 + $0x80] sm:$0x1] %vm22, 0
    %54 = vst.msk [vmem:[#allocation2 + $0x84] sm:$0xf] %vm19, 0
    %55 = vst.msk [vmem:[#allocation2 + $0x88] sm:$0xf] %vm19, 0
    %56 = vst.msk [vmem:[#allocation2 + $0x8c] sm:$0x1] %vm22, 0
    %57 = vst.msk [vmem:[#allocation2 + $0x90] sm:$0xf] %vm19, 0
    %58 = vst.msk [vmem:[#allocation2 + $0x94] sm:$0xf] %vm19, 0
    %59 = vst.msk [vmem:[#allocation2 + $0x98] sm:$0x1] %vm22, 0
    %60 = vst.msk [vmem:[#allocation2 + $0x9c] sm:$0xf] %vm19, 0
    %61 = vst.msk [vmem:[#allocation2 + $0xa0] sm:$0xf] %vm19, 0
    %62 = vst.msk [vmem:[#allocation2 + $0xa4] sm:$0x1] %vm22, 0
    %63 = vst.msk [vmem:[#allocation2 + $0xa8] sm:$0xf] %vm19, 0
    %64 = vst.msk [vmem:[#allocation2 + $0xac] sm:$0xf] %vm19, 0
    %65 = vst.msk [vmem:[#allocation2 + $0xb0] sm:$0x1] %vm22, 0
    %66 = vst.msk [vmem:[#allocation2 + $0xb4] sm:$0xf] %vm19, 0
    %67 = vst.msk [vmem:[#allocation2 + $0xb8] sm:$0xf] %vm19, 0
    %68 = vst.msk [vmem:[#allocation2 + $0xbc] sm:$0x1] %vm22, 0
    %69 = vst.msk [vmem:[#allocation2 + $0xc0] sm:$0xf] %vm19, 0
    %70 = vst.msk [vmem:[#allocation2 + $0xc4] sm:$0xf] %vm19, 0
    %71 = vst.msk [vmem:[#allocation2 + $0xc8] sm:$0x1] %vm22, 0
    %72 = vst.msk [vmem:[#allocation2 + $0xcc] sm:$0xf] %vm19, 0
    %73 = vst.msk [vmem:[#allocation2 + $0xd0] sm:$0xf] %vm19, 0
    %74 = vst.msk [vmem:[#allocation2 + $0xd4] sm:$0x1] %vm22, 0
    %v75 = vld [vmem:[%s0] sm:$0xf]
    %v76 = vld [vmem:[%s0 + $0x4] sm:$0xf]
    %v77 = vld [vmem:[%s0 + $0x8] sm:$0xf]
    %v78 = vld [vmem:[%s0 + $0xc] sm:$0xf]
    %v79 = vld [vmem:[%s0 + $0x10] sm:$0xf]
    %v80 = vld [vmem:[%s0 + $0x14] sm:$0xf]
    %v81 = vld [vmem:[%s0 + $0x18] sm:$0xf]
    %v82 = vld [vmem:[%s0 + $0x1c] sm:$0xf]
    %v83 = vld [vmem:[%s0 + $0x20] sm:$0xf]
    %v84 = vld [vmem:[%s0 + $0x24] sm:$0xf]
    %v85 = vld [vmem:[%s0 + $0x28] sm:$0xf]
    %v86 = vld [vmem:[%s0 + $0x2c] sm:$0xf]
    %v87 = vld [vmem:[%s0 + $0x30] sm:$0xf]
    %v88 = vld [vmem:[%s0 + $0x34] sm:$0xf]
    %v89 = vld [vmem:[%s0 + $0x38] sm:$0xf]
    %v90 = vld [vmem:[%s0 + $0x3c] sm:$0xf]
    %v91 = vld [vmem:[%s0 + $0x40] sm:$0xf]
    %v92 = vld [vmem:[%s0 + $0x44] sm:$0xf]
    %v93 = vld [vmem:[%s0 + $0x48] sm:$0xf]
    %v94 = vld [vmem:[%s0 + $0x4c] sm:$0xf]
    %v95 = vld [vmem:[%s0 + $0x50] sm:$0xf]
    %v96 = vld [vmem:[%s0 + $0x54] sm:$0xf]
    %v97 = vld [vmem:[%s0 + $0x58] sm:$0xf]
    %v98 = vld [vmem:[%s0 + $0x5c] sm:$0xf]
    %v99 = vld [vmem:[%s0 + $0x60] sm:$0xf]
    %v100 = vld [vmem:[%s0 + $0x64] sm:$0xf]
    %v101 = vld [vmem:[%s0 + $0x68] sm:$0xf]
    %v102 = vld [vmem:[%s0 + $0x6c] sm:$0xf]
    %v103 = vld [vmem:[%s0 + $0x70] sm:$0xf]
    %v104 = vld [vmem:[%s0 + $0x74] sm:$0xf]
    %v105 = vld [vmem:[%s0 + $0x78] sm:$0xf]
    %v106 = vld [vmem:[%s0 + $0x7c] sm:$0xf]
    %vm107 = vsmask.f32 256
    %vm108 = vsmask.f32 4368
    %vm109 = vmor %vm107, %vm108
    %v111 = vshrl.u32 %v75, 16
    %v113 = vrot.slane %v111, 7
    %v114 = vshll.u32 %v75, 16
    %v116 = vor.u32 %v113, %v114
    %v117 = vrot.slane %v113, 4
    %v119 = vshrl.u32 %v76, 16
    %v121 = vrot.slane %v119, 7
    %v122 = vshll.u32 %v76, 16
    %v124 = vor.u32 %v121, %v122
    %v125 = vsel %vm109, %v117, %v124
    %v126 = vrot.slane %v121, 4
    %v128 = vshrl.u32 %v77, 16
    %v130 = vrot.slane %v128, 7
    %v131 = vshll.u32 %v77, 16
    %v133 = vor.u32 %v130, %v131
    %v134 = vrot.slane %v130, 4
    %v136 = vshrl.u32 %v78, 16
    %v138 = vrot.slane %v136, 7
    %v139 = vshll.u32 %v78, 16
    %v141 = vor.u32 %v138, %v139
    %v142 = vsel %vm109, %v134, %v141
    %v143 = vrot.slane %v138, 4
    %v145 = vshrl.u32 %v79, 16
    %v147 = vrot.slane %v145, 7
    %v148 = vshll.u32 %v79, 16
    %v150 = vor.u32 %v147, %v148
    %v151 = vrot.slane %v147, 4
    %v153 = vshrl.u32 %v80, 16
    %v155 = vrot.slane %v153, 7
    %v156 = vshll.u32 %v80, 16
    %v158 = vor.u32 %v155, %v156
    %v159 = vsel %vm109, %v151, %v158
    %v160 = vrot.slane %v155, 4
    %v162 = vshrl.u32 %v81, 16
    %v164 = vrot.slane %v162, 7
    %v165 = vshll.u32 %v81, 16
    %v167 = vor.u32 %v164, %v165
    %v168 = vrot.slane %v164, 4
    %v170 = vshrl.u32 %v82, 16
    %v172 = vrot.slane %v170, 7
    %v173 = vshll.u32 %v82, 16
    %v175 = vor.u32 %v172, %v173
    %v176 = vsel %vm109, %v168, %v175
    %v177 = vrot.slane %v172, 4
    %v179 = vshrl.u32 %v83, 16
    %v181 = vrot.slane %v179, 7
    %v182 = vshll.u32 %v83, 16
    %v184 = vor.u32 %v181, %v182
    %v185 = vrot.slane %v181, 4
    %v187 = vshrl.u32 %v84, 16
    %v189 = vrot.slane %v187, 7
    %v190 = vshll.u32 %v84, 16
    %v192 = vor.u32 %v189, %v190
    %v193 = vsel %vm109, %v185, %v192
    %v194 = vrot.slane %v189, 4
    %v196 = vshrl.u32 %v85, 16
    %v198 = vrot.slane %v196, 7
    %v199 = vshll.u32 %v85, 16
    %v201 = vor.u32 %v198, %v199
    %v202 = vrot.slane %v198, 4
    %v204 = vshrl.u32 %v86, 16
    %v206 = vrot.slane %v204, 7
    %v207 = vshll.u32 %v86, 16
    %v209 = vor.u32 %v206, %v207
    %v210 = vsel %vm109, %v202, %v209
    %v211 = vrot.slane %v206, 4
    %v213 = vshrl.u32 %v87, 16
    %v215 = vrot.slane %v213, 7
    %v216 = vshll.u32 %v87, 16
    %v218 = vor.u32 %v215, %v216
    %v219 = vrot.slane %v215, 4
    %v221 = vshrl.u32 %v88, 16
    %v223 = vrot.slane %v221, 7
    %v224 = vshll.u32 %v88, 16
    %v226 = vor.u32 %v223, %v224
    %v227 = vsel %vm109, %v219, %v226
    %v228 = vrot.slane %v223, 4
    %v230 = vshrl.u32 %v89, 16
    %v232 = vrot.slane %v230, 7
    %v233 = vshll.u32 %v89, 16
    %v235 = vor.u32 %v232, %v233
    %v236 = vrot.slane %v232, 4
    %v238 = vshrl.u32 %v90, 16
    %v240 = vrot.slane %v238, 7
    %v241 = vshll.u32 %v90, 16
    %v243 = vor.u32 %v240, %v241
    %v244 = vsel %vm109, %v236, %v243
    %v245 = vrot.slane %v240, 4
    %v247 = vshrl.u32 %v91, 16
    %v249 = vrot.slane %v247, 7
    %v250 = vshll.u32 %v91, 16
    %v252 = vor.u32 %v249, %v250
    %v253 = vrot.slane %v249, 4
    %v255 = vshrl.u32 %v92, 16
    %v257 = vrot.slane %v255, 7
    %v258 = vshll.u32 %v92, 16
    %v260 = vor.u32 %v257, %v258
    %v261 = vsel %vm109, %v253, %v260
    %v262 = vrot.slane %v257, 4
    %v264 = vshrl.u32 %v93, 16
    %v266 = vrot.slane %v264, 7
    %v267 = vshll.u32 %v93, 16
    %v269 = vor.u32 %v266, %v267
    %v270 = vrot.slane %v266, 4
    %v272 = vshrl.u32 %v94, 16
    %v274 = vrot.slane %v272, 7
    %v275 = vshll.u32 %v94, 16
    %v277 = vor.u32 %v274, %v275
    %v278 = vsel %vm109, %v270, %v277
    %v279 = vrot.slane %v274, 4
    %v281 = vshrl.u32 %v95, 16
    %v283 = vrot.slane %v281, 7
    %v284 = vshll.u32 %v95, 16
    %v286 = vor.u32 %v283, %v284
    %v287 = vrot.slane %v283, 4
    %v289 = vshrl.u32 %v96, 16
    %v291 = vrot.slane %v289, 7
    %v292 = vshll.u32 %v96, 16
    %v294 = vor.u32 %v291, %v292
    %v295 = vsel %vm109, %v287, %v294
    %v296 = vrot.slane %v291, 4
    %v298 = vshrl.u32 %v97, 16
    %v300 = vrot.slane %v298, 7
    %v301 = vshll.u32 %v97, 16
    %v303 = vor.u32 %v300, %v301
    %v304 = vrot.slane %v300, 4
    %v306 = vshrl.u32 %v98, 16
    %v308 = vrot.slane %v306, 7
    %v309 = vshll.u32 %v98, 16
    %v311 = vor.u32 %v308, %v309
    %v312 = vsel %vm109, %v304, %v311
    %v313 = vrot.slane %v308, 4
    %v315 = vshrl.u32 %v99, 16
    %v317 = vrot.slane %v315, 7
    %v318 = vshll.u32 %v99, 16
    %v320 = vor.u32 %v317, %v318
    %v321 = vrot.slane %v317, 4
    %v323 = vshrl.u32 %v100, 16
    %v325 = vrot.slane %v323, 7
    %v326 = vshll.u32 %v100, 16
    %v328 = vor.u32 %v325, %v326
    %v329 = vsel %vm109, %v321, %v328
    %v330 = vrot.slane %v325, 4
    %v332 = vshrl.u32 %v101, 16
    %v334 = vrot.slane %v332, 7
    %v335 = vshll.u32 %v101, 16
    %v337 = vor.u32 %v334, %v335
    %v338 = vrot.slane %v334, 4
    %v340 = vshrl.u32 %v102, 16
    %v342 = vrot.slane %v340, 7
    %v343 = vshll.u32 %v102, 16
    %v345 = vor.u32 %v342, %v343
    %v346 = vsel %vm109, %v338, %v345
    %v347 = vrot.slane %v342, 4
    %v349 = vshrl.u32 %v103, 16
    %v351 = vrot.slane %v349, 7
    %v352 = vshll.u32 %v103, 16
    %v354 = vor.u32 %v351, %v352
    %v355 = vrot.slane %v351, 4
    %v357 = vshrl.u32 %v104, 16
    %v359 = vrot.slane %v357, 7
    %v360 = vshll.u32 %v104, 16
    %v362 = vor.u32 %v359, %v360
    %v363 = vsel %vm109, %v355, %v362
    %v364 = vrot.slane %v359, 4
    %v366 = vshrl.u32 %v105, 16
    %v368 = vrot.slane %v366, 7
    %v369 = vshll.u32 %v105, 16
    %v371 = vor.u32 %v368, %v369
    %v372 = vrot.slane %v368, 4
    %v374 = vshrl.u32 %v106, 16
    %v376 = vrot.slane %v374, 7
    %v377 = vshll.u32 %v106, 16
    %v379 = vor.u32 %v376, %v377
    %v380 = vsel %vm109, %v372, %v379
    %v381 = vrot.slane %v376, 4
    %s430 = scalar_lea.vmem [#allocation2], 12
    %vm431 = vcmask 19456
    %vm432 = vsmask.f32 7938
    %vm433 = vmand %vm431, %vm432
    %v434 = vld [vmem:[%s430] sm:$0xf]
    %v435 = vsel %vm433, %v116, %v434
    %436 = vst [vmem:[%s430] sm:$0xf] %v435
    %437 = vst.msk [vmem:[%s430 + $0x4] sm:$0xf] %vm19, %v125
    %vm438 = vcmask 16384
    %vm439 = vmand %vm438, %vm107
    %v440 = vld [vmem:[%s430 + $0x8] sm:$0x1]
    %v441 = vsel %vm439, %v126, %v440
    %442 = vst [vmem:[%s430 + $0x8] sm:$0x1] %v441
    %v443 = vld [vmem:[%s430 + $0xc] sm:$0xf]
    %v444 = vsel %vm433, %v133, %v443
    %445 = vst [vmem:[%s430 + $0xc] sm:$0xf] %v444
    %446 = vst.msk [vmem:[%s430 + $0x10] sm:$0xf] %vm19, %v142
    %v447 = vld [vmem:[%s430 + $0x14] sm:$0x1]
    %v448 = vsel %vm439, %v143, %v447
    %449 = vst [vmem:[%s430 + $0x14] sm:$0x1] %v448
    %v450 = vld [vmem:[%s430 + $0x18] sm:$0xf]
    %v451 = vsel %vm433, %v150, %v450
    %452 = vst [vmem:[%s430 + $0x18] sm:$0xf] %v451
    %453 = vst.msk [vmem:[%s430 + $0x1c] sm:$0xf] %vm19, %v159
    %v454 = vld [vmem:[%s430 + $0x20] sm:$0x1]
    %v455 = vsel %vm439, %v160, %v454
    %456 = vst [vmem:[%s430 + $0x20] sm:$0x1] %v455
    %v457 = vld [vmem:[%s430 + $0x24] sm:$0xf]
    %v458 = vsel %vm433, %v167, %v457
    %459 = vst [vmem:[%s430 + $0x24] sm:$0xf] %v458
    %460 = vst.msk [vmem:[%s430 + $0x28] sm:$0xf] %vm19, %v176
    %v461 = vld [vmem:[%s430 + $0x2c] sm:$0x1]
    %v462 = vsel %vm439, %v177, %v461
    %463 = vst [vmem:[%s430 + $0x2c] sm:$0x1] %v462
    %v464 = vld [vmem:[%s430 + $0x30] sm:$0xf]
    %v465 = vsel %vm433, %v184, %v464
    %466 = vst [vmem:[%s430 + $0x30] sm:$0xf] %v465
    %467 = vst.msk [vmem:[%s430 + $0x34] sm:$0xf] %vm19, %v193
    %v468 = vld [vmem:[%s430 + $0x38] sm:$0x1]
    %v469 = vsel %vm439, %v194, %v468
    %470 = vst [vmem:[%s430 + $0x38] sm:$0x1] %v469
    %v471 = vld [vmem:[%s430 + $0x3c] sm:$0xf]
    %v472 = vsel %vm433, %v201, %v471
    %473 = vst [vmem:[%s430 + $0x3c] sm:$0xf] %v472
    %474 = vst.msk [vmem:[%s430 + $0x40] sm:$0xf] %vm19, %v210
    %v475 = vld [vmem:[%s430 + $0x44] sm:$0x1]
    %v476 = vsel %vm439, %v211, %v475
    %477 = vst [vmem:[%s430 + $0x44] sm:$0x1] %v476
    %v478 = vld [vmem:[%s430 + $0x48] sm:$0xf]
    %v479 = vsel %vm433, %v218, %v478
    %480 = vst [vmem:[%s430 + $0x48] sm:$0xf] %v479
    %481 = vst.msk [vmem:[%s430 + $0x4c] sm:$0xf] %vm19, %v227
    %v482 = vld [vmem:[%s430 + $0x50] sm:$0x1]
    %v483 = vsel %vm439, %v228, %v482
    %484 = vst [vmem:[%s430 + $0x50] sm:$0x1] %v483
    %v485 = vld [vmem:[%s430 + $0x54] sm:$0xf]
    %v486 = vsel %vm433, %v235, %v485
    %487 = vst [vmem:[%s430 + $0x54] sm:$0xf] %v486
    %488 = vst.msk [vmem:[%s430 + $0x58] sm:$0xf] %vm19, %v244
    %v489 = vld [vmem:[%s430 + $0x5c] sm:$0x1]
    %v490 = vsel %vm439, %v245, %v489
    %491 = vst [vmem:[%s430 + $0x5c] sm:$0x1] %v490
    %v492 = vld [vmem:[%s430 + $0x60] sm:$0xf]
    %v493 = vsel %vm433, %v252, %v492
    %494 = vst [vmem:[%s430 + $0x60] sm:$0xf] %v493
    %495 = vst.msk [vmem:[%s430 + $0x64] sm:$0xf] %vm19, %v261
    %v496 = vld [vmem:[%s430 + $0x68] sm:$0x1]
    %v497 = vsel %vm439, %v262, %v496
    %498 = vst [vmem:[%s430 + $0x68] sm:$0x1] %v497
    %v499 = vld [vmem:[%s430 + $0x6c] sm:$0xf]
    %v500 = vsel %vm433, %v269, %v499
    %501 = vst [vmem:[%s430 + $0x6c] sm:$0xf] %v500
    %502 = vst.msk [vmem:[%s430 + $0x70] sm:$0xf] %vm19, %v278
    %v503 = vld [vmem:[%s430 + $0x74] sm:$0x1]
    %v504 = vsel %vm439, %v279, %v503
    %505 = vst [vmem:[%s430 + $0x74] sm:$0x1] %v504
    %v506 = vld [vmem:[%s430 + $0x78] sm:$0xf]
    %v507 = vsel %vm433, %v286, %v506
    %508 = vst [vmem:[%s430 + $0x78] sm:$0xf] %v507
    %509 = vst.msk [vmem:[%s430 + $0x7c] sm:$0xf] %vm19, %v295
    %v510 = vld [vmem:[%s430 + $0x80] sm:$0x1]
    %v511 = vsel %vm439, %v296, %v510
    %512 = vst [vmem:[%s430 + $0x80] sm:$0x1] %v511
    %v513 = vld [vmem:[%s430 + $0x84] sm:$0xf]
    %v514 = vsel %vm433, %v303, %v513
    %515 = vst [vmem:[%s430 + $0x84] sm:$0xf] %v514
    %516 = vst.msk [vmem:[%s430 + $0x88] sm:$0xf] %vm19, %v312
    %v517 = vld [vmem:[%s430 + $0x8c] sm:$0x1]
    %v518 = vsel %vm439, %v313, %v517
    %519 = vst [vmem:[%s430 + $0x8c] sm:$0x1] %v518
    %v520 = vld [vmem:[%s430 + $0x90] sm:$0xf]
    %v521 = vsel %vm433, %v320, %v520
    %522 = vst [vmem:[%s430 + $0x90] sm:$0xf] %v521
    %523 = vst.msk [vmem:[%s430 + $0x94] sm:$0xf] %vm19, %v329
    %v524 = vld [vmem:[%s430 + $0x98] sm:$0x1]
    %v525 = vsel %vm439, %v330, %v524
    %526 = vst [vmem:[%s430 + $0x98] sm:$0x1] %v525
    %v527 = vld [vmem:[%s430 + $0x9c] sm:$0xf]
    %v528 = vsel %vm433, %v337, %v527
    %529 = vst [vmem:[%s430 + $0x9c] sm:$0xf] %v528
    %530 = vst.msk [vmem:[%s430 + $0xa0] sm:$0xf] %vm19, %v346
    %v531 = vld [vmem:[%s430 + $0xa4] sm:$0x1]
    %v532 = vsel %vm439, %v347, %v531
    %533 = vst [vmem:[%s430 + $0xa4] sm:$0x1] %v532
    %v534 = vld [vmem:[%s430 + $0xa8] sm:$0xf]
    %v535 = vsel %vm433, %v354, %v534
    %536 = vst [vmem:[%s430 + $0xa8] sm:$0xf] %v535
    %537 = vst.msk [vmem:[%s430 + $0xac] sm:$0xf] %vm19, %v363
    %v538 = vld [vmem:[%s430 + $0xb0] sm:$0x1]
    %v539 = vsel %vm439, %v364, %v538
    %540 = vst [vmem:[%s430 + $0xb0] sm:$0x1] %v539
    %v541 = vld [vmem:[%s430 + $0xb4] sm:$0xf]
    %v542 = vsel %vm433, %v371, %v541
    %543 = vst [vmem:[%s430 + $0xb4] sm:$0xf] %v542
    %544 = vst.msk [vmem:[%s430 + $0xb8] sm:$0xf] %vm19, %v380
    %v545 = vld [vmem:[%s430 + $0xbc] sm:$0x1]
    %v546 = vsel %vm439, %v381, %v545
    %547 = vst [vmem:[%s430 + $0xbc] sm:$0x1] %v546
    %v548 = vld [vmem:[#allocation2] sm:$0xf]
    %v549 = vld [vmem:[#allocation2 + $0x4] sm:$0xf]
    %v550 = vld [vmem:[#allocation2 + $0xc] sm:$0xf]
    %v551 = vld [vmem:[#allocation2 + $0x10] sm:$0xf]
    %v552 = vld [vmem:[#allocation2 + $0x18] sm:$0xf]
    %v553 = vld [vmem:[#allocation2 + $0x1c] sm:$0xf]
    %v554 = vld [vmem:[#allocation2 + $0x24] sm:$0xf]
    %v555 = vld [vmem:[#allocation2 + $0x28] sm:$0xf]
    %v556 = vld [vmem:[#allocation2 + $0x30] sm:$0xf]
    %v557 = vld [vmem:[#allocation2 + $0x34] sm:$0xf]
    %v558 = vld [vmem:[#allocation2 + $0x3c] sm:$0xf]
    %v559 = vld [vmem:[#allocation2 + $0x40] sm:$0xf]
    %v560 = vld [vmem:[#allocation2 + $0x48] sm:$0xf]
    %v561 = vld [vmem:[#allocation2 + $0x4c] sm:$0xf]
    %v562 = vld [vmem:[#allocation2 + $0x54] sm:$0xf]
    %v563 = vld [vmem:[#allocation2 + $0x58] sm:$0xf]
    %v564 = vld [vmem:[#allocation2 + $0x60] sm:$0xf]
    %v565 = vld [vmem:[#allocation2 + $0x64] sm:$0xf]
    %v566 = vld [vmem:[#allocation2 + $0x6c] sm:$0xf]
    %v567 = vld [vmem:[#allocation2 + $0x70] sm:$0xf]
    %v568 = vld [vmem:[#allocation2 + $0x78] sm:$0xf]
    %v569 = vld [vmem:[#allocation2 + $0x7c] sm:$0xf]
    %v570 = vld [vmem:[#allocation2 + $0x84] sm:$0xf]
    %v571 = vld [vmem:[#allocation2 + $0x88] sm:$0xf]
    %v572 = vld [vmem:[#allocation2 + $0x90] sm:$0xf]
    %v573 = vld [vmem:[#allocation2 + $0x94] sm:$0xf]
    %v574 = vld [vmem:[#allocation2 + $0x9c] sm:$0xf]
    %v575 = vld [vmem:[#allocation2 + $0xa0] sm:$0xf]
    %v576 = vld [vmem:[#allocation2 + $0xa8] sm:$0xf]
    %v577 = vld [vmem:[#allocation2 + $0xac] sm:$0xf]
    %v578 = vld [vmem:[#allocation2 + $0xb4] sm:$0xf]
    %v579 = vld [vmem:[#allocation2 + $0xb8] sm:$0xf]
    %v580 = vld [vmem:[%s1] sm:$0x3]
    %v581 = vld [vmem:[#allocation2 + $0x8] sm:$0x1]
    %v582 = vld [vmem:[#allocation2 + $0x14] sm:$0x1]
    %v583 = vld [vmem:[#allocation2 + $0x20] sm:$0x1]
    %v584 = vld [vmem:[#allocation2 + $0x2c] sm:$0x1]
    %v585 = vld [vmem:[#allocation2 + $0x38] sm:$0x1]
    %v586 = vld [vmem:[#allocation2 + $0x44] sm:$0x1]
    %v587 = vld [vmem:[#allocation2 + $0x50] sm:$0x1]
    %v588 = vld [vmem:[#allocation2 + $0x5c] sm:$0x1]
    %v589 = vld [vmem:[#allocation2 + $0x68] sm:$0x1]
    %v590 = vld [vmem:[#allocation2 + $0x74] sm:$0x1]
    %v591 = vld [vmem:[#allocation2 + $0x80] sm:$0x1]
    %v592 = vld [vmem:[#allocation2 + $0x8c] sm:$0x1]
    %v593 = vld [vmem:[#allocation2 + $0x98] sm:$0x1]
    %v594 = vld [vmem:[#allocation2 + $0xa4] sm:$0x1]
    %v595 = vld [vmem:[#allocation2 + $0xb0] sm:$0x1]
    %v596 = vld [vmem:[#allocation2 + $0xbc] sm:$0x1]
    %vm597 = vsmask.f32 3328
    %vm598 = vsmask.f32 7440
    %vm599 = vmor %vm597, %vm598
    %v601 = vshrl.u32 %v548, 16
    %v603 = vrot.slane %v601, 4
    %v604 = vshll.u32 %v548, 16
    %v606 = vrot.slane %v604, 5
    %v607 = vor.u32 %v603, %v606
    %v608 = vrot.slane %v607, 4
    %v610 = vshll.u32 %v549, 16
    %v612 = vrot.slane %v610, 5
    %v613 = vsel %vm599, %v608, %v612
    %v614 = vshrl.u32 %v549, 16
    %v616 = vrot.slane %v614, 4
    %v617 = vor.u32 %v616, %v612
    %v618 = vrot.slane %v617, 4
    %v620 = vshll.u32 %v581, 16
    %v622 = vrot.slane %v620, 5
    %v623 = vsel %vm599, %v618, %v622
    %v625 = vshrl.u32 %v550, 16
    %v627 = vrot.slane %v625, 4
    %v628 = vshll.u32 %v550, 16
    %v630 = vrot.slane %v628, 5
    %v631 = vor.u32 %v627, %v630
    %v632 = vrot.slane %v631, 4
    %v634 = vshll.u32 %v551, 16
    %v636 = vrot.slane %v634, 5
    %v637 = vsel %vm599, %v632, %v636
    %v638 = vshrl.u32 %v551, 16
    %v640 = vrot.slane %v638, 4
    %v641 = vor.u32 %v640, %v636
    %v642 = vrot.slane %v641, 4
    %v644 = vshll.u32 %v582, 16
    %v646 = vrot.slane %v644, 5
    %v647 = vsel %vm599, %v642, %v646
    %v649 = vshrl.u32 %v552, 16
    %v651 = vrot.slane %v649, 4
    %v652 = vshll.u32 %v552, 16
    %v654 = vrot.slane %v652, 5
    %v655 = vor.u32 %v651, %v654
    %v656 = vrot.slane %v655, 4
    %v658 = vshll.u32 %v553, 16
    %v660 = vrot.slane %v658, 5
    %v661 = vsel %vm599, %v656, %v660
    %v662 = vshrl.u32 %v553, 16
    %v664 = vrot.slane %v662, 4
    %v665 = vor.u32 %v664, %v660
    %v666 = vrot.slane %v665, 4
    %v668 = vshll.u32 %v583, 16
    %v670 = vrot.slane %v668, 5
    %v671 = vsel %vm599, %v666, %v670
    %v673 = vshrl.u32 %v554, 16
    %v675 = vrot.slane %v673, 4
    %v676 = vshll.u32 %v554, 16
    %v678 = vrot.slane %v676, 5
    %v679 = vor.u32 %v675, %v678
    %v680 = vrot.slane %v679, 4
    %v682 = vshll.u32 %v555, 16
    %v684 = vrot.slane %v682, 5
    %v685 = vsel %vm599, %v680, %v684
    %v686 = vshrl.u32 %v555, 16
    %v688 = vrot.slane %v686, 4
    %v689 = vor.u32 %v688, %v684
    %v690 = vrot.slane %v689, 4
    %v692 = vshll.u32 %v584, 16
    %v694 = vrot.slane %v692, 5
    %v695 = vsel %vm599, %v690, %v694
    %v697 = vshrl.u32 %v556, 16
    %v699 = vrot.slane %v697, 4
    %v700 = vshll.u32 %v556, 16
    %v702 = vrot.slane %v700, 5
    %v703 = vor.u32 %v699, %v702
    %v704 = vrot.slane %v703, 4
    %v706 = vshll.u32 %v557, 16
    %v708 = vrot.slane %v706, 5
    %v709 = vsel %vm599, %v704, %v708
    %v710 = vshrl.u32 %v557, 16
    %v712 = vrot.slane %v710, 4
    %v713 = vor.u32 %v712, %v708
    %v714 = vrot.slane %v713, 4
    %v716 = vshll.u32 %v585, 16
    %v718 = vrot.slane %v716, 5
    %v719 = vsel %vm599, %v714, %v718
    %v721 = vshrl.u32 %v558, 16
    %v723 = vrot.slane %v721, 4
    %v724 = vshll.u32 %v558, 16
    %v726 = vrot.slane %v724, 5
    %v727 = vor.u32 %v723, %v726
    %v728 = vrot.slane %v727, 4
    %v730 = vshll.u32 %v559, 16
    %v732 = vrot.slane %v730, 5
    %v733 = vsel %vm599, %v728, %v732
    %v734 = vshrl.u32 %v559, 16
    %v736 = vrot.slane %v734, 4
    %v737 = vor.u32 %v736, %v732
    %v738 = vrot.slane %v737, 4
    %v740 = vshll.u32 %v586, 16
    %v742 = vrot.slane %v740, 5
    %v743 = vsel %vm599, %v738, %v742
    %v745 = vshrl.u32 %v560, 16
    %v747 = vrot.slane %v745, 4
    %v748 = vshll.u32 %v560, 16
    %v750 = vrot.slane %v748, 5
    %v751 = vor.u32 %v747, %v750
    %v752 = vrot.slane %v751, 4
    %v754 = vshll.u32 %v561, 16
    %v756 = vrot.slane %v754, 5
    %v757 = vsel %vm599, %v752, %v756
    %v758 = vshrl.u32 %v561, 16
    %v760 = vrot.slane %v758, 4
    %v761 = vor.u32 %v760, %v756
    %v762 = vrot.slane %v761, 4
    %v764 = vshll.u32 %v587, 16
    %v766 = vrot.slane %v764, 5
    %v767 = vsel %vm599, %v762, %v766
    %v769 = vshrl.u32 %v562, 16
    %v771 = vrot.slane %v769, 4
    %v772 = vshll.u32 %v562, 16
    %v774 = vrot.slane %v772, 5
    %v775 = vor.u32 %v771, %v774
    %v776 = vrot.slane %v775, 4
    %v778 = vshll.u32 %v563, 16
    %v780 = vrot.slane %v778, 5
    %v781 = vsel %vm599, %v776, %v780
    %v782 = vshrl.u32 %v563, 16
    %v784 = vrot.slane %v782, 4
    %v785 = vor.u32 %v784, %v780
    %v786 = vrot.slane %v785, 4
    %v788 = vshll.u32 %v588, 16
    %v790 = vrot.slane %v788, 5
    %v791 = vsel %vm599, %v786, %v790
    %v793 = vshrl.u32 %v564, 16
    %v795 = vrot.slane %v793, 4
    %v796 = vshll.u32 %v564, 16
    %v798 = vrot.slane %v796, 5
    %v799 = vor.u32 %v795, %v798
    %v800 = vrot.slane %v799, 4
    %v802 = vshll.u32 %v565, 16
    %v804 = vrot.slane %v802, 5
    %v805 = vsel %vm599, %v800, %v804
    %v806 = vshrl.u32 %v565, 16
    %v808 = vrot.slane %v806, 4
    %v809 = vor.u32 %v808, %v804
    %v810 = vrot.slane %v809, 4
    %v812 = vshll.u32 %v589, 16
    %v814 = vrot.slane %v812, 5
    %v815 = vsel %vm599, %v810, %v814
    %v817 = vshrl.u32 %v566, 16
    %v819 = vrot.slane %v817, 4
    %v820 = vshll.u32 %v566, 16
    %v822 = vrot.slane %v820, 5
    %v823 = vor.u32 %v819, %v822
    %v824 = vrot.slane %v823, 4
    %v826 = vshll.u32 %v567, 16
    %v828 = vrot.slane %v826, 5
    %v829 = vsel %vm599, %v824, %v828
    %v830 = vshrl.u32 %v567, 16
    %v832 = vrot.slane %v830, 4
    %v833 = vor.u32 %v832, %v828
    %v834 = vrot.slane %v833, 4
    %v836 = vshll.u32 %v590, 16
    %v838 = vrot.slane %v836, 5
    %v839 = vsel %vm599, %v834, %v838
    %v841 = vshrl.u32 %v568, 16
    %v843 = vrot.slane %v841, 4
    %v844 = vshll.u32 %v568, 16
    %v846 = vrot.slane %v844, 5
    %v847 = vor.u32 %v843, %v846
    %v848 = vrot.slane %v847, 4
    %v850 = vshll.u32 %v569, 16
    %v852 = vrot.slane %v850, 5
    %v853 = vsel %vm599, %v848, %v852
    %v854 = vshrl.u32 %v569, 16
    %v856 = vrot.slane %v854, 4
    %v857 = vor.u32 %v856, %v852
    %v858 = vrot.slane %v857, 4
    %v860 = vshll.u32 %v591, 16
    %v862 = vrot.slane %v860, 5
    %v863 = vsel %vm599, %v858, %v862
    %v865 = vshrl.u32 %v570, 16
    %v867 = vrot.slane %v865, 4
    %v868 = vshll.u32 %v570, 16
    %v870 = vrot.slane %v868, 5
    %v871 = vor.u32 %v867, %v870
    %v872 = vrot.slane %v871, 4
    %v874 = vshll.u32 %v571, 16
    %v876 = vrot.slane %v874, 5
    %v877 = vsel %vm599, %v872, %v876
    %v878 = vshrl.u32 %v571, 16
    %v880 = vrot.slane %v878, 4
    %v881 = vor.u32 %v880, %v876
    %v882 = vrot.slane %v881, 4
    %v884 = vshll.u32 %v592, 16
    %v886 = vrot.slane %v884, 5
    %v887 = vsel %vm599, %v882, %v886
    %v889 = vshrl.u32 %v572, 16
    %v891 = vrot.slane %v889, 4
    %v892 = vshll.u32 %v572, 16
    %v894 = vrot.slane %v892, 5
    %v895 = vor.u32 %v891, %v894
    %v896 = vrot.slane %v895, 4
    %v898 = vshll.u32 %v573, 16
    %v900 = vrot.slane %v898, 5
    %v901 = vsel %vm599, %v896, %v900
    %v902 = vshrl.u32 %v573, 16
    %v904 = vrot.slane %v902, 4
    %v905 = vor.u32 %v904, %v900
    %v906 = vrot.slane %v905, 4
    %v908 = vshll.u32 %v593, 16
    %v910 = vrot.slane %v908, 5
    %v911 = vsel %vm599, %v906, %v910
    %v913 = vshrl.u32 %v574, 16
    %v915 = vrot.slane %v913, 4
    %v916 = vshll.u32 %v574, 16
    %v918 = vrot.slane %v916, 5
    %v919 = vor.u32 %v915, %v918
    %v920 = vrot.slane %v919, 4
    %v922 = vshll.u32 %v575, 16
    %v924 = vrot.slane %v922, 5
    %v925 = vsel %vm599, %v920, %v924
    %v926 = vshrl.u32 %v575, 16
    %v928 = vrot.slane %v926, 4
    %v929 = vor.u32 %v928, %v924
    %v930 = vrot.slane %v929, 4
    %v932 = vshll.u32 %v594, 16
    %v934 = vrot.slane %v932, 5
    %v935 = vsel %vm599, %v930, %v934
    %v937 = vshrl.u32 %v576, 16
    %v939 = vrot.slane %v937, 4
    %v940 = vshll.u32 %v576, 16
    %v942 = vrot.slane %v940, 5
    %v943 = vor.u32 %v939, %v942
    %v944 = vrot.slane %v943, 4
    %v946 = vshll.u32 %v577, 16
    %v948 = vrot.slane %v946, 5
    %v949 = vsel %vm599, %v944, %v948
    %v950 = vshrl.u32 %v577, 16
    %v952 = vrot.slane %v950, 4
    %v953 = vor.u32 %v952, %v948
    %v954 = vrot.slane %v953, 4
    %v956 = vshll.u32 %v595, 16
    %v958 = vrot.slane %v956, 5
    %v959 = vsel %vm599, %v954, %v958
    %v961 = vshrl.u32 %v578, 16
    %v963 = vrot.slane %v961, 4
    %v964 = vshll.u32 %v578, 16
    %v966 = vrot.slane %v964, 5
    %v967 = vor.u32 %v963, %v966
    %v968 = vrot.slane %v967, 4
    %v970 = vshll.u32 %v579, 16
    %v972 = vrot.slane %v970, 5
    %v973 = vsel %vm599, %v968, %v972
    %v974 = vshrl.u32 %v579, 16
    %v976 = vrot.slane %v974, 4
    %v977 = vor.u32 %v976, %v972
    %v978 = vrot.slane %v977, 4
    %v980 = vshll.u32 %v596, 16
    %v982 = vrot.slane %v980, 5
    %v983 = vsel %vm599, %v978, %v982
    %s984 = scalar_lea.vmem %s1, 2
    %v985 = vld [vmem:[%s984] sm:$0x3]
    %v986 = vunpack.c.l.b16 %v613
    %v987 = vunpack.c.l.b16 %v623
    %v988 = vunpack.c.l.b16 %v637
    %v989 = vunpack.c.l.b16 %v647
    %v990 = vunpack.c.l.b16 %v661
    %v991 = vunpack.c.l.b16 %v671
    %v992 = vunpack.c.l.b16 %v685
    %v993 = vunpack.c.l.b16 %v695
    %v994 = vunpack.c.l.b16 %v709
    %v995 = vunpack.c.l.b16 %v719
    %v996 = vunpack.c.l.b16 %v733
    %v997 = vunpack.c.l.b16 %v743
    %v998 = vunpack.c.l.b16 %v757
    %v999 = vunpack.c.l.b16 %v767
    %v1000 = vunpack.c.l.b16 %v781
    %v1001 = vunpack.c.l.b16 %v791
    %v1002 = vunpack.c.l.b16 %v805
    %v1003 = vunpack.c.l.b16 %v815
    %v1004 = vunpack.c.l.b16 %v829
    %v1005 = vunpack.c.l.b16 %v839
    %v1006 = vunpack.c.l.b16 %v853
    %v1007 = vunpack.c.l.b16 %v863
    %v1008 = vunpack.c.l.b16 %v877
    %v1009 = vunpack.c.l.b16 %v887
    %v1010 = vunpack.c.l.b16 %v901
    %v1011 = vunpack.c.l.b16 %v911
    %v1012 = vunpack.c.l.b16 %v925
    %v1013 = vunpack.c.l.b16 %v935
    %v1014 = vunpack.c.l.b16 %v949
    %v1015 = vunpack.c.l.b16 %v959
    %v1016 = vunpack.c.l.b16 %v973
    %v1017 = vunpack.c.l.b16 %v983
    %v1018 = vpack.c.b16 %v987, %v986
    %v1019 = vpack.c.b16 %v989, %v988
    %v1020 = vpack.c.b16 %v991, %v990
    %v1021 = vpack.c.b16 %v993, %v992
    %v1022 = vpack.c.b16 %v995, %v994
    %v1023 = vpack.c.b16 %v997, %v996
    %v1024 = vpack.c.b16 %v999, %v998
    %v1025 = vpack.c.b16 %v1001, %v1000
    %v1026 = vpack.c.b16 %v1003, %v1002
    %v1027 = vpack.c.b16 %v1005, %v1004
    %v1028 = vpack.c.b16 %v1007, %v1006
    %v1029 = vpack.c.b16 %v1009, %v1008
    %v1030 = vpack.c.b16 %v1011, %v1010
    %v1031 = vpack.c.b16 %v1013, %v1012
    %v1032 = vpack.c.b16 %v1015, %v1014
    %v1033 = vpack.c.b16 %v1017, %v1016
    %vm1034 = vcmask 23552
    %v1036 = vsel %vm1034, %v1018, 0
    %v1039 = vsel %vm1034, %v1019, 0
    %v1042 = vsel %vm1034, %v1020, 0
    %v1045 = vsel %vm1034, %v1021, 0
    %v1048 = vsel %vm1034, %v1022, 0
    %v1051 = vsel %vm1034, %v1023, 0
    %v1054 = vsel %vm1034, %v1024, 0
    %v1057 = vsel %vm1034, %v1025, 0
    %v1060 = vsel %vm1034, %v1026, 0
    %v1063 = vsel %vm1034, %v1027, 0
    %v1066 = vsel %vm1034, %v1028, 0
    %v1069 = vsel %vm1034, %v1029, 0
    %v1072 = vsel %vm1034, %v1030, 0
    %v1075 = vsel %vm1034, %v1031, 0
    %v1078 = vsel %vm1034, %v1032, 0
    %v1081 = vsel %vm1034, %v1033, 0
    %vm1083 = vcmask 1040384
    %vm1084 = vcmask 1041408
    %v1085 = vsel %vm1083, 4294967295, 65535
    %v1086 = vsel %vm1084, %v1085, 0
    %v1088 = vand.u32 %v985, %v1086
    %1090 = vmatprep.subr.bf16.mxu0 0
    %1091 = vmatpush1.bf16.msra.mxu0 %v1088
    %1092 = vmatprep.subr.bf16.mxu0 0
    %1093 = vmatpush1.bf16.msra.mxu0 0
    %1094 = vmatprep.subr.bf16.mxu0 0
    %1095 = vmatpush1.bf16.msra.mxu0 0
    %1096 = vmatprep.subr.bf16.mxu0 0
    %1097 = vmatpush1.bf16.msra.mxu0 0
    %1098 = vmatprep.subr.bf16.mxu0 0
    %1099 = vmatpush1.bf16.msra.mxu0 0
    %1100 = vmatprep.subr.bf16.mxu0 0
    %1101 = vmatpush1.bf16.msra.mxu0 0
    %1102 = vmatprep.subr.bf16.mxu0 0
    %1103 = vmatpush1.bf16.msra.mxu0 0
    %1104 = vmatprep.subr.bf16.mxu0 0
    %1105 = vmatpush1.bf16.msra.mxu0 0
    %1106 = vmatprep.subr.bf16.mxu0 0
    %1107 = vmatpush1.bf16.msra.mxu0 0
    %1108 = vmatprep.subr.bf16.mxu0 0
    %1109 = vmatpush1.bf16.msra.mxu0 0
    %1110 = vmatprep.subr.bf16.mxu0 0
    %1111 = vmatpush1.bf16.msra.mxu0 0
    %1112 = vmatprep.subr.bf16.mxu0 0
    %1113 = vmatpush1.bf16.msra.mxu0 0
    %1114 = vmatprep.subr.bf16.mxu0 0
    %1115 = vmatpush1.bf16.msra.mxu0 0
    %1116 = vmatprep.subr.bf16.mxu0 0
    %1117 = vmatpush1.bf16.msra.mxu0 0
    %1118 = vmatprep.subr.bf16.mxu0 0
    %1119 = vmatpush1.bf16.msra.mxu0 0
    %1120 = vmatprep.subr.bf16.mxu0 0
    %1121 = vmatpush1.bf16.msra.mxu0 0
    %1122 = vmatprep.mubr.bf16.mxu0 0
    %1123 = vmatmul.mubr.bf16.gmra.mrb[0].mxu0 %v1036
    %v1124 = vpop.f32.mrb[0].mxu0
    %v1125 = vadd.f32 0.0, %v1124
    %v1126 = vpop.f32.mrb[0].mxu0
    %v1127 = vpop.f32.mrb[0].mxu0
    %v1128 = vadd.f32 0.0, %v1127
    %v1129 = vpop.f32.mrb[0].mxu0
    %1130 = vmatprep.mubr.bf16.mxu0 0
    %1131 = vmatmul.mubr.bf16.gmra.mrb[0].mxu0 %v1039
    %v1132 = vpop.f32.mrb[0].mxu0
    %v1133 = vadd.f32 0.0, %v1132
    %v1134 = vpop.f32.mrb[0].mxu0
    %v1135 = vpop.f32.mrb[0].mxu0
    %v1136 = vadd.f32 0.0, %v1135
    %v1137 = vpop.f32.mrb[0].mxu0
    %1138 = vmatprep.mubr.bf16.mxu0 0
    %1139 = vmatmul.mubr.bf16.gmra.mrb[0].mxu0 %v1042
    %v1140 = vpop.f32.mrb[0].mxu0
    %v1141 = vadd.f32 0.0, %v1140
    %v1142 = vpop.f32.mrb[0].mxu0
    %v1143 = vpop.f32.mrb[0].mxu0
    %v1144 = vadd.f32 0.0, %v1143
    %v1145 = vpop.f32.mrb[0].mxu0
    %1146 = vmatprep.mubr.bf16.mxu0 0
    %1147 = vmatmul.mubr.bf16.gmra.mrb[0].mxu0 %v1045
    %v1148 = vpop.f32.mrb[0].mxu0
    %v1149 = vadd.f32 0.0, %v1148
    %v1150 = vpop.f32.mrb[0].mxu0
    %v1151 = vpop.f32.mrb[0].mxu0
    %v1152 = vadd.f32 0.0, %v1151
    %v1153 = vpop.f32.mrb[0].mxu0
    %1154 = vmatprep.mubr.bf16.mxu0 0
    %1155 = vmatmul.mubr.bf16.gmra.mrb[0].mxu0 %v1048
    %v1156 = vpop.f32.mrb[0].mxu0
    %v1157 = vadd.f32 0.0, %v1156
    %v1158 = vpop.f32.mrb[0].mxu0
    %v1159 = vpop.f32.mrb[0].mxu0
    %v1160 = vadd.f32 0.0, %v1159
    %v1161 = vpop.f32.mrb[0].mxu0
    %1162 = vmatprep.mubr.bf16.mxu0 0
    %1163 = vmatmul.mubr.bf16.gmra.mrb[0].mxu0 %v1051
    %v1164 = vpop.f32.mrb[0].mxu0
    %v1165 = vadd.f32 0.0, %v1164
    %v1166 = vpop.f32.mrb[0].mxu0
    %v1167 = vpop.f32.mrb[0].mxu0
    %v1168 = vadd.f32 0.0, %v1167
    %v1169 = vpop.f32.mrb[0].mxu0
    %1170 = vmatprep.mubr.bf16.mxu0 0
    %1171 = vmatmul.mubr.bf16.gmra.mrb[0].mxu0 %v1054
    %v1172 = vpop.f32.mrb[0].mxu0
    %v1173 = vadd.f32 0.0, %v1172
    %v1174 = vpop.f32.mrb[0].mxu0
    %v1175 = vpop.f32.mrb[0].mxu0
    %v1176 = vadd.f32 0.0, %v1175
    %v1177 = vpop.f32.mrb[0].mxu0
    %1178 = vmatprep.mubr.bf16.mxu0 0
    %1179 = vmatmul.mubr.bf16.gmra.mrb[0].mxu0 %v1057
    %v1180 = vpop.f32.mrb[0].mxu0
    %v1181 = vadd.f32 0.0, %v1180
    %v1182 = vpop.f32.mrb[0].mxu0
    %v1183 = vpop.f32.mrb[0].mxu0
    %v1184 = vadd.f32 0.0, %v1183
    %v1185 = vpop.f32.mrb[0].mxu0
    %1186 = vmatprep.mubr.bf16.mxu0 0
    %1187 = vmatmul.mubr.bf16.gmra.mrb[0].mxu0 %v1060
    %v1188 = vpop.f32.mrb[0].mxu0
    %v1189 = vadd.f32 0.0, %v1188
    %v1190 = vpop.f32.mrb[0].mxu0
    %v1191 = vpop.f32.mrb[0].mxu0
    %v1192 = vadd.f32 0.0, %v1191
    %v1193 = vpop.f32.mrb[0].mxu0
    %1194 = vmatprep.mubr.bf16.mxu0 0
    %1195 = vmatmul.mubr.bf16.gmra.mrb[0].mxu0 %v1063
    %v1196 = vpop.f32.mrb[0].mxu0
    %v1197 = vadd.f32 0.0, %v1196
    %v1198 = vpop.f32.mrb[0].mxu0
    %v1199 = vpop.f32.mrb[0].mxu0
    %v1200 = vadd.f32 0.0, %v1199
    %v1201 = vpop.f32.mrb[0].mxu0
    %1202 = vmatprep.mubr.bf16.mxu0 0
    %1203 = vmatmul.mubr.bf16.gmra.mrb[0].mxu0 %v1066
    %v1204 = vpop.f32.mrb[0].mxu0
    %v1205 = vadd.f32 0.0, %v1204
    %v1206 = vpop.f32.mrb[0].mxu0
    %v1207 = vpop.f32.mrb[0].mxu0
    %v1208 = vadd.f32 0.0, %v1207
    %v1209 = vpop.f32.mrb[0].mxu0
    %1210 = vmatprep.mubr.bf16.mxu0 0
    %1211 = vmatmul.mubr.bf16.gmra.mrb[0].mxu0 %v1069
    %v1212 = vpop.f32.mrb[0].mxu0
    %v1213 = vadd.f32 0.0, %v1212
    %v1214 = vpop.f32.mrb[0].mxu0
    %v1215 = vpop.f32.mrb[0].mxu0
    %v1216 = vadd.f32 0.0, %v1215
    %v1217 = vpop.f32.mrb[0].mxu0
    %1218 = vmatprep.mubr.bf16.mxu0 0
    %1219 = vmatmul.mubr.bf16.gmra.mrb[0].mxu0 %v1072
    %v1220 = vpop.f32.mrb[0].mxu0
    %v1221 = vadd.f32 0.0, %v1220
    %v1222 = vpop.f32.mrb[0].mxu0
    %v1223 = vpop.f32.mrb[0].mxu0
    %v1224 = vadd.f32 0.0, %v1223
    %v1225 = vpop.f32.mrb[0].mxu0
    %1226 = vmatprep.mubr.bf16.mxu0 0
    %1227 = vmatmul.mubr.bf16.gmra.mrb[0].mxu0 %v1075
    %v1228 = vpop.f32.mrb[0].mxu0
    %v1229 = vadd.f32 0.0, %v1228
    %v1230 = vpop.f32.mrb[0].mxu0
    %v1231 = vpop.f32.mrb[0].mxu0
    %v1232 = vadd.f32 0.0, %v1231
    %v1233 = vpop.f32.mrb[0].mxu0
    %1234 = vmatprep.mubr.bf16.mxu0 0
    %1235 = vmatmul.mubr.bf16.gmra.mrb[0].mxu0 %v1078
    %v1236 = vpop.f32.mrb[0].mxu0
    %v1237 = vadd.f32 0.0, %v1236
    %v1238 = vpop.f32.mrb[0].mxu0
    %v1239 = vpop.f32.mrb[0].mxu0
    %v1240 = vadd.f32 0.0, %v1239
    %v1241 = vpop.f32.mrb[0].mxu0
    %1242 = vmatprep.mubr.bf16.mxu0 0
    %1243 = vmatmul.mubr.bf16.gmra.mrb[0].mxu0 %v1081
    %v1244 = vpop.f32.mrb[0].mxu0
    %v1245 = vadd.f32 0.0, %v1244
    %v1246 = vpop.f32.mrb[0].mxu0
    %v1247 = vpop.f32.mrb[0].mxu0
    %v1248 = vadd.f32 0.0, %v1247
    %v1249 = vpop.f32.mrb[0].mxu0
    %1250 = vdwg.mxu0
    %v1283 = vunpack.c.l.b16 %v548
    %v1284 = vunpack.c.l.b16 %v549
    %v1285 = vunpack.c.l.b16 %v550
    %v1286 = vunpack.c.l.b16 %v551
    %v1287 = vunpack.c.l.b16 %v552
    %v1288 = vunpack.c.l.b16 %v553
    %v1289 = vunpack.c.l.b16 %v554
    %v1290 = vunpack.c.l.b16 %v555
    %v1291 = vunpack.c.l.b16 %v556
    %v1292 = vunpack.c.l.b16 %v557
    %v1293 = vunpack.c.l.b16 %v558
    %v1294 = vunpack.c.l.b16 %v559
    %v1295 = vunpack.c.l.b16 %v560
    %v1296 = vunpack.c.l.b16 %v561
    %v1297 = vunpack.c.l.b16 %v562
    %v1298 = vunpack.c.l.b16 %v563
    %v1299 = vunpack.c.l.b16 %v564
    %v1300 = vunpack.c.l.b16 %v565
    %v1301 = vunpack.c.l.b16 %v566
    %v1302 = vunpack.c.l.b16 %v567
    %v1303 = vunpack.c.l.b16 %v568
    %v1304 = vunpack.c.l.b16 %v569
    %v1305 = vunpack.c.l.b16 %v570
    %v1306 = vunpack.c.l.b16 %v571
    %v1307 = vunpack.c.l.b16 %v572
    %v1308 = vunpack.c.l.b16 %v573
    %v1309 = vunpack.c.l.b16 %v574
    %v1310 = vunpack.c.l.b16 %v575
    %v1311 = vunpack.c.l.b16 %v576
    %v1312 = vunpack.c.l.b16 %v577
    %v1313 = vunpack.c.l.b16 %v578
    %v1314 = vunpack.c.l.b16 %v579
    %v1315 = vpack.c.b16 %v1284, %v1283
    %v1316 = vpack.c.b16 %v1286, %v1285
    %v1317 = vpack.c.b16 %v1288, %v1287
    %v1318 = vpack.c.b16 %v1290, %v1289
    %v1319 = vpack.c.b16 %v1292, %v1291
    %v1320 = vpack.c.b16 %v1294, %v1293
    %v1321 = vpack.c.b16 %v1296, %v1295
    %v1322 = vpack.c.b16 %v1298, %v1297
    %v1323 = vpack.c.b16 %v1300, %v1299
    %v1324 = vpack.c.b16 %v1302, %v1301
    %v1325 = vpack.c.b16 %v1304, %v1303
    %v1326 = vpack.c.b16 %v1306, %v1305
    %v1327 = vpack.c.b16 %v1308, %v1307
    %v1328 = vpack.c.b16 %v1310, %v1309
    %v1329 = vpack.c.b16 %v1312, %v1311
    %v1330 = vpack.c.b16 %v1314, %v1313
    %v1332 = vsel %vm1034, %v1315, 0
    %v1335 = vsel %vm1034, %v1316, 0
    %v1338 = vsel %vm1034, %v1317, 0
    %v1341 = vsel %vm1034, %v1318, 0
    %v1344 = vsel %vm1034, %v1319, 0
    %v1347 = vsel %vm1034, %v1320, 0
    %v1350 = vsel %vm1034, %v1321, 0
    %v1353 = vsel %vm1034, %v1322, 0
    %v1356 = vsel %vm1034, %v1323, 0
    %v1359 = vsel %vm1034, %v1324, 0
    %v1362 = vsel %vm1034, %v1325, 0
    %v1365 = vsel %vm1034, %v1326, 0
    %v1368 = vsel %vm1034, %v1327, 0
    %v1371 = vsel %vm1034, %v1328, 0
    %v1374 = vsel %vm1034, %v1329, 0
    %v1377 = vsel %vm1034, %v1330, 0
    %v1380 = vand.u32 %v580, %v1086
    %1382 = vmatprep.subr.bf16.mxu0 0
    %1383 = vmatpush1.bf16.msra.mxu0 %v1380
    %1384 = vmatprep.subr.bf16.mxu0 0
    %1385 = vmatpush1.bf16.msra.mxu0 0
    %1386 = vmatprep.subr.bf16.mxu0 0
    %1387 = vmatpush1.bf16.msra.mxu0 0
    %1388 = vmatprep.subr.bf16.mxu0 0
    %1389 = vmatpush1.bf16.msra.mxu0 0
    %1390 = vmatprep.subr.bf16.mxu0 0
    %1391 = vmatpush1.bf16.msra.mxu0 0
    %1392 = vmatprep.subr.bf16.mxu0 0
    %1393 = vmatpush1.bf16.msra.mxu0 0
    %1394 = vmatprep.subr.bf16.mxu0 0
    %1395 = vmatpush1.bf16.msra.mxu0 0
    %1396 = vmatprep.subr.bf16.mxu0 0
    %1397 = vmatpush1.bf16.msra.mxu0 0
    %1398 = vmatprep.subr.bf16.mxu0 0
    %1399 = vmatpush1.bf16.msra.mxu0 0
    %1400 = vmatprep.subr.bf16.mxu0 0
    %1401 = vmatpush1.bf16.msra.mxu0 0
    %1402 = vmatprep.subr.bf16.mxu0 0
    %1403 = vmatpush1.bf16.msra.mxu0 0
    %1404 = vmatprep.subr.bf16.mxu0 0
    %1405 = vmatpush1.bf16.msra.mxu0 0
    %1406 = vmatprep.subr.bf16.mxu0 0
    %1407 = vmatpush1.bf16.msra.mxu0 0
    %1408 = vmatprep.subr.bf16.mxu0 0
    %1409 = vmatpush1.bf16.msra.mxu0 0
    %1410 = vmatprep.subr.bf16.mxu0 0
    %1411 = vmatpush1.bf16.msra.mxu0 0
    %1412 = vmatprep.subr.bf16.mxu0 0
    %1413 = vmatpush1.bf16.msra.mxu0 0
    %1414 = vmatprep.mubr.bf16.mxu0 0
    %1415 = vmatmul.mubr.bf16.gmra.mrb[0].mxu0 %v1332
    %v1416 = vpop.f32.mrb[0].mxu0
    %v1417 = vadd.f32 %v1125, %v1416
    %v1418 = vpop.f32.mrb[0].mxu0
    %v1419 = vpop.f32.mrb[0].mxu0
    %v1420 = vadd.f32 %v1128, %v1419
    %v1421 = vpop.f32.mrb[0].mxu0
    %1422 = vmatprep.mubr.bf16.mxu0 0
    %1423 = vmatmul.mubr.bf16.gmra.mrb[0].mxu0 %v1335
    %v1424 = vpop.f32.mrb[0].mxu0
    %v1425 = vadd.f32 %v1133, %v1424
    %v1426 = vpop.f32.mrb[0].mxu0
    %v1427 = vpop.f32.mrb[0].mxu0
    %v1428 = vadd.f32 %v1136, %v1427
    %v1429 = vpop.f32.mrb[0].mxu0
    %1430 = vmatprep.mubr.bf16.mxu0 0
    %1431 = vmatmul.mubr.bf16.gmra.mrb[0].mxu0 %v1338
    %v1432 = vpop.f32.mrb[0].mxu0
    %v1433 = vadd.f32 %v1141, %v1432
    %v1434 = vpop.f32.mrb[0].mxu0
    %v1435 = vpop.f32.mrb[0].mxu0
    %v1436 = vadd.f32 %v1144, %v1435
    %v1437 = vpop.f32.mrb[0].mxu0
    %1438 = vmatprep.mubr.bf16.mxu0 0
    %1439 = vmatmul.mubr.bf16.gmra.mrb[0].mxu0 %v1341
    %v1440 = vpop.f32.mrb[0].mxu0
    %v1441 = vadd.f32 %v1149, %v1440
    %v1442 = vpop.f32.mrb[0].mxu0
    %v1443 = vpop.f32.mrb[0].mxu0
    %v1444 = vadd.f32 %v1152, %v1443
    %v1445 = vpop.f32.mrb[0].mxu0
    %1446 = vmatprep.mubr.bf16.mxu0 0
    %1447 = vmatmul.mubr.bf16.gmra.mrb[0].mxu0 %v1344
    %v1448 = vpop.f32.mrb[0].mxu0
    %v1449 = vadd.f32 %v1157, %v1448
    %v1450 = vpop.f32.mrb[0].mxu0
    %v1451 = vpop.f32.mrb[0].mxu0
    %v1452 = vadd.f32 %v1160, %v1451
    %v1453 = vpop.f32.mrb[0].mxu0
    %1454 = vmatprep.mubr.bf16.mxu0 0
    %1455 = vmatmul.mubr.bf16.gmra.mrb[0].mxu0 %v1347
    %v1456 = vpop.f32.mrb[0].mxu0
    %v1457 = vadd.f32 %v1165, %v1456
    %v1458 = vpop.f32.mrb[0].mxu0
    %v1459 = vpop.f32.mrb[0].mxu0
    %v1460 = vadd.f32 %v1168, %v1459
    %v1461 = vpop.f32.mrb[0].mxu0
    %1462 = vmatprep.mubr.bf16.mxu0 0
    %1463 = vmatmul.mubr.bf16.gmra.mrb[0].mxu0 %v1350
    %v1464 = vpop.f32.mrb[0].mxu0
    %v1465 = vadd.f32 %v1173, %v1464
    %v1466 = vpop.f32.mrb[0].mxu0
    %v1467 = vpop.f32.mrb[0].mxu0
    %v1468 = vadd.f32 %v1176, %v1467
    %v1469 = vpop.f32.mrb[0].mxu0
    %1470 = vmatprep.mubr.bf16.mxu0 0
    %1471 = vmatmul.mubr.bf16.gmra.mrb[0].mxu0 %v1353
    %v1472 = vpop.f32.mrb[0].mxu0
    %v1473 = vadd.f32 %v1181, %v1472
    %v1474 = vpop.f32.mrb[0].mxu0
    %v1475 = vpop.f32.mrb[0].mxu0
    %v1476 = vadd.f32 %v1184, %v1475
    %v1477 = vpop.f32.mrb[0].mxu0
    %1478 = vmatprep.mubr.bf16.mxu0 0
    %1479 = vmatmul.mubr.bf16.gmra.mrb[0].mxu0 %v1356
    %v1480 = vpop.f32.mrb[0].mxu0
    %v1481 = vadd.f32 %v1189, %v1480
    %v1482 = vpop.f32.mrb[0].mxu0
    %v1483 = vpop.f32.mrb[0].mxu0
    %v1484 = vadd.f32 %v1192, %v1483
    %v1485 = vpop.f32.mrb[0].mxu0
    %1486 = vmatprep.mubr.bf16.mxu0 0
    %1487 = vmatmul.mubr.bf16.gmra.mrb[0].mxu0 %v1359
    %v1488 = vpop.f32.mrb[0].mxu0
    %v1489 = vadd.f32 %v1197, %v1488
    %v1490 = vpop.f32.mrb[0].mxu0
    %v1491 = vpop.f32.mrb[0].mxu0
    %v1492 = vadd.f32 %v1200, %v1491
    %v1493 = vpop.f32.mrb[0].mxu0
    %1494 = vmatprep.mubr.bf16.mxu0 0
    %1495 = vmatmul.mubr.bf16.gmra.mrb[0].mxu0 %v1362
    %v1496 = vpop.f32.mrb[0].mxu0
    %v1497 = vadd.f32 %v1205, %v1496
    %v1498 = vpop.f32.mrb[0].mxu0
    %v1499 = vpop.f32.mrb[0].mxu0
    %v1500 = vadd.f32 %v1208, %v1499
    %v1501 = vpop.f32.mrb[0].mxu0
    %1502 = vmatprep.mubr.bf16.mxu0 0
    %1503 = vmatmul.mubr.bf16.gmra.mrb[0].mxu0 %v1365
    %v1504 = vpop.f32.mrb[0].mxu0
    %v1505 = vadd.f32 %v1213, %v1504
    %v1506 = vpop.f32.mrb[0].mxu0
    %v1507 = vpop.f32.mrb[0].mxu0
    %v1508 = vadd.f32 %v1216, %v1507
    %v1509 = vpop.f32.mrb[0].mxu0
    %1510 = vmatprep.mubr.bf16.mxu0 0
    %1511 = vmatmul.mubr.bf16.gmra.mrb[0].mxu0 %v1368
    %v1512 = vpop.f32.mrb[0].mxu0
    %v1513 = vadd.f32 %v1221, %v1512
    %v1514 = vpop.f32.mrb[0].mxu0
    %v1515 = vpop.f32.mrb[0].mxu0
    %v1516 = vadd.f32 %v1224, %v1515
    %v1517 = vpop.f32.mrb[0].mxu0
    %1518 = vmatprep.mubr.bf16.mxu0 0
    %1519 = vmatmul.mubr.bf16.gmra.mrb[0].mxu0 %v1371
    %v1520 = vpop.f32.mrb[0].mxu0
    %v1521 = vadd.f32 %v1229, %v1520
    %v1522 = vpop.f32.mrb[0].mxu0
    %v1523 = vpop.f32.mrb[0].mxu0
    %v1524 = vadd.f32 %v1232, %v1523
    %v1525 = vpop.f32.mrb[0].mxu0
    %1526 = vmatprep.mubr.bf16.mxu0 0
    %1527 = vmatmul.mubr.bf16.gmra.mrb[0].mxu0 %v1374
    %v1528 = vpop.f32.mrb[0].mxu0
    %v1529 = vadd.f32 %v1237, %v1528
    %v1530 = vpop.f32.mrb[0].mxu0
    %v1531 = vpop.f32.mrb[0].mxu0
    %v1532 = vadd.f32 %v1240, %v1531
    %v1533 = vpop.f32.mrb[0].mxu0
    %1534 = vmatprep.mubr.bf16.mxu0 0
    %1535 = vmatmul.mubr.bf16.gmra.mrb[0].mxu0 %v1377
    %v1536 = vpop.f32.mrb[0].mxu0
    %v1537 = vadd.f32 %v1245, %v1536
    %v1538 = vpop.f32.mrb[0].mxu0
    %v1539 = vpop.f32.mrb[0].mxu0
    %v1540 = vadd.f32 %v1248, %v1539
    %v1541 = vpop.f32.mrb[0].mxu0
    %1542 = vdwg.mxu0
    %v1543 = vld [vmem:[#allocation2] sm:$0xe]
    %v1544 = vld [vmem:[#allocation2 + $0xc] sm:$0xe]
    %v1545 = vld [vmem:[#allocation2 + $0x18] sm:$0xe]
    %v1546 = vld [vmem:[#allocation2 + $0x24] sm:$0xe]
    %v1547 = vld [vmem:[#allocation2 + $0x30] sm:$0xe]
    %v1548 = vld [vmem:[#allocation2 + $0x3c] sm:$0xe]
    %v1549 = vld [vmem:[#allocation2 + $0x48] sm:$0xe]
    %v1550 = vld [vmem:[#allocation2 + $0x54] sm:$0xe]
    %v1551 = vld [vmem:[#allocation2 + $0x60] sm:$0xe]
    %v1552 = vld [vmem:[#allocation2 + $0x6c] sm:$0xe]
    %v1553 = vld [vmem:[#allocation2 + $0x78] sm:$0xe]
    %v1554 = vld [vmem:[#allocation2 + $0x84] sm:$0xe]
    %v1555 = vld [vmem:[#allocation2 + $0x90] sm:$0xe]
    %v1556 = vld [vmem:[#allocation2 + $0x9c] sm:$0xe]
    %v1557 = vld [vmem:[#allocation2 + $0xa8] sm:$0xe]
    %v1558 = vld [vmem:[#allocation2 + $0xb4] sm:$0xe]
    %vm1591 = vcmask 1042432
    %vm1592 = vcmask 1046532
    %vm1593 = vmor %vm1591, %vm1592
    %v1594 = vrot.slane %v1543, 5
    %v1595 = vrot.slane %v1594, 4
    %v1596 = vrot.slane %v549, 5
    %v1597 = vsel %vm1593, %v1595, %v1596
    %v1598 = vrot.slane %v1596, 4
    %v1599 = vrot.slane %v581, 5
    %v1600 = vsel %vm1593, %v1598, %v1599
    %v1601 = vrot.slane %v1544, 5
    %v1602 = vrot.slane %v1601, 4
    %v1603 = vrot.slane %v551, 5
    %v1604 = vsel %vm1593, %v1602, %v1603
    %v1605 = vrot.slane %v1603, 4
    %v1606 = vrot.slane %v582, 5
    %v1607 = vsel %vm1593, %v1605, %v1606
    %v1608 = vrot.slane %v1545, 5
    %v1609 = vrot.slane %v1608, 4
    %v1610 = vrot.slane %v553, 5
    %v1611 = vsel %vm1593, %v1609, %v1610
    %v1612 = vrot.slane %v1610, 4
    %v1613 = vrot.slane %v583, 5
    %v1614 = vsel %vm1593, %v1612, %v1613
    %v1615 = vrot.slane %v1546, 5
    %v1616 = vrot.slane %v1615, 4
    %v1617 = vrot.slane %v555, 5
    %v1618 = vsel %vm1593, %v1616, %v1617
    %v1619 = vrot.slane %v1617, 4
    %v1620 = vrot.slane %v584, 5
    %v1621 = vsel %vm1593, %v1619, %v1620
    %v1622 = vrot.slane %v1547, 5
    %v1623 = vrot.slane %v1622, 4
    %v1624 = vrot.slane %v557, 5
    %v1625 = vsel %vm1593, %v1623, %v1624
    %v1626 = vrot.slane %v1624, 4
    %v1627 = vrot.slane %v585, 5
    %v1628 = vsel %vm1593, %v1626, %v1627
    %v1629 = vrot.slane %v1548, 5
    %v1630 = vrot.slane %v1629, 4
    %v1631 = vrot.slane %v559, 5
    %v1632 = vsel %vm1593, %v1630, %v1631
    %v1633 = vrot.slane %v1631, 4
    %v1634 = vrot.slane %v586, 5
    %v1635 = vsel %vm1593, %v1633, %v1634
    %v1636 = vrot.slane %v1549, 5
    %v1637 = vrot.slane %v1636, 4
    %v1638 = vrot.slane %v561, 5
    %v1639 = vsel %vm1593, %v1637, %v1638
    %v1640 = vrot.slane %v1638, 4
    %v1641 = vrot.slane %v587, 5
    %v1642 = vsel %vm1593, %v1640, %v1641
    %v1643 = vrot.slane %v1550, 5
    %v1644 = vrot.slane %v1643, 4
    %v1645 = vrot.slane %v563, 5
    %v1646 = vsel %vm1593, %v1644, %v1645
    %v1647 = vrot.slane %v1645, 4
    %v1648 = vrot.slane %v588, 5
    %v1649 = vsel %vm1593, %v1647, %v1648
    %v1650 = vrot.slane %v1551, 5
    %v1651 = vrot.slane %v1650, 4
    %v1652 = vrot.slane %v565, 5
    %v1653 = vsel %vm1593, %v1651, %v1652
    %v1654 = vrot.slane %v1652, 4
    %v1655 = vrot.slane %v589, 5
    %v1656 = vsel %vm1593, %v1654, %v1655
    %v1657 = vrot.slane %v1552, 5
    %v1658 = vrot.slane %v1657, 4
    %v1659 = vrot.slane %v567, 5
    %v1660 = vsel %vm1593, %v1658, %v1659
    %v1661 = vrot.slane %v1659, 4
    %v1662 = vrot.slane %v590, 5
    %v1663 = vsel %vm1593, %v1661, %v1662
    %v1664 = vrot.slane %v1553, 5
    %v1665 = vrot.slane %v1664, 4
    %v1666 = vrot.slane %v569, 5
    %v1667 = vsel %vm1593, %v1665, %v1666
    %v1668 = vrot.slane %v1666, 4
    %v1669 = vrot.slane %v591, 5
    %v1670 = vsel %vm1593, %v1668, %v1669
    %v1671 = vrot.slane %v1554, 5
    %v1672 = vrot.slane %v1671, 4
    %v1673 = vrot.slane %v571, 5
    %v1674 = vsel %vm1593, %v1672, %v1673
    %v1675 = vrot.slane %v1673, 4
    %v1676 = vrot.slane %v592, 5
    %v1677 = vsel %vm1593, %v1675, %v1676
    %v1678 = vrot.slane %v1555, 5
    %v1679 = vrot.slane %v1678, 4
    %v1680 = vrot.slane %v573, 5
    %v1681 = vsel %vm1593, %v1679, %v1680
    %v1682 = vrot.slane %v1680, 4
    %v1683 = vrot.slane %v593, 5
    %v1684 = vsel %vm1593, %v1682, %v1683
    %v1685 = vrot.slane %v1556, 5
    %v1686 = vrot.slane %v1685, 4
    %v1687 = vrot.slane %v575, 5
    %v1688 = vsel %vm1593, %v1686, %v1687
    %v1689 = vrot.slane %v1687, 4
    %v1690 = vrot.slane %v594, 5
    %v1691 = vsel %vm1593, %v1689, %v1690
    %v1692 = vrot.slane %v1557, 5
    %v1693 = vrot.slane %v1692, 4
    %v1694 = vrot.slane %v577, 5
    %v1695 = vsel %vm1593, %v1693, %v1694
    %v1696 = vrot.slane %v1694, 4
    %v1697 = vrot.slane %v595, 5
    %v1698 = vsel %vm1593, %v1696, %v1697
    %v1699 = vrot.slane %v1558, 5
    %v1700 = vrot.slane %v1699, 4
    %v1701 = vrot.slane %v579, 5
    %v1702 = vsel %vm1593, %v1700, %v1701
    %v1703 = vrot.slane %v1701, 4
    %v1704 = vrot.slane %v596, 5
    %v1705 = vsel %vm1593, %v1703, %v1704
    %s1706 = scalar_lea.vmem %s1, 4
    %v1707 = vld [vmem:[%s1706] sm:$0x3]
    %v1708 = vunpack.c.l.b16 %v1597
    %v1709 = vunpack.c.l.b16 %v1600
    %v1710 = vunpack.c.l.b16 %v1604
    %v1711 = vunpack.c.l.b16 %v1607
    %v1712 = vunpack.c.l.b16 %v1611
    %v1713 = vunpack.c.l.b16 %v1614
    %v1714 = vunpack.c.l.b16 %v1618
    %v1715 = vunpack.c.l.b16 %v1621
    %v1716 = vunpack.c.l.b16 %v1625
    %v1717 = vunpack.c.l.b16 %v1628
    %v1718 = vunpack.c.l.b16 %v1632
    %v1719 = vunpack.c.l.b16 %v1635
    %v1720 = vunpack.c.l.b16 %v1639
    %v1721 = vunpack.c.l.b16 %v1642
    %v1722 = vunpack.c.l.b16 %v1646
    %v1723 = vunpack.c.l.b16 %v1649
    %v1724 = vunpack.c.l.b16 %v1653
    %v1725 = vunpack.c.l.b16 %v1656
    %v1726 = vunpack.c.l.b16 %v1660
    %v1727 = vunpack.c.l.b16 %v1663
    %v1728 = vunpack.c.l.b16 %v1667
    %v1729 = vunpack.c.l.b16 %v1670
    %v1730 = vunpack.c.l.b16 %v1674
    %v1731 = vunpack.c.l.b16 %v1677
    %v1732 = vunpack.c.l.b16 %v1681
    %v1733 = vunpack.c.l.b16 %v1684
    %v1734 = vunpack.c.l.b16 %v1688
    %v1735 = vunpack.c.l.b16 %v1691
    %v1736 = vunpack.c.l.b16 %v1695
    %v1737 = vunpack.c.l.b16 %v1698
    %v1738 = vunpack.c.l.b16 %v1702
    %v1739 = vunpack.c.l.b16 %v1705
    %v1740 = vpack.c.b16 %v1709, %v1708
    %v1741 = vpack.c.b16 %v1711, %v1710
    %v1742 = vpack.c.b16 %v1713, %v1712
    %v1743 = vpack.c.b16 %v1715, %v1714
    %v1744 = vpack.c.b16 %v1717, %v1716
    %v1745 = vpack.c.b16 %v1719, %v1718
    %v1746 = vpack.c.b16 %v1721, %v1720
    %v1747 = vpack.c.b16 %v1723, %v1722
    %v1748 = vpack.c.b16 %v1725, %v1724
    %v1749 = vpack.c.b16 %v1727, %v1726
    %v1750 = vpack.c.b16 %v1729, %v1728
    %v1751 = vpack.c.b16 %v1731, %v1730
    %v1752 = vpack.c.b16 %v1733, %v1732
    %v1753 = vpack.c.b16 %v1735, %v1734
    %v1754 = vpack.c.b16 %v1737, %v1736
    %v1755 = vpack.c.b16 %v1739, %v1738
    %v1757 = vsel %vm1034, %v1740, 0
    %v1760 = vsel %vm1034, %v1741, 0
    %v1763 = vsel %vm1034, %v1742, 0
    %v1766 = vsel %vm1034, %v1743, 0
    %v1769 = vsel %vm1034, %v1744, 0
    %v1772 = vsel %vm1034, %v1745, 0
    %v1775 = vsel %vm1034, %v1746, 0
    %v1778 = vsel %vm1034, %v1747, 0
    %v1781 = vsel %vm1034, %v1748, 0
    %v1784 = vsel %vm1034, %v1749, 0
    %v1787 = vsel %vm1034, %v1750, 0
    %v1790 = vsel %vm1034, %v1751, 0
    %v1793 = vsel %vm1034, %v1752, 0
    %v1796 = vsel %vm1034, %v1753, 0
    %v1799 = vsel %vm1034, %v1754, 0
    %v1802 = vsel %vm1034, %v1755, 0
    %v1805 = vand.u32 %v1707, %v1086
    %1807 = vmatprep.subr.bf16.mxu0 0
    %1808 = vmatpush1.bf16.msra.mxu0 %v1805
    %1809 = vmatprep.subr.bf16.mxu0 0
    %1810 = vmatpush1.bf16.msra.mxu0 0
    %1811 = vmatprep.subr.bf16.mxu0 0
    %1812 = vmatpush1.bf16.msra.mxu0 0
    %1813 = vmatprep.subr.bf16.mxu0 0
    %1814 = vmatpush1.bf16.msra.mxu0 0
    %1815 = vmatprep.subr.bf16.mxu0 0
    %1816 = vmatpush1.bf16.msra.mxu0 0
    %1817 = vmatprep.subr.bf16.mxu0 0
    %1818 = vmatpush1.bf16.msra.mxu0 0
    %1819 = vmatprep.subr.bf16.mxu0 0
    %1820 = vmatpush1.bf16.msra.mxu0 0
    %1821 = vmatprep.subr.bf16.mxu0 0
    %1822 = vmatpush1.bf16.msra.mxu0 0
    %1823 = vmatprep.subr.bf16.mxu0 0
    %1824 = vmatpush1.bf16.msra.mxu0 0
    %1825 = vmatprep.subr.bf16.mxu0 0
    %1826 = vmatpush1.bf16.msra.mxu0 0
    %1827 = vmatprep.subr.bf16.mxu0 0
    %1828 = vmatpush1.bf16.msra.mxu0 0
    %1829 = vmatprep.subr.bf16.mxu0 0
    %1830 = vmatpush1.bf16.msra.mxu0 0
    %1831 = vmatprep.subr.bf16.mxu0 0
    %1832 = vmatpush1.bf16.msra.mxu0 0
    %1833 = vmatprep.subr.bf16.mxu0 0
    %1834 = vmatpush1.bf16.msra.mxu0 0
    %1835 = vmatprep.subr.bf16.mxu0 0
    %1836 = vmatpush1.bf16.msra.mxu0 0
    %1837 = vmatprep.subr.bf16.mxu0 0
    %1838 = vmatpush1.bf16.msra.mxu0 0
    %1839 = vmatprep.mubr.bf16.mxu0 0
    %1840 = vmatmul.mubr.bf16.gmra.mrb[0].mxu0 %v1757
    %v1841 = vpop.f32.mrb[0].mxu0
    %v1842 = vadd.f32 0.0, %v1841
    %v1843 = vpop.f32.mrb[0].mxu0
    %v1844 = vpop.f32.mrb[0].mxu0
    %v1845 = vadd.f32 0.0, %v1844
    %v1846 = vpop.f32.mrb[0].mxu0
    %1847 = vmatprep.mubr.bf16.mxu0 0
    %1848 = vmatmul.mubr.bf16.gmra.mrb[0].mxu0 %v1760
    %v1849 = vpop.f32.mrb[0].mxu0
    %v1850 = vadd.f32 0.0, %v1849
    %v1851 = vpop.f32.mrb[0].mxu0
    %v1852 = vpop.f32.mrb[0].mxu0
    %v1853 = vadd.f32 0.0, %v1852
    %v1854 = vpop.f32.mrb[0].mxu0
    %1855 = vmatprep.mubr.bf16.mxu0 0
    %1856 = vmatmul.mubr.bf16.gmra.mrb[0].mxu0 %v1763
    %v1857 = vpop.f32.mrb[0].mxu0
    %v1858 = vadd.f32 0.0, %v1857
    %v1859 = vpop.f32.mrb[0].mxu0
    %v1860 = vpop.f32.mrb[0].mxu0
    %v1861 = vadd.f32 0.0, %v1860
    %v1862 = vpop.f32.mrb[0].mxu0
    %1863 = vmatprep.mubr.bf16.mxu0 0
    %1864 = vmatmul.mubr.bf16.gmra.mrb[0].mxu0 %v1766
    %v1865 = vpop.f32.mrb[0].mxu0
    %v1866 = vadd.f32 0.0, %v1865
    %v1867 = vpop.f32.mrb[0].mxu0
    %v1868 = vpop.f32.mrb[0].mxu0
    %v1869 = vadd.f32 0.0, %v1868
    %v1870 = vpop.f32.mrb[0].mxu0
    %1871 = vmatprep.mubr.bf16.mxu0 0
    %1872 = vmatmul.mubr.bf16.gmra.mrb[0].mxu0 %v1769
    %v1873 = vpop.f32.mrb[0].mxu0
    %v1874 = vadd.f32 0.0, %v1873
    %v1875 = vpop.f32.mrb[0].mxu0
    %v1876 = vpop.f32.mrb[0].mxu0
    %v1877 = vadd.f32 0.0, %v1876
    %v1878 = vpop.f32.mrb[0].mxu0
    %1879 = vmatprep.mubr.bf16.mxu0 0
    %1880 = vmatmul.mubr.bf16.gmra.mrb[0].mxu0 %v1772
    %v1881 = vpop.f32.mrb[0].mxu0
    %v1882 = vadd.f32 0.0, %v1881
    %v1883 = vpop.f32.mrb[0].mxu0
    %v1884 = vpop.f32.mrb[0].mxu0
    %v1885 = vadd.f32 0.0, %v1884
    %v1886 = vpop.f32.mrb[0].mxu0
    %1887 = vmatprep.mubr.bf16.mxu0 0
    %1888 = vmatmul.mubr.bf16.gmra.mrb[0].mxu0 %v1775
    %v1889 = vpop.f32.mrb[0].mxu0
    %v1890 = vadd.f32 0.0, %v1889
    %v1891 = vpop.f32.mrb[0].mxu0
    %v1892 = vpop.f32.mrb[0].mxu0
    %v1893 = vadd.f32 0.0, %v1892
    %v1894 = vpop.f32.mrb[0].mxu0
    %1895 = vmatprep.mubr.bf16.mxu0 0
    %1896 = vmatmul.mubr.bf16.gmra.mrb[0].mxu0 %v1778
    %v1897 = vpop.f32.mrb[0].mxu0
    %v1898 = vadd.f32 0.0, %v1897
    %v1899 = vpop.f32.mrb[0].mxu0
    %v1900 = vpop.f32.mrb[0].mxu0
    %v1901 = vadd.f32 0.0, %v1900
    %v1902 = vpop.f32.mrb[0].mxu0
    %1903 = vmatprep.mubr.bf16.mxu0 0
    %1904 = vmatmul.mubr.bf16.gmra.mrb[0].mxu0 %v1781
    %v1905 = vpop.f32.mrb[0].mxu0
    %v1906 = vadd.f32 0.0, %v1905
    %v1907 = vpop.f32.mrb[0].mxu0
    %v1908 = vpop.f32.mrb[0].mxu0
    %v1909 = vadd.f32 0.0, %v1908
    %v1910 = vpop.f32.mrb[0].mxu0
    %1911 = vmatprep.mubr.bf16.mxu0 0
    %1912 = vmatmul.mubr.bf16.gmra.mrb[0].mxu0 %v1784
    %v1913 = vpop.f32.mrb[0].mxu0
    %v1914 = vadd.f32 0.0, %v1913
    %v1915 = vpop.f32.mrb[0].mxu0
    %v1916 = vpop.f32.mrb[0].mxu0
    %v1917 = vadd.f32 0.0, %v1916
    %v1918 = vpop.f32.mrb[0].mxu0
    %1919 = vmatprep.mubr.bf16.mxu0 0
    %1920 = vmatmul.mubr.bf16.gmra.mrb[0].mxu0 %v1787
    %v1921 = vpop.f32.mrb[0].mxu0
    %v1922 = vadd.f32 0.0, %v1921
    %v1923 = vpop.f32.mrb[0].mxu0
    %v1924 = vpop.f32.mrb[0].mxu0
    %v1925 = vadd.f32 0.0, %v1924
    %v1926 = vpop.f32.mrb[0].mxu0
    %1927 = vmatprep.mubr.bf16.mxu0 0
    %1928 = vmatmul.mubr.bf16.gmra.mrb[0].mxu0 %v1790
    %v1929 = vpop.f32.mrb[0].mxu0
    %v1930 = vadd.f32 0.0, %v1929
    %v1931 = vpop.f32.mrb[0].mxu0
    %v1932 = vpop.f32.mrb[0].mxu0
    %v1933 = vadd.f32 0.0, %v1932
    %v1934 = vpop.f32.mrb[0].mxu0
    %1935 = vmatprep.mubr.bf16.mxu0 0
    %1936 = vmatmul.mubr.bf16.gmra.mrb[0].mxu0 %v1793
    %v1937 = vpop.f32.mrb[0].mxu0
    %v1938 = vadd.f32 0.0, %v1937
    %v1939 = vpop.f32.mrb[0].mxu0
    %v1940 = vpop.f32.mrb[0].mxu0
    %v1941 = vadd.f32 0.0, %v1940
    %v1942 = vpop.f32.mrb[0].mxu0
    %1943 = vmatprep.mubr.bf16.mxu0 0
    %1944 = vmatmul.mubr.bf16.gmra.mrb[0].mxu0 %v1796
    %v1945 = vpop.f32.mrb[0].mxu0
    %v1946 = vadd.f32 0.0, %v1945
    %v1947 = vpop.f32.mrb[0].mxu0
    %v1948 = vpop.f32.mrb[0].mxu0
    %v1949 = vadd.f32 0.0, %v1948
    %v1950 = vpop.f32.mrb[0].mxu0
    %1951 = vmatprep.mubr.bf16.mxu0 0
    %1952 = vmatmul.mubr.bf16.gmra.mrb[0].mxu0 %v1799
    %v1953 = vpop.f32.mrb[0].mxu0
    %v1954 = vadd.f32 0.0, %v1953
    %v1955 = vpop.f32.mrb[0].mxu0
    %v1956 = vpop.f32.mrb[0].mxu0
    %v1957 = vadd.f32 0.0, %v1956
    %v1958 = vpop.f32.mrb[0].mxu0
    %1959 = vmatprep.mubr.bf16.mxu0 0
    %1960 = vmatmul.mubr.bf16.gmra.mrb[0].mxu0 %v1802
    %v1961 = vpop.f32.mrb[0].mxu0
    %v1962 = vadd.f32 0.0, %v1961
    %v1963 = vpop.f32.mrb[0].mxu0
    %v1964 = vpop.f32.mrb[0].mxu0
    %v1965 = vadd.f32 0.0, %v1964
    %v1966 = vpop.f32.mrb[0].mxu0
    %1967 = vdwg.mxu0
    %v1968 = vadd.f32 %v1417, %v1842
    %v1969 = vadd.f32 %v1420, %v1845
    %v1970 = vadd.f32 %v1425, %v1850
    %v1971 = vadd.f32 %v1428, %v1853
    %v1972 = vadd.f32 %v1433, %v1858
    %v1973 = vadd.f32 %v1436, %v1861
    %v1974 = vadd.f32 %v1441, %v1866
    %v1975 = vadd.f32 %v1444, %v1869
    %v1976 = vadd.f32 %v1449, %v1874
    %v1977 = vadd.f32 %v1452, %v1877
    %v1978 = vadd.f32 %v1457, %v1882
    %v1979 = vadd.f32 %v1460, %v1885
    %v1980 = vadd.f32 %v1465, %v1890
    %v1981 = vadd.f32 %v1468, %v1893
    %v1982 = vadd.f32 %v1473, %v1898
    %v1983 = vadd.f32 %v1476, %v1901
    %v1984 = vadd.f32 %v1481, %v1906
    %v1985 = vadd.f32 %v1484, %v1909
    %v1986 = vadd.f32 %v1489, %v1914
    %v1987 = vadd.f32 %v1492, %v1917
    %v1988 = vadd.f32 %v1497, %v1922
    %v1989 = vadd.f32 %v1500, %v1925
    %v1990 = vadd.f32 %v1505, %v1930
    %v1991 = vadd.f32 %v1508, %v1933
    %v1992 = vadd.f32 %v1513, %v1938
    %v1993 = vadd.f32 %v1516, %v1941
    %v1994 = vadd.f32 %v1521, %v1946
    %v1995 = vadd.f32 %v1524, %v1949
    %v1996 = vadd.f32 %v1529, %v1954
    %v1997 = vadd.f32 %v1532, %v1957
    %v1998 = vadd.f32 %v1537, %v1962
    %v1999 = vadd.f32 %v1540, %v1965
    %v2000 = vld [vmem:[%s430] sm:$0xf]
    %v2001 = vld [vmem:[%s430 + $0x4] sm:$0xf]
    %v2002 = vld [vmem:[%s430 + $0xc] sm:$0xf]
    %v2003 = vld [vmem:[%s430 + $0x10] sm:$0xf]
    %v2004 = vld [vmem:[%s430 + $0x18] sm:$0xf]
    %v2005 = vld [vmem:[%s430 + $0x1c] sm:$0xf]
    %v2006 = vld [vmem:[%s430 + $0x24] sm:$0xf]
    %v2007 = vld [vmem:[%s430 + $0x28] sm:$0xf]
    %v2008 = vld [vmem:[%s430 + $0x30] sm:$0xf]
    %v2009 = vld [vmem:[%s430 + $0x34] sm:$0xf]
    %v2010 = vld [vmem:[%s430 + $0x3c] sm:$0xf]
    %v2011 = vld [vmem:[%s430 + $0x40] sm:$0xf]
    %v2012 = vld [vmem:[%s430 + $0x48] sm:$0xf]
    %v2013 = vld [vmem:[%s430 + $0x4c] sm:$0xf]
    %v2014 = vld [vmem:[%s430 + $0x54] sm:$0xf]
    %v2015 = vld [vmem:[%s430 + $0x58] sm:$0xf]
    %v2016 = vld [vmem:[%s430 + $0x60] sm:$0xf]
    %v2017 = vld [vmem:[%s430 + $0x64] sm:$0xf]
    %v2018 = vld [vmem:[%s430 + $0x6c] sm:$0xf]
    %v2019 = vld [vmem:[%s430 + $0x70] sm:$0xf]
    %v2020 = vld [vmem:[%s430 + $0x78] sm:$0xf]
    %v2021 = vld [vmem:[%s430 + $0x7c] sm:$0xf]
    %v2022 = vld [vmem:[%s430 + $0x84] sm:$0xf]
    %v2023 = vld [vmem:[%s430 + $0x88] sm:$0xf]
    %v2024 = vld [vmem:[%s430 + $0x90] sm:$0xf]
    %v2025 = vld [vmem:[%s430 + $0x94] sm:$0xf]
    %v2026 = vld [vmem:[%s430 + $0x9c] sm:$0xf]
    %v2027 = vld [vmem:[%s430 + $0xa0] sm:$0xf]
    %v2028 = vld [vmem:[%s430 + $0xa8] sm:$0xf]
    %v2029 = vld [vmem:[%s430 + $0xac] sm:$0xf]
    %v2030 = vld [vmem:[%s430 + $0xb4] sm:$0xf]
    %v2031 = vld [vmem:[%s430 + $0xb8] sm:$0xf]
    %s2032 = scalar_lea.vmem %s1, 6
    %v2033 = vld [vmem:[%s2032] sm:$0x3]
    %v2066 = vunpack.c.l.b16 %v2000
    %v2067 = vunpack.c.l.b16 %v2001
    %v2068 = vunpack.c.l.b16 %v2002
    %v2069 = vunpack.c.l.b16 %v2003
    %v2070 = vunpack.c.l.b16 %v2004
    %v2071 = vunpack.c.l.b16 %v2005
    %v2072 = vunpack.c.l.b16 %v2006
    %v2073 = vunpack.c.l.b16 %v2007
    %v2074 = vunpack.c.l.b16 %v2008
    %v2075 = vunpack.c.l.b16 %v2009
    %v2076 = vunpack.c.l.b16 %v2010
    %v2077 = vunpack.c.l.b16 %v2011
    %v2078 = vunpack.c.l.b16 %v2012
    %v2079 = vunpack.c.l.b16 %v2013
    %v2080 = vunpack.c.l.b16 %v2014
    %v2081 = vunpack.c.l.b16 %v2015
    %v2082 = vunpack.c.l.b16 %v2016
    %v2083 = vunpack.c.l.b16 %v2017
    %v2084 = vunpack.c.l.b16 %v2018
    %v2085 = vunpack.c.l.b16 %v2019
    %v2086 = vunpack.c.l.b16 %v2020
    %v2087 = vunpack.c.l.b16 %v2021
    %v2088 = vunpack.c.l.b16 %v2022
    %v2089 = vunpack.c.l.b16 %v2023
    %v2090 = vunpack.c.l.b16 %v2024
    %v2091 = vunpack.c.l.b16 %v2025
    %v2092 = vunpack.c.l.b16 %v2026
    %v2093 = vunpack.c.l.b16 %v2027
    %v2094 = vunpack.c.l.b16 %v2028
    %v2095 = vunpack.c.l.b16 %v2029
    %v2096 = vunpack.c.l.b16 %v2030
    %v2097 = vunpack.c.l.b16 %v2031
    %v2098 = vpack.c.b16 %v2067, %v2066
    %v2099 = vpack.c.b16 %v2069, %v2068
    %v2100 = vpack.c.b16 %v2071, %v2070
    %v2101 = vpack.c.b16 %v2073, %v2072
    %v2102 = vpack.c.b16 %v2075, %v2074
    %v2103 = vpack.c.b16 %v2077, %v2076
    %v2104 = vpack.c.b16 %v2079, %v2078
    %v2105 = vpack.c.b16 %v2081, %v2080
    %v2106 = vpack.c.b16 %v2083, %v2082
    %v2107 = vpack.c.b16 %v2085, %v2084
    %v2108 = vpack.c.b16 %v2087, %v2086
    %v2109 = vpack.c.b16 %v2089, %v2088
    %v2110 = vpack.c.b16 %v2091, %v2090
    %v2111 = vpack.c.b16 %v2093, %v2092
    %v2112 = vpack.c.b16 %v2095, %v2094
    %v2113 = vpack.c.b16 %v2097, %v2096
    %v2115 = vsel %vm1034, %v2098, 0
    %v2118 = vsel %vm1034, %v2099, 0
    %v2121 = vsel %vm1034, %v2100, 0
    %v2124 = vsel %vm1034, %v2101, 0
    %v2127 = vsel %vm1034, %v2102, 0
    %v2130 = vsel %vm1034, %v2103, 0
    %v2133 = vsel %vm1034, %v2104, 0
    %v2136 = vsel %vm1034, %v2105, 0
    %v2139 = vsel %vm1034, %v2106, 0
    %v2142 = vsel %vm1034, %v2107, 0
    %v2145 = vsel %vm1034, %v2108, 0
    %v2148 = vsel %vm1034, %v2109, 0
    %v2151 = vsel %vm1034, %v2110, 0
    %v2154 = vsel %vm1034, %v2111, 0
    %v2157 = vsel %vm1034, %v2112, 0
    %v2160 = vsel %vm1034, %v2113, 0
    %v2163 = vand.u32 %v2033, %v1086
    %2165 = vmatprep.subr.bf16.mxu0 0
    %2166 = vmatpush1.bf16.msra.mxu0 %v2163
    %2167 = vmatprep.subr.bf16.mxu0 0
    %2168 = vmatpush1.bf16.msra.mxu0 0
    %2169 = vmatprep.subr.bf16.mxu0 0
    %2170 = vmatpush1.bf16.msra.mxu0 0
    %2171 = vmatprep.subr.bf16.mxu0 0
    %2172 = vmatpush1.bf16.msra.mxu0 0
    %2173 = vmatprep.subr.bf16.mxu0 0
    %2174 = vmatpush1.bf16.msra.mxu0 0
    %2175 = vmatprep.subr.bf16.mxu0 0
    %2176 = vmatpush1.bf16.msra.mxu0 0
    %2177 = vmatprep.subr.bf16.mxu0 0
    %2178 = vmatpush1.bf16.msra.mxu0 0
    %2179 = vmatprep.subr.bf16.mxu0 0
    %2180 = vmatpush1.bf16.msra.mxu0 0
    %2181 = vmatprep.subr.bf16.mxu0 0
    %2182 = vmatpush1.bf16.msra.mxu0 0
    %2183 = vmatprep.subr.bf16.mxu0 0
    %2184 = vmatpush1.bf16.msra.mxu0 0
    %2185 = vmatprep.subr.bf16.mxu0 0
    %2186 = vmatpush1.bf16.msra.mxu0 0
    %2187 = vmatprep.subr.bf16.mxu0 0
    %2188 = vmatpush1.bf16.msra.mxu0 0
    %2189 = vmatprep.subr.bf16.mxu0 0
    %2190 = vmatpush1.bf16.msra.mxu0 0
    %2191 = vmatprep.subr.bf16.mxu0 0
    %2192 = vmatpush1.bf16.msra.mxu0 0
    %2193 = vmatprep.subr.bf16.mxu0 0
    %2194 = vmatpush1.bf16.msra.mxu0 0
    %2195 = vmatprep.subr.bf16.mxu0 0
    %2196 = vmatpush1.bf16.msra.mxu0 0
    %2197 = vmatprep.mubr.bf16.mxu0 0
    %2198 = vmatmul.mubr.bf16.gmra.mrb[0].mxu0 %v2115
    %v2199 = vpop.f32.mrb[0].mxu0
    %v2200 = vadd.f32 0.0, %v2199
    %v2201 = vpop.f32.mrb[0].mxu0
    %v2202 = vpop.f32.mrb[0].mxu0
    %v2203 = vadd.f32 0.0, %v2202
    %v2204 = vpop.f32.mrb[0].mxu0
    %2205 = vmatprep.mubr.bf16.mxu0 0
    %2206 = vmatmul.mubr.bf16.gmra.mrb[0].mxu0 %v2118
    %v2207 = vpop.f32.mrb[0].mxu0
    %v2208 = vadd.f32 0.0, %v2207
    %v2209 = vpop.f32.mrb[0].mxu0
    %v2210 = vpop.f32.mrb[0].mxu0
    %v2211 = vadd.f32 0.0, %v2210
    %v2212 = vpop.f32.mrb[0].mxu0
    %2213 = vmatprep.mubr.bf16.mxu0 0
    %2214 = vmatmul.mubr.bf16.gmra.mrb[0].mxu0 %v2121
    %v2215 = vpop.f32.mrb[0].mxu0
    %v2216 = vadd.f32 0.0, %v2215
    %v2217 = vpop.f32.mrb[0].mxu0
    %v2218 = vpop.f32.mrb[0].mxu0
    %v2219 = vadd.f32 0.0, %v2218
    %v2220 = vpop.f32.mrb[0].mxu0
    %2221 = vmatprep.mubr.bf16.mxu0 0
    %2222 = vmatmul.mubr.bf16.gmra.mrb[0].mxu0 %v2124
    %v2223 = vpop.f32.mrb[0].mxu0
    %v2224 = vadd.f32 0.0, %v2223
    %v2225 = vpop.f32.mrb[0].mxu0
    %v2226 = vpop.f32.mrb[0].mxu0
    %v2227 = vadd.f32 0.0, %v2226
    %v2228 = vpop.f32.mrb[0].mxu0
    %2229 = vmatprep.mubr.bf16.mxu0 0
    %2230 = vmatmul.mubr.bf16.gmra.mrb[0].mxu0 %v2127
    %v2231 = vpop.f32.mrb[0].mxu0
    %v2232 = vadd.f32 0.0, %v2231
    %v2233 = vpop.f32.mrb[0].mxu0
    %v2234 = vpop.f32.mrb[0].mxu0
    %v2235 = vadd.f32 0.0, %v2234
    %v2236 = vpop.f32.mrb[0].mxu0
    %2237 = vmatprep.mubr.bf16.mxu0 0
    %2238 = vmatmul.mubr.bf16.gmra.mrb[0].mxu0 %v2130
    %v2239 = vpop.f32.mrb[0].mxu0
    %v2240 = vadd.f32 0.0, %v2239
    %v2241 = vpop.f32.mrb[0].mxu0
    %v2242 = vpop.f32.mrb[0].mxu0
    %v2243 = vadd.f32 0.0, %v2242
    %v2244 = vpop.f32.mrb[0].mxu0
    %2245 = vmatprep.mubr.bf16.mxu0 0
    %2246 = vmatmul.mubr.bf16.gmra.mrb[0].mxu0 %v2133
    %v2247 = vpop.f32.mrb[0].mxu0
    %v2248 = vadd.f32 0.0, %v2247
    %v2249 = vpop.f32.mrb[0].mxu0
    %v2250 = vpop.f32.mrb[0].mxu0
    %v2251 = vadd.f32 0.0, %v2250
    %v2252 = vpop.f32.mrb[0].mxu0
    %2253 = vmatprep.mubr.bf16.mxu0 0
    %2254 = vmatmul.mubr.bf16.gmra.mrb[0].mxu0 %v2136
    %v2255 = vpop.f32.mrb[0].mxu0
    %v2256 = vadd.f32 0.0, %v2255
    %v2257 = vpop.f32.mrb[0].mxu0
    %v2258 = vpop.f32.mrb[0].mxu0
    %v2259 = vadd.f32 0.0, %v2258
    %v2260 = vpop.f32.mrb[0].mxu0
    %2261 = vmatprep.mubr.bf16.mxu0 0
    %2262 = vmatmul.mubr.bf16.gmra.mrb[0].mxu0 %v2139
    %v2263 = vpop.f32.mrb[0].mxu0
    %v2264 = vadd.f32 0.0, %v2263
    %v2265 = vpop.f32.mrb[0].mxu0
    %v2266 = vpop.f32.mrb[0].mxu0
    %v2267 = vadd.f32 0.0, %v2266
    %v2268 = vpop.f32.mrb[0].mxu0
    %2269 = vmatprep.mubr.bf16.mxu0 0
    %2270 = vmatmul.mubr.bf16.gmra.mrb[0].mxu0 %v2142
    %v2271 = vpop.f32.mrb[0].mxu0
    %v2272 = vadd.f32 0.0, %v2271
    %v2273 = vpop.f32.mrb[0].mxu0
    %v2274 = vpop.f32.mrb[0].mxu0
    %v2275 = vadd.f32 0.0, %v2274
    %v2276 = vpop.f32.mrb[0].mxu0
    %2277 = vmatprep.mubr.bf16.mxu0 0
    %2278 = vmatmul.mubr.bf16.gmra.mrb[0].mxu0 %v2145
    %v2279 = vpop.f32.mrb[0].mxu0
    %v2280 = vadd.f32 0.0, %v2279
    %v2281 = vpop.f32.mrb[0].mxu0
    %v2282 = vpop.f32.mrb[0].mxu0
    %v2283 = vadd.f32 0.0, %v2282
    %v2284 = vpop.f32.mrb[0].mxu0
    %2285 = vmatprep.mubr.bf16.mxu0 0
    %2286 = vmatmul.mubr.bf16.gmra.mrb[0].mxu0 %v2148
    %v2287 = vpop.f32.mrb[0].mxu0
    %v2288 = vadd.f32 0.0, %v2287
    %v2289 = vpop.f32.mrb[0].mxu0
    %v2290 = vpop.f32.mrb[0].mxu0
    %v2291 = vadd.f32 0.0, %v2290
    %v2292 = vpop.f32.mrb[0].mxu0
    %2293 = vmatprep.mubr.bf16.mxu0 0
    %2294 = vmatmul.mubr.bf16.gmra.mrb[0].mxu0 %v2151
    %v2295 = vpop.f32.mrb[0].mxu0
    %v2296 = vadd.f32 0.0, %v2295
    %v2297 = vpop.f32.mrb[0].mxu0
    %v2298 = vpop.f32.mrb[0].mxu0
    %v2299 = vadd.f32 0.0, %v2298
    %v2300 = vpop.f32.mrb[0].mxu0
    %2301 = vmatprep.mubr.bf16.mxu0 0
    %2302 = vmatmul.mubr.bf16.gmra.mrb[0].mxu0 %v2154
    %v2303 = vpop.f32.mrb[0].mxu0
    %v2304 = vadd.f32 0.0, %v2303
    %v2305 = vpop.f32.mrb[0].mxu0
    %v2306 = vpop.f32.mrb[0].mxu0
    %v2307 = vadd.f32 0.0, %v2306
    %v2308 = vpop.f32.mrb[0].mxu0
    %2309 = vmatprep.mubr.bf16.mxu0 0
    %2310 = vmatmul.mubr.bf16.gmra.mrb[0].mxu0 %v2157
    %v2311 = vpop.f32.mrb[0].mxu0
    %v2312 = vadd.f32 0.0, %v2311
    %v2313 = vpop.f32.mrb[0].mxu0
    %v2314 = vpop.f32.mrb[0].mxu0
    %v2315 = vadd.f32 0.0, %v2314
    %v2316 = vpop.f32.mrb[0].mxu0
    %2317 = vmatprep.mubr.bf16.mxu0 0
    %2318 = vmatmul.mubr.bf16.gmra.mrb[0].mxu0 %v2160
    %v2319 = vpop.f32.mrb[0].mxu0
    %v2320 = vadd.f32 0.0, %v2319
    %v2321 = vpop.f32.mrb[0].mxu0
    %v2322 = vpop.f32.mrb[0].mxu0
    %v2323 = vadd.f32 0.0, %v2322
    %v2324 = vpop.f32.mrb[0].mxu0
    %2325 = vdwg.mxu0
    %v2326 = vadd.f32 %v1968, %v2200
    %v2327 = vadd.f32 %v1969, %v2203
    %v2328 = vadd.f32 %v1970, %v2208
    %v2329 = vadd.f32 %v1971, %v2211
    %v2330 = vadd.f32 %v1972, %v2216
    %v2331 = vadd.f32 %v1973, %v2219
    %v2332 = vadd.f32 %v1974, %v2224
    %v2333 = vadd.f32 %v1975, %v2227
    %v2334 = vadd.f32 %v1976, %v2232
    %v2335 = vadd.f32 %v1977, %v2235
    %v2336 = vadd.f32 %v1978, %v2240
    %v2337 = vadd.f32 %v1979, %v2243
    %v2338 = vadd.f32 %v1980, %v2248
    %v2339 = vadd.f32 %v1981, %v2251
    %v2340 = vadd.f32 %v1982, %v2256
    %v2341 = vadd.f32 %v1983, %v2259
    %v2342 = vadd.f32 %v1984, %v2264
    %v2343 = vadd.f32 %v1985, %v2267
    %v2344 = vadd.f32 %v1986, %v2272
    %v2345 = vadd.f32 %v1987, %v2275
    %v2346 = vadd.f32 %v1988, %v2280
    %v2347 = vadd.f32 %v1989, %v2283
    %v2348 = vadd.f32 %v1990, %v2288
    %v2349 = vadd.f32 %v1991, %v2291
    %v2350 = vadd.f32 %v1992, %v2296
    %v2351 = vadd.f32 %v1993, %v2299
    %v2352 = vadd.f32 %v1994, %v2304
    %v2353 = vadd.f32 %v1995, %v2307
    %v2354 = vadd.f32 %v1996, %v2312
    %v2355 = vadd.f32 %v1997, %v2315
    %v2356 = vadd.f32 %v1998, %v2320
    %v2357 = vadd.f32 %v1999, %v2323
    %v2358 = vld [vmem:[%s430] sm:$0xf]
    %v2359 = vld [vmem:[%s430 + $0x4] sm:$0xf]
    %v2360 = vld [vmem:[%s430 + $0x8] sm:$0x1]
    %v2361 = vld [vmem:[%s430 + $0xc] sm:$0xf]
    %v2362 = vld [vmem:[%s430 + $0x10] sm:$0xf]
    %v2363 = vld [vmem:[%s430 + $0x14] sm:$0x1]
    %v2364 = vld [vmem:[%s430 + $0x18] sm:$0xf]
    %v2365 = vld [vmem:[%s430 + $0x1c] sm:$0xf]
    %v2366 = vld [vmem:[%s430 + $0x20] sm:$0x1]
    %v2367 = vld [vmem:[%s430 + $0x24] sm:$0xf]
    %v2368 = vld [vmem:[%s430 + $0x28] sm:$0xf]
    %v2369 = vld [vmem:[%s430 + $0x2c] sm:$0x1]
    %v2370 = vld [vmem:[%s430 + $0x30] sm:$0xf]
    %v2371 = vld [vmem:[%s430 + $0x34] sm:$0xf]
    %v2372 = vld [vmem:[%s430 + $0x38] sm:$0x1]
    %v2373 = vld [vmem:[%s430 + $0x3c] sm:$0xf]
    %v2374 = vld [vmem:[%s430 + $0x40] sm:$0xf]
    %v2375 = vld [vmem:[%s430 + $0x44] sm:$0x1]
    %v2376 = vld [vmem:[%s430 + $0x48] sm:$0xf]
    %v2377 = vld [vmem:[%s430 + $0x4c] sm:$0xf]
    %v2378 = vld [vmem:[%s430 + $0x50] sm:$0x1]
    %v2379 = vld [vmem:[%s430 + $0x54] sm:$0xf]
    %v2380 = vld [vmem:[%s430 + $0x58] sm:$0xf]
    %v2381 = vld [vmem:[%s430 + $0x5c] sm:$0x1]
    %v2382 = vld [vmem:[%s430 + $0x60] sm:$0xf]
    %v2383 = vld [vmem:[%s430 + $0x64] sm:$0xf]
    %v2384 = vld [vmem:[%s430 + $0x68] sm:$0x1]
    %v2385 = vld [vmem:[%s430 + $0x6c] sm:$0xf]
    %v2386 = vld [vmem:[%s430 + $0x70] sm:$0xf]
    %v2387 = vld [vmem:[%s430 + $0x74] sm:$0x1]
    %v2388 = vld [vmem:[%s430 + $0x78] sm:$0xf]
    %v2389 = vld [vmem:[%s430 + $0x7c] sm:$0xf]
    %v2390 = vld [vmem:[%s430 + $0x80] sm:$0x1]
    %v2391 = vld [vmem:[%s430 + $0x84] sm:$0xf]
    %v2392 = vld [vmem:[%s430 + $0x88] sm:$0xf]
    %v2393 = vld [vmem:[%s430 + $0x8c] sm:$0x1]
    %v2394 = vld [vmem:[%s430 + $0x90] sm:$0xf]
    %v2395 = vld [vmem:[%s430 + $0x94] sm:$0xf]
    %v2396 = vld [vmem:[%s430 + $0x98] sm:$0x1]
    %v2397 = vld [vmem:[%s430 + $0x9c] sm:$0xf]
    %v2398 = vld [vmem:[%s430 + $0xa0] sm:$0xf]
    %v2399 = vld [vmem:[%s430 + $0xa4] sm:$0x1]
    %v2400 = vld [vmem:[%s430 + $0xa8] sm:$0xf]
    %v2401 = vld [vmem:[%s430 + $0xac] sm:$0xf]
    %v2402 = vld [vmem:[%s430 + $0xb0] sm:$0x1]
    %v2403 = vld [vmem:[%s430 + $0xb4] sm:$0xf]
    %v2404 = vld [vmem:[%s430 + $0xb8] sm:$0xf]
    %v2405 = vld [vmem:[%s430 + $0xbc] sm:$0x1]
    %v2407 = vshrl.u32 %v2358, 16
    %v2409 = vrot.slane %v2407, 4
    %v2410 = vshll.u32 %v2358, 16
    %v2412 = vrot.slane %v2410, 5
    %v2413 = vor.u32 %v2409, %v2412
    %v2414 = vrot.slane %v2413, 4
    %v2416 = vshll.u32 %v2359, 16
    %v2418 = vrot.slane %v2416, 5
    %v2419 = vsel %vm599, %v2414, %v2418
    %v2420 = vshrl.u32 %v2359, 16
    %v2422 = vrot.slane %v2420, 4
    %v2423 = vor.u32 %v2422, %v2418
    %v2424 = vrot.slane %v2423, 4
    %v2426 = vshll.u32 %v2360, 16
    %v2428 = vrot.slane %v2426, 5
    %v2429 = vsel %vm599, %v2424, %v2428
    %v2431 = vshrl.u32 %v2361, 16
    %v2433 = vrot.slane %v2431, 4
    %v2434 = vshll.u32 %v2361, 16
    %v2436 = vrot.slane %v2434, 5
    %v2437 = vor.u32 %v2433, %v2436
    %v2438 = vrot.slane %v2437, 4
    %v2440 = vshll.u32 %v2362, 16
    %v2442 = vrot.slane %v2440, 5
    %v2443 = vsel %vm599, %v2438, %v2442
    %v2444 = vshrl.u32 %v2362, 16
    %v2446 = vrot.slane %v2444, 4
    %v2447 = vor.u32 %v2446, %v2442
    %v2448 = vrot.slane %v2447, 4
    %v2450 = vshll.u32 %v2363, 16
    %v2452 = vrot.slane %v2450, 5
    %v2453 = vsel %vm599, %v2448, %v2452
    %v2455 = vshrl.u32 %v2364, 16
    %v2457 = vrot.slane %v2455, 4
    %v2458 = vshll.u32 %v2364, 16
    %v2460 = vrot.slane %v2458, 5
    %v2461 = vor.u32 %v2457, %v2460
    %v2462 = vrot.slane %v2461, 4
    %v2464 = vshll.u32 %v2365, 16
    %v2466 = vrot.slane %v2464, 5
    %v2467 = vsel %vm599, %v2462, %v2466
    %v2468 = vshrl.u32 %v2365, 16
    %v2470 = vrot.slane %v2468, 4
    %v2471 = vor.u32 %v2470, %v2466
    %v2472 = vrot.slane %v2471, 4
    %v2474 = vshll.u32 %v2366, 16
    %v2476 = vrot.slane %v2474, 5
    %v2477 = vsel %vm599, %v2472, %v2476
    %v2479 = vshrl.u32 %v2367, 16
    %v2481 = vrot.slane %v2479, 4
    %v2482 = vshll.u32 %v2367, 16
    %v2484 = vrot.slane %v2482, 5
    %v2485 = vor.u32 %v2481, %v2484
    %v2486 = vrot.slane %v2485, 4
    %v2488 = vshll.u32 %v2368, 16
    %v2490 = vrot.slane %v2488, 5
    %v2491 = vsel %vm599, %v2486, %v2490
    %v2492 = vshrl.u32 %v2368, 16
    %v2494 = vrot.slane %v2492, 4
    %v2495 = vor.u32 %v2494, %v2490
    %v2496 = vrot.slane %v2495, 4
    %v2498 = vshll.u32 %v2369, 16
    %v2500 = vrot.slane %v2498, 5
    %v2501 = vsel %vm599, %v2496, %v2500
    %v2503 = vshrl.u32 %v2370, 16
    %v2505 = vrot.slane %v2503, 4
    %v2506 = vshll.u32 %v2370, 16
    %v2508 = vrot.slane %v2506, 5
    %v2509 = vor.u32 %v2505, %v2508
    %v2510 = vrot.slane %v2509, 4
    %v2512 = vshll.u32 %v2371, 16
    %v2514 = vrot.slane %v2512, 5
    %v2515 = vsel %vm599, %v2510, %v2514
    %v2516 = vshrl.u32 %v2371, 16
    %v2518 = vrot.slane %v2516, 4
    %v2519 = vor.u32 %v2518, %v2514
    %v2520 = vrot.slane %v2519, 4
    %v2522 = vshll.u32 %v2372, 16
    %v2524 = vrot.slane %v2522, 5
    %v2525 = vsel %vm599, %v2520, %v2524
    %v2527 = vshrl.u32 %v2373, 16
    %v2529 = vrot.slane %v2527, 4
    %v2530 = vshll.u32 %v2373, 16
    %v2532 = vrot.slane %v2530, 5
    %v2533 = vor.u32 %v2529, %v2532
    %v2534 = vrot.slane %v2533, 4
    %v2536 = vshll.u32 %v2374, 16
    %v2538 = vrot.slane %v2536, 5
    %v2539 = vsel %vm599, %v2534, %v2538
    %v2540 = vshrl.u32 %v2374, 16
    %v2542 = vrot.slane %v2540, 4
    %v2543 = vor.u32 %v2542, %v2538
    %v2544 = vrot.slane %v2543, 4
    %v2546 = vshll.u32 %v2375, 16
    %v2548 = vrot.slane %v2546, 5
    %v2549 = vsel %vm599, %v2544, %v2548
    %v2551 = vshrl.u32 %v2376, 16
    %v2553 = vrot.slane %v2551, 4
    %v2554 = vshll.u32 %v2376, 16
    %v2556 = vrot.slane %v2554, 5
    %v2557 = vor.u32 %v2553, %v2556
    %v2558 = vrot.slane %v2557, 4
    %v2560 = vshll.u32 %v2377, 16
    %v2562 = vrot.slane %v2560, 5
    %v2563 = vsel %vm599, %v2558, %v2562
    %v2564 = vshrl.u32 %v2377, 16
    %v2566 = vrot.slane %v2564, 4
    %v2567 = vor.u32 %v2566, %v2562
    %v2568 = vrot.slane %v2567, 4
    %v2570 = vshll.u32 %v2378, 16
    %v2572 = vrot.slane %v2570, 5
    %v2573 = vsel %vm599, %v2568, %v2572
    %v2575 = vshrl.u32 %v2379, 16
    %v2577 = vrot.slane %v2575, 4
    %v2578 = vshll.u32 %v2379, 16
    %v2580 = vrot.slane %v2578, 5
    %v2581 = vor.u32 %v2577, %v2580
    %v2582 = vrot.slane %v2581, 4
    %v2584 = vshll.u32 %v2380, 16
    %v2586 = vrot.slane %v2584, 5
    %v2587 = vsel %vm599, %v2582, %v2586
    %v2588 = vshrl.u32 %v2380, 16
    %v2590 = vrot.slane %v2588, 4
    %v2591 = vor.u32 %v2590, %v2586
    %v2592 = vrot.slane %v2591, 4
    %v2594 = vshll.u32 %v2381, 16
    %v2596 = vrot.slane %v2594, 5
    %v2597 = vsel %vm599, %v2592, %v2596
    %v2599 = vshrl.u32 %v2382, 16
    %v2601 = vrot.slane %v2599, 4
    %v2602 = vshll.u32 %v2382, 16
    %v2604 = vrot.slane %v2602, 5
    %v2605 = vor.u32 %v2601, %v2604
    %v2606 = vrot.slane %v2605, 4
    %v2608 = vshll.u32 %v2383, 16
    %v2610 = vrot.slane %v2608, 5
    %v2611 = vsel %vm599, %v2606, %v2610
    %v2612 = vshrl.u32 %v2383, 16
    %v2614 = vrot.slane %v2612, 4
    %v2615 = vor.u32 %v2614, %v2610
    %v2616 = vrot.slane %v2615, 4
    %v2618 = vshll.u32 %v2384, 16
    %v2620 = vrot.slane %v2618, 5
    %v2621 = vsel %vm599, %v2616, %v2620
    %v2623 = vshrl.u32 %v2385, 16
    %v2625 = vrot.slane %v2623, 4
    %v2626 = vshll.u32 %v2385, 16
    %v2628 = vrot.slane %v2626, 5
    %v2629 = vor.u32 %v2625, %v2628
    %v2630 = vrot.slane %v2629, 4
    %v2632 = vshll.u32 %v2386, 16
    %v2634 = vrot.slane %v2632, 5
    %v2635 = vsel %vm599, %v2630, %v2634
    %v2636 = vshrl.u32 %v2386, 16
    %v2638 = vrot.slane %v2636, 4
    %v2639 = vor.u32 %v2638, %v2634
    %v2640 = vrot.slane %v2639, 4
    %v2642 = vshll.u32 %v2387, 16
    %v2644 = vrot.slane %v2642, 5
    %v2645 = vsel %vm599, %v2640, %v2644
    %v2647 = vshrl.u32 %v2388, 16
    %v2649 = vrot.slane %v2647, 4
    %v2650 = vshll.u32 %v2388, 16
    %v2652 = vrot.slane %v2650, 5
    %v2653 = vor.u32 %v2649, %v2652
    %v2654 = vrot.slane %v2653, 4
    %v2656 = vshll.u32 %v2389, 16
    %v2658 = vrot.slane %v2656, 5
    %v2659 = vsel %vm599, %v2654, %v2658
    %v2660 = vshrl.u32 %v2389, 16
    %v2662 = vrot.slane %v2660, 4
    %v2663 = vor.u32 %v2662, %v2658
    %v2664 = vrot.slane %v2663, 4
    %v2666 = vshll.u32 %v2390, 16
    %v2668 = vrot.slane %v2666, 5
    %v2669 = vsel %vm599, %v2664, %v2668
    %v2671 = vshrl.u32 %v2391, 16
    %v2673 = vrot.slane %v2671, 4
    %v2674 = vshll.u32 %v2391, 16
    %v2676 = vrot.slane %v2674, 5
    %v2677 = vor.u32 %v2673, %v2676
    %v2678 = vrot.slane %v2677, 4
    %v2680 = vshll.u32 %v2392, 16
    %v2682 = vrot.slane %v2680, 5
    %v2683 = vsel %vm599, %v2678, %v2682
    %v2684 = vshrl.u32 %v2392, 16
    %v2686 = vrot.slane %v2684, 4
    %v2687 = vor.u32 %v2686, %v2682
    %v2688 = vrot.slane %v2687, 4
    %v2690 = vshll.u32 %v2393, 16
    %v2692 = vrot.slane %v2690, 5
    %v2693 = vsel %vm599, %v2688, %v2692
    %v2695 = vshrl.u32 %v2394, 16
    %v2697 = vrot.slane %v2695, 4
    %v2698 = vshll.u32 %v2394, 16
    %v2700 = vrot.slane %v2698, 5
    %v2701 = vor.u32 %v2697, %v2700
    %v2702 = vrot.slane %v2701, 4
    %v2704 = vshll.u32 %v2395, 16
    %v2706 = vrot.slane %v2704, 5
    %v2707 = vsel %vm599, %v2702, %v2706
    %v2708 = vshrl.u32 %v2395, 16
    %v2710 = vrot.slane %v2708, 4
    %v2711 = vor.u32 %v2710, %v2706
    %v2712 = vrot.slane %v2711, 4
    %v2714 = vshll.u32 %v2396, 16
    %v2716 = vrot.slane %v2714, 5
    %v2717 = vsel %vm599, %v2712, %v2716
    %v2719 = vshrl.u32 %v2397, 16
    %v2721 = vrot.slane %v2719, 4
    %v2722 = vshll.u32 %v2397, 16
    %v2724 = vrot.slane %v2722, 5
    %v2725 = vor.u32 %v2721, %v2724
    %v2726 = vrot.slane %v2725, 4
    %v2728 = vshll.u32 %v2398, 16
    %v2730 = vrot.slane %v2728, 5
    %v2731 = vsel %vm599, %v2726, %v2730
    %v2732 = vshrl.u32 %v2398, 16
    %v2734 = vrot.slane %v2732, 4
    %v2735 = vor.u32 %v2734, %v2730
    %v2736 = vrot.slane %v2735, 4
    %v2738 = vshll.u32 %v2399, 16
    %v2740 = vrot.slane %v2738, 5
    %v2741 = vsel %vm599, %v2736, %v2740
    %v2743 = vshrl.u32 %v2400, 16
    %v2745 = vrot.slane %v2743, 4
    %v2746 = vshll.u32 %v2400, 16
    %v2748 = vrot.slane %v2746, 5
    %v2749 = vor.u32 %v2745, %v2748
    %v2750 = vrot.slane %v2749, 4
    %v2752 = vshll.u32 %v2401, 16
    %v2754 = vrot.slane %v2752, 5
    %v2755 = vsel %vm599, %v2750, %v2754
    %v2756 = vshrl.u32 %v2401, 16
    %v2758 = vrot.slane %v2756, 4
    %v2759 = vor.u32 %v2758, %v2754
    %v2760 = vrot.slane %v2759, 4
    %v2762 = vshll.u32 %v2402, 16
    %v2764 = vrot.slane %v2762, 5
    %v2765 = vsel %vm599, %v2760, %v2764
    %v2767 = vshrl.u32 %v2403, 16
    %v2769 = vrot.slane %v2767, 4
    %v2770 = vshll.u32 %v2403, 16
    %v2772 = vrot.slane %v2770, 5
    %v2773 = vor.u32 %v2769, %v2772
    %v2774 = vrot.slane %v2773, 4
    %v2776 = vshll.u32 %v2404, 16
    %v2778 = vrot.slane %v2776, 5
    %v2779 = vsel %vm599, %v2774, %v2778
    %v2780 = vshrl.u32 %v2404, 16
    %v2782 = vrot.slane %v2780, 4
    %v2783 = vor.u32 %v2782, %v2778
    %v2784 = vrot.slane %v2783, 4
    %v2786 = vshll.u32 %v2405, 16
    %v2788 = vrot.slane %v2786, 5
    %v2789 = vsel %vm599, %v2784, %v2788
    %s2790 = scalar_lea.vmem %s1, 8
    %v2791 = vld [vmem:[%s2790] sm:$0x3]
    %v2792 = vunpack.c.l.b16 %v2419
    %v2793 = vunpack.c.l.b16 %v2429
    %v2794 = vunpack.c.l.b16 %v2443
    %v2795 = vunpack.c.l.b16 %v2453
    %v2796 = vunpack.c.l.b16 %v2467
    %v2797 = vunpack.c.l.b16 %v2477
    %v2798 = vunpack.c.l.b16 %v2491
    %v2799 = vunpack.c.l.b16 %v2501
    %v2800 = vunpack.c.l.b16 %v2515
    %v2801 = vunpack.c.l.b16 %v2525
    %v2802 = vunpack.c.l.b16 %v2539
    %v2803 = vunpack.c.l.b16 %v2549
    %v2804 = vunpack.c.l.b16 %v2563
    %v2805 = vunpack.c.l.b16 %v2573
    %v2806 = vunpack.c.l.b16 %v2587
    %v2807 = vunpack.c.l.b16 %v2597
    %v2808 = vunpack.c.l.b16 %v2611
    %v2809 = vunpack.c.l.b16 %v2621
    %v2810 = vunpack.c.l.b16 %v2635
    %v2811 = vunpack.c.l.b16 %v2645
    %v2812 = vunpack.c.l.b16 %v2659
    %v2813 = vunpack.c.l.b16 %v2669
    %v2814 = vunpack.c.l.b16 %v2683
    %v2815 = vunpack.c.l.b16 %v2693
    %v2816 = vunpack.c.l.b16 %v2707
    %v2817 = vunpack.c.l.b16 %v2717
    %v2818 = vunpack.c.l.b16 %v2731
    %v2819 = vunpack.c.l.b16 %v2741
    %v2820 = vunpack.c.l.b16 %v2755
    %v2821 = vunpack.c.l.b16 %v2765
    %v2822 = vunpack.c.l.b16 %v2779
    %v2823 = vunpack.c.l.b16 %v2789
    %v2824 = vpack.c.b16 %v2793, %v2792
    %v2825 = vpack.c.b16 %v2795, %v2794
    %v2826 = vpack.c.b16 %v2797, %v2796
    %v2827 = vpack.c.b16 %v2799, %v2798
    %v2828 = vpack.c.b16 %v2801, %v2800
    %v2829 = vpack.c.b16 %v2803, %v2802
    %v2830 = vpack.c.b16 %v2805, %v2804
    %v2831 = vpack.c.b16 %v2807, %v2806
    %v2832 = vpack.c.b16 %v2809, %v2808
    %v2833 = vpack.c.b16 %v2811, %v2810
    %v2834 = vpack.c.b16 %v2813, %v2812
    %v2835 = vpack.c.b16 %v2815, %v2814
    %v2836 = vpack.c.b16 %v2817, %v2816
    %v2837 = vpack.c.b16 %v2819, %v2818
    %v2838 = vpack.c.b16 %v2821, %v2820
    %v2839 = vpack.c.b16 %v2823, %v2822
    %v2841 = vsel %vm1034, %v2824, 0
    %v2844 = vsel %vm1034, %v2825, 0
    %v2847 = vsel %vm1034, %v2826, 0
    %v2850 = vsel %vm1034, %v2827, 0
    %v2853 = vsel %vm1034, %v2828, 0
    %v2856 = vsel %vm1034, %v2829, 0
    %v2859 = vsel %vm1034, %v2830, 0
    %v2862 = vsel %vm1034, %v2831, 0
    %v2865 = vsel %vm1034, %v2832, 0
    %v2868 = vsel %vm1034, %v2833, 0
    %v2871 = vsel %vm1034, %v2834, 0
    %v2874 = vsel %vm1034, %v2835, 0
    %v2877 = vsel %vm1034, %v2836, 0
    %v2880 = vsel %vm1034, %v2837, 0
    %v2883 = vsel %vm1034, %v2838, 0
    %v2886 = vsel %vm1034, %v2839, 0
    %v2889 = vand.u32 %v2791, %v1086
    %2891 = vmatprep.subr.bf16.mxu0 0
    %2892 = vmatpush1.bf16.msra.mxu0 %v2889
    %2893 = vmatprep.subr.bf16.mxu0 0
    %2894 = vmatpush1.bf16.msra.mxu0 0
    %2895 = vmatprep.subr.bf16.mxu0 0
    %2896 = vmatpush1.bf16.msra.mxu0 0
    %2897 = vmatprep.subr.bf16.mxu0 0
    %2898 = vmatpush1.bf16.msra.mxu0 0
    %2899 = vmatprep.subr.bf16.mxu0 0
    %2900 = vmatpush1.bf16.msra.mxu0 0
    %2901 = vmatprep.subr.bf16.mxu0 0
    %2902 = vmatpush1.bf16.msra.mxu0 0
    %2903 = vmatprep.subr.bf16.mxu0 0
    %2904 = vmatpush1.bf16.msra.mxu0 0
    %2905 = vmatprep.subr.bf16.mxu0 0
    %2906 = vmatpush1.bf16.msra.mxu0 0
    %2907 = vmatprep.subr.bf16.mxu0 0
    %2908 = vmatpush1.bf16.msra.mxu0 0
    %2909 = vmatprep.subr.bf16.mxu0 0
    %2910 = vmatpush1.bf16.msra.mxu0 0
    %2911 = vmatprep.subr.bf16.mxu0 0
    %2912 = vmatpush1.bf16.msra.mxu0 0
    %2913 = vmatprep.subr.bf16.mxu0 0
    %2914 = vmatpush1.bf16.msra.mxu0 0
    %2915 = vmatprep.subr.bf16.mxu0 0
    %2916 = vmatpush1.bf16.msra.mxu0 0
    %2917 = vmatprep.subr.bf16.mxu0 0
    %2918 = vmatpush1.bf16.msra.mxu0 0
    %2919 = vmatprep.subr.bf16.mxu0 0
    %2920 = vmatpush1.bf16.msra.mxu0 0
    %2921 = vmatprep.subr.bf16.mxu0 0
    %2922 = vmatpush1.bf16.msra.mxu0 0
    %2923 = vmatprep.mubr.bf16.mxu0 0
    %2924 = vmatmul.mubr.bf16.gmra.mrb[0].mxu0 %v2841
    %v2925 = vpop.f32.mrb[0].mxu0
    %v2926 = vadd.f32 0.0, %v2925
    %v2927 = vpop.f32.mrb[0].mxu0
    %v2928 = vpop.f32.mrb[0].mxu0
    %v2929 = vadd.f32 0.0, %v2928
    %v2930 = vpop.f32.mrb[0].mxu0
    %2931 = vmatprep.mubr.bf16.mxu0 0
    %2932 = vmatmul.mubr.bf16.gmra.mrb[0].mxu0 %v2844
    %v2933 = vpop.f32.mrb[0].mxu0
    %v2934 = vadd.f32 0.0, %v2933
    %v2935 = vpop.f32.mrb[0].mxu0
    %v2936 = vpop.f32.mrb[0].mxu0
    %v2937 = vadd.f32 0.0, %v2936
    %v2938 = vpop.f32.mrb[0].mxu0
    %2939 = vmatprep.mubr.bf16.mxu0 0
    %2940 = vmatmul.mubr.bf16.gmra.mrb[0].mxu0 %v2847
    %v2941 = vpop.f32.mrb[0].mxu0
    %v2942 = vadd.f32 0.0, %v2941
    %v2943 = vpop.f32.mrb[0].mxu0
    %v2944 = vpop.f32.mrb[0].mxu0
    %v2945 = vadd.f32 0.0, %v2944
    %v2946 = vpop.f32.mrb[0].mxu0
    %2947 = vmatprep.mubr.bf16.mxu0 0
    %2948 = vmatmul.mubr.bf16.gmra.mrb[0].mxu0 %v2850
    %v2949 = vpop.f32.mrb[0].mxu0
    %v2950 = vadd.f32 0.0, %v2949
    %v2951 = vpop.f32.mrb[0].mxu0
    %v2952 = vpop.f32.mrb[0].mxu0
    %v2953 = vadd.f32 0.0, %v2952
    %v2954 = vpop.f32.mrb[0].mxu0
    %2955 = vmatprep.mubr.bf16.mxu0 0
    %2956 = vmatmul.mubr.bf16.gmra.mrb[0].mxu0 %v2853
    %v2957 = vpop.f32.mrb[0].mxu0
    %v2958 = vadd.f32 0.0, %v2957
    %v2959 = vpop.f32.mrb[0].mxu0
    %v2960 = vpop.f32.mrb[0].mxu0
    %v2961 = vadd.f32 0.0, %v2960
    %v2962 = vpop.f32.mrb[0].mxu0
    %2963 = vmatprep.mubr.bf16.mxu0 0
    %2964 = vmatmul.mubr.bf16.gmra.mrb[0].mxu0 %v2856
    %v2965 = vpop.f32.mrb[0].mxu0
    %v2966 = vadd.f32 0.0, %v2965
    %v2967 = vpop.f32.mrb[0].mxu0
    %v2968 = vpop.f32.mrb[0].mxu0
    %v2969 = vadd.f32 0.0, %v2968
    %v2970 = vpop.f32.mrb[0].mxu0
    %2971 = vmatprep.mubr.bf16.mxu0 0
    %2972 = vmatmul.mubr.bf16.gmra.mrb[0].mxu0 %v2859
    %v2973 = vpop.f32.mrb[0].mxu0
    %v2974 = vadd.f32 0.0, %v2973
    %v2975 = vpop.f32.mrb[0].mxu0
    %v2976 = vpop.f32.mrb[0].mxu0
    %v2977 = vadd.f32 0.0, %v2976
    %v2978 = vpop.f32.mrb[0].mxu0
    %2979 = vmatprep.mubr.bf16.mxu0 0
    %2980 = vmatmul.mubr.bf16.gmra.mrb[0].mxu0 %v2862
    %v2981 = vpop.f32.mrb[0].mxu0
    %v2982 = vadd.f32 0.0, %v2981
    %v2983 = vpop.f32.mrb[0].mxu0
    %v2984 = vpop.f32.mrb[0].mxu0
    %v2985 = vadd.f32 0.0, %v2984
    %v2986 = vpop.f32.mrb[0].mxu0
    %2987 = vmatprep.mubr.bf16.mxu0 0
    %2988 = vmatmul.mubr.bf16.gmra.mrb[0].mxu0 %v2865
    %v2989 = vpop.f32.mrb[0].mxu0
    %v2990 = vadd.f32 0.0, %v2989
    %v2991 = vpop.f32.mrb[0].mxu0
    %v2992 = vpop.f32.mrb[0].mxu0
    %v2993 = vadd.f32 0.0, %v2992
    %v2994 = vpop.f32.mrb[0].mxu0
    %2995 = vmatprep.mubr.bf16.mxu0 0
    %2996 = vmatmul.mubr.bf16.gmra.mrb[0].mxu0 %v2868
    %v2997 = vpop.f32.mrb[0].mxu0
    %v2998 = vadd.f32 0.0, %v2997
    %v2999 = vpop.f32.mrb[0].mxu0
    %v3000 = vpop.f32.mrb[0].mxu0
    %v3001 = vadd.f32 0.0, %v3000
    %v3002 = vpop.f32.mrb[0].mxu0
    %3003 = vmatprep.mubr.bf16.mxu0 0
    %3004 = vmatmul.mubr.bf16.gmra.mrb[0].mxu0 %v2871
    %v3005 = vpop.f32.mrb[0].mxu0
    %v3006 = vadd.f32 0.0, %v3005
    %v3007 = vpop.f32.mrb[0].mxu0
    %v3008 = vpop.f32.mrb[0].mxu0
    %v3009 = vadd.f32 0.0, %v3008
    %v3010 = vpop.f32.mrb[0].mxu0
    %3011 = vmatprep.mubr.bf16.mxu0 0
    %3012 = vmatmul.mubr.bf16.gmra.mrb[0].mxu0 %v2874
    %v3013 = vpop.f32.mrb[0].mxu0
    %v3014 = vadd.f32 0.0, %v3013
    %v3015 = vpop.f32.mrb[0].mxu0
    %v3016 = vpop.f32.mrb[0].mxu0
    %v3017 = vadd.f32 0.0, %v3016
    %v3018 = vpop.f32.mrb[0].mxu0
    %3019 = vmatprep.mubr.bf16.mxu0 0
    %3020 = vmatmul.mubr.bf16.gmra.mrb[0].mxu0 %v2877
    %v3021 = vpop.f32.mrb[0].mxu0
    %v3022 = vadd.f32 0.0, %v3021
    %v3023 = vpop.f32.mrb[0].mxu0
    %v3024 = vpop.f32.mrb[0].mxu0
    %v3025 = vadd.f32 0.0, %v3024
    %v3026 = vpop.f32.mrb[0].mxu0
    %3027 = vmatprep.mubr.bf16.mxu0 0
    %3028 = vmatmul.mubr.bf16.gmra.mrb[0].mxu0 %v2880
    %v3029 = vpop.f32.mrb[0].mxu0
    %v3030 = vadd.f32 0.0, %v3029
    %v3031 = vpop.f32.mrb[0].mxu0
    %v3032 = vpop.f32.mrb[0].mxu0
    %v3033 = vadd.f32 0.0, %v3032
    %v3034 = vpop.f32.mrb[0].mxu0
    %3035 = vmatprep.mubr.bf16.mxu0 0
    %3036 = vmatmul.mubr.bf16.gmra.mrb[0].mxu0 %v2883
    %v3037 = vpop.f32.mrb[0].mxu0
    %v3038 = vadd.f32 0.0, %v3037
    %v3039 = vpop.f32.mrb[0].mxu0
    %v3040 = vpop.f32.mrb[0].mxu0
    %v3041 = vadd.f32 0.0, %v3040
    %v3042 = vpop.f32.mrb[0].mxu0
    %3043 = vmatprep.mubr.bf16.mxu0 0
    %3044 = vmatmul.mubr.bf16.gmra.mrb[0].mxu0 %v2886
    %v3045 = vpop.f32.mrb[0].mxu0
    %v3046 = vadd.f32 0.0, %v3045
    %v3047 = vpop.f32.mrb[0].mxu0
    %v3048 = vpop.f32.mrb[0].mxu0
    %v3049 = vadd.f32 0.0, %v3048
    %v3050 = vpop.f32.mrb[0].mxu0
    %3051 = vdwg.mxu0
    %v3052 = vadd.f32 %v2326, %v2926
    %v3053 = vadd.f32 %v2327, %v2929
    %v3054 = vadd.f32 %v2328, %v2934
    %v3055 = vadd.f32 %v2329, %v2937
    %v3056 = vadd.f32 %v2330, %v2942
    %v3057 = vadd.f32 %v2331, %v2945
    %v3058 = vadd.f32 %v2332, %v2950
    %v3059 = vadd.f32 %v2333, %v2953
    %v3060 = vadd.f32 %v2334, %v2958
    %v3061 = vadd.f32 %v2335, %v2961
    %v3062 = vadd.f32 %v2336, %v2966
    %v3063 = vadd.f32 %v2337, %v2969
    %v3064 = vadd.f32 %v2338, %v2974
    %v3065 = vadd.f32 %v2339, %v2977
    %v3066 = vadd.f32 %v2340, %v2982
    %v3067 = vadd.f32 %v2341, %v2985
    %v3068 = vadd.f32 %v2342, %v2990
    %v3069 = vadd.f32 %v2343, %v2993
    %v3070 = vadd.f32 %v2344, %v2998
    %v3071 = vadd.f32 %v2345, %v3001
    %v3072 = vadd.f32 %v2346, %v3006
    %v3073 = vadd.f32 %v2347, %v3009
    %v3074 = vadd.f32 %v2348, %v3014
    %v3075 = vadd.f32 %v2349, %v3017
    %v3076 = vadd.f32 %v2350, %v3022
    %v3077 = vadd.f32 %v2351, %v3025
    %v3078 = vadd.f32 %v2352, %v3030
    %v3079 = vadd.f32 %v2353, %v3033
    %v3080 = vadd.f32 %v2354, %v3038
    %v3081 = vadd.f32 %v2355, %v3041
    %v3082 = vadd.f32 %v2356, %v3046
    %v3083 = vadd.f32 %v2357, %v3049
    %v3084 = vld [vmem:[%s430] sm:$0xe]
    %v3085 = vld [vmem:[%s430 + $0xc] sm:$0xe]
    %v3086 = vld [vmem:[%s430 + $0x18] sm:$0xe]
    %v3087 = vld [vmem:[%s430 + $0x24] sm:$0xe]
    %v3088 = vld [vmem:[%s430 + $0x30] sm:$0xe]
    %v3089 = vld [vmem:[%s430 + $0x3c] sm:$0xe]
    %v3090 = vld [vmem:[%s430 + $0x48] sm:$0xe]
    %v3091 = vld [vmem:[%s430 + $0x54] sm:$0xe]
    %v3092 = vld [vmem:[%s430 + $0x60] sm:$0xe]
    %v3093 = vld [vmem:[%s430 + $0x6c] sm:$0xe]
    %v3094 = vld [vmem:[%s430 + $0x78] sm:$0xe]
    %v3095 = vld [vmem:[%s430 + $0x84] sm:$0xe]
    %v3096 = vld [vmem:[%s430 + $0x90] sm:$0xe]
    %v3097 = vld [vmem:[%s430 + $0x9c] sm:$0xe]
    %v3098 = vld [vmem:[%s430 + $0xa8] sm:$0xe]
    %v3099 = vld [vmem:[%s430 + $0xb4] sm:$0xe]
    %v3148 = vrot.slane %v3084, 5
    %v3149 = vrot.slane %v3148, 4
    %v3150 = vrot.slane %v2359, 5
    %v3151 = vsel %vm1593, %v3149, %v3150
    %v3152 = vrot.slane %v3150, 4
    %v3153 = vrot.slane %v2360, 5
    %v3154 = vsel %vm1593, %v3152, %v3153
    %v3155 = vrot.slane %v3085, 5
    %v3156 = vrot.slane %v3155, 4
    %v3157 = vrot.slane %v2362, 5
    %v3158 = vsel %vm1593, %v3156, %v3157
    %v3159 = vrot.slane %v3157, 4
    %v3160 = vrot.slane %v2363, 5
    %v3161 = vsel %vm1593, %v3159, %v3160
    %v3162 = vrot.slane %v3086, 5
    %v3163 = vrot.slane %v3162, 4
    %v3164 = vrot.slane %v2365, 5
    %v3165 = vsel %vm1593, %v3163, %v3164
    %v3166 = vrot.slane %v3164, 4
    %v3167 = vrot.slane %v2366, 5
    %v3168 = vsel %vm1593, %v3166, %v3167
    %v3169 = vrot.slane %v3087, 5
    %v3170 = vrot.slane %v3169, 4
    %v3171 = vrot.slane %v2368, 5
    %v3172 = vsel %vm1593, %v3170, %v3171
    %v3173 = vrot.slane %v3171, 4
    %v3174 = vrot.slane %v2369, 5
    %v3175 = vsel %vm1593, %v3173, %v3174
    %v3176 = vrot.slane %v3088, 5
    %v3177 = vrot.slane %v3176, 4
    %v3178 = vrot.slane %v2371, 5
    %v3179 = vsel %vm1593, %v3177, %v3178
    %v3180 = vrot.slane %v3178, 4
    %v3181 = vrot.slane %v2372, 5
    %v3182 = vsel %vm1593, %v3180, %v3181
    %v3183 = vrot.slane %v3089, 5
    %v3184 = vrot.slane %v3183, 4
    %v3185 = vrot.slane %v2374, 5
    %v3186 = vsel %vm1593, %v3184, %v3185
    %v3187 = vrot.slane %v3185, 4
    %v3188 = vrot.slane %v2375, 5
    %v3189 = vsel %vm1593, %v3187, %v3188
    %v3190 = vrot.slane %v3090, 5
    %v3191 = vrot.slane %v3190, 4
    %v3192 = vrot.slane %v2377, 5
    %v3193 = vsel %vm1593, %v3191, %v3192
    %v3194 = vrot.slane %v3192, 4
    %v3195 = vrot.slane %v2378, 5
    %v3196 = vsel %vm1593, %v3194, %v3195
    %v3197 = vrot.slane %v3091, 5
    %v3198 = vrot.slane %v3197, 4
    %v3199 = vrot.slane %v2380, 5
    %v3200 = vsel %vm1593, %v3198, %v3199
    %v3201 = vrot.slane %v3199, 4
    %v3202 = vrot.slane %v2381, 5
    %v3203 = vsel %vm1593, %v3201, %v3202
    %v3204 = vrot.slane %v3092, 5
    %v3205 = vrot.slane %v3204, 4
    %v3206 = vrot.slane %v2383, 5
    %v3207 = vsel %vm1593, %v3205, %v3206
    %v3208 = vrot.slane %v3206, 4
    %v3209 = vrot.slane %v2384, 5
    %v3210 = vsel %vm1593, %v3208, %v3209
    %v3211 = vrot.slane %v3093, 5
    %v3212 = vrot.slane %v3211, 4
    %v3213 = vrot.slane %v2386, 5
    %v3214 = vsel %vm1593, %v3212, %v3213
    %v3215 = vrot.slane %v3213, 4
    %v3216 = vrot.slane %v2387, 5
    %v3217 = vsel %vm1593, %v3215, %v3216
    %v3218 = vrot.slane %v3094, 5
    %v3219 = vrot.slane %v3218, 4
    %v3220 = vrot.slane %v2389, 5
    %v3221 = vsel %vm1593, %v3219, %v3220
    %v3222 = vrot.slane %v3220, 4
    %v3223 = vrot.slane %v2390, 5
    %v3224 = vsel %vm1593, %v3222, %v3223
    %v3225 = vrot.slane %v3095, 5
    %v3226 = vrot.slane %v3225, 4
    %v3227 = vrot.slane %v2392, 5
    %v3228 = vsel %vm1593, %v3226, %v3227
    %v3229 = vrot.slane %v3227, 4
    %v3230 = vrot.slane %v2393, 5
    %v3231 = vsel %vm1593, %v3229, %v3230
    %v3232 = vrot.slane %v3096, 5
    %v3233 = vrot.slane %v3232, 4
    %v3234 = vrot.slane %v2395, 5
    %v3235 = vsel %vm1593, %v3233, %v3234
    %v3236 = vrot.slane %v3234, 4
    %v3237 = vrot.slane %v2396, 5
    %v3238 = vsel %vm1593, %v3236, %v3237
    %v3239 = vrot.slane %v3097, 5
    %v3240 = vrot.slane %v3239, 4
    %v3241 = vrot.slane %v2398, 5
    %v3242 = vsel %vm1593, %v3240, %v3241
    %v3243 = vrot.slane %v3241, 4
    %v3244 = vrot.slane %v2399, 5
    %v3245 = vsel %vm1593, %v3243, %v3244
    %v3246 = vrot.slane %v3098, 5
    %v3247 = vrot.slane %v3246, 4
    %v3248 = vrot.slane %v2401, 5
    %v3249 = vsel %vm1593, %v3247, %v3248
    %v3250 = vrot.slane %v3248, 4
    %v3251 = vrot.slane %v2402, 5
    %v3252 = vsel %vm1593, %v3250, %v3251
    %v3253 = vrot.slane %v3099, 5
    %v3254 = vrot.slane %v3253, 4
    %v3255 = vrot.slane %v2404, 5
    %v3256 = vsel %vm1593, %v3254, %v3255
    %v3257 = vrot.slane %v3255, 4
    %v3258 = vrot.slane %v2405, 5
    %v3259 = vsel %vm1593, %v3257, %v3258
    %s3260 = scalar_lea.vmem %s1, 10
    %v3261 = vld [vmem:[%s3260] sm:$0x3]
    %v3262 = vunpack.c.l.b16 %v3151
    %v3263 = vunpack.c.l.b16 %v3154
    %v3264 = vunpack.c.l.b16 %v3158
    %v3265 = vunpack.c.l.b16 %v3161
    %v3266 = vunpack.c.l.b16 %v3165
    %v3267 = vunpack.c.l.b16 %v3168
    %v3268 = vunpack.c.l.b16 %v3172
    %v3269 = vunpack.c.l.b16 %v3175
    %v3270 = vunpack.c.l.b16 %v3179
    %v3271 = vunpack.c.l.b16 %v3182
    %v3272 = vunpack.c.l.b16 %v3186
    %v3273 = vunpack.c.l.b16 %v3189
    %v3274 = vunpack.c.l.b16 %v3193
    %v3275 = vunpack.c.l.b16 %v3196
    %v3276 = vunpack.c.l.b16 %v3200
    %v3277 = vunpack.c.l.b16 %v3203
    %v3278 = vunpack.c.l.b16 %v3207
    %v3279 = vunpack.c.l.b16 %v3210
    %v3280 = vunpack.c.l.b16 %v3214
    %v3281 = vunpack.c.l.b16 %v3217
    %v3282 = vunpack.c.l.b16 %v3221
    %v3283 = vunpack.c.l.b16 %v3224
    %v3284 = vunpack.c.l.b16 %v3228
    %v3285 = vunpack.c.l.b16 %v3231
    %v3286 = vunpack.c.l.b16 %v3235
    %v3287 = vunpack.c.l.b16 %v3238
    %v3288 = vunpack.c.l.b16 %v3242
    %v3289 = vunpack.c.l.b16 %v3245
    %v3290 = vunpack.c.l.b16 %v3249
    %v3291 = vunpack.c.l.b16 %v3252
    %v3292 = vunpack.c.l.b16 %v3256
    %v3293 = vunpack.c.l.b16 %v3259
    %v3294 = vpack.c.b16 %v3263, %v3262
    %v3295 = vpack.c.b16 %v3265, %v3264
    %v3296 = vpack.c.b16 %v3267, %v3266
    %v3297 = vpack.c.b16 %v3269, %v3268
    %v3298 = vpack.c.b16 %v3271, %v3270
    %v3299 = vpack.c.b16 %v3273, %v3272
    %v3300 = vpack.c.b16 %v3275, %v3274
    %v3301 = vpack.c.b16 %v3277, %v3276
    %v3302 = vpack.c.b16 %v3279, %v3278
    %v3303 = vpack.c.b16 %v3281, %v3280
    %v3304 = vpack.c.b16 %v3283, %v3282
    %v3305 = vpack.c.b16 %v3285, %v3284
    %v3306 = vpack.c.b16 %v3287, %v3286
    %v3307 = vpack.c.b16 %v3289, %v3288
    %v3308 = vpack.c.b16 %v3291, %v3290
    %v3309 = vpack.c.b16 %v3293, %v3292
    %v3311 = vsel %vm1034, %v3294, 0
    %v3314 = vsel %vm1034, %v3295, 0
    %v3317 = vsel %vm1034, %v3296, 0
    %v3320 = vsel %vm1034, %v3297, 0
    %v3323 = vsel %vm1034, %v3298, 0
    %v3326 = vsel %vm1034, %v3299, 0
    %v3329 = vsel %vm1034, %v3300, 0
    %v3332 = vsel %vm1034, %v3301, 0
    %v3335 = vsel %vm1034, %v3302, 0
    %v3338 = vsel %vm1034, %v3303, 0
    %v3341 = vsel %vm1034, %v3304, 0
    %v3344 = vsel %vm1034, %v3305, 0
    %v3347 = vsel %vm1034, %v3306, 0
    %v3350 = vsel %vm1034, %v3307, 0
    %v3353 = vsel %vm1034, %v3308, 0
    %v3356 = vsel %vm1034, %v3309, 0
    %v3359 = vand.u32 %v3261, %v1086
    %3361 = vmatprep.subr.bf16.mxu0 0
    %3362 = vmatpush1.bf16.msra.mxu0 %v3359
    %3363 = vmatprep.subr.bf16.mxu0 0
    %3364 = vmatpush1.bf16.msra.mxu0 0
    %3365 = vmatprep.subr.bf16.mxu0 0
    %3366 = vmatpush1.bf16.msra.mxu0 0
    %3367 = vmatprep.subr.bf16.mxu0 0
    %3368 = vmatpush1.bf16.msra.mxu0 0
    %3369 = vmatprep.subr.bf16.mxu0 0
    %3370 = vmatpush1.bf16.msra.mxu0 0
    %3371 = vmatprep.subr.bf16.mxu0 0
    %3372 = vmatpush1.bf16.msra.mxu0 0
    %3373 = vmatprep.subr.bf16.mxu0 0
    %3374 = vmatpush1.bf16.msra.mxu0 0
    %3375 = vmatprep.subr.bf16.mxu0 0
    %3376 = vmatpush1.bf16.msra.mxu0 0
    %3377 = vmatprep.subr.bf16.mxu0 0
    %3378 = vmatpush1.bf16.msra.mxu0 0
    %3379 = vmatprep.subr.bf16.mxu0 0
    %3380 = vmatpush1.bf16.msra.mxu0 0
    %3381 = vmatprep.subr.bf16.mxu0 0
    %3382 = vmatpush1.bf16.msra.mxu0 0
    %3383 = vmatprep.subr.bf16.mxu0 0
    %3384 = vmatpush1.bf16.msra.mxu0 0
    %3385 = vmatprep.subr.bf16.mxu0 0
    %3386 = vmatpush1.bf16.msra.mxu0 0
    %3387 = vmatprep.subr.bf16.mxu0 0
    %3388 = vmatpush1.bf16.msra.mxu0 0
    %3389 = vmatprep.subr.bf16.mxu0 0
    %3390 = vmatpush1.bf16.msra.mxu0 0
    %3391 = vmatprep.subr.bf16.mxu0 0
    %3392 = vmatpush1.bf16.msra.mxu0 0
    %3393 = vmatprep.mubr.bf16.mxu0 0
    %3394 = vmatmul.mubr.bf16.gmra.mrb[0].mxu0 %v3311
    %v3395 = vpop.f32.mrb[0].mxu0
    %v3396 = vadd.f32 0.0, %v3395
    %v3397 = vpop.f32.mrb[0].mxu0
    %v3398 = vpop.f32.mrb[0].mxu0
    %v3399 = vadd.f32 0.0, %v3398
    %v3400 = vpop.f32.mrb[0].mxu0
    %3401 = vmatprep.mubr.bf16.mxu0 0
    %3402 = vmatmul.mubr.bf16.gmra.mrb[0].mxu0 %v3314
    %v3403 = vpop.f32.mrb[0].mxu0
    %v3404 = vadd.f32 0.0, %v3403
    %v3405 = vpop.f32.mrb[0].mxu0
    %v3406 = vpop.f32.mrb[0].mxu0
    %v3407 = vadd.f32 0.0, %v3406
    %v3408 = vpop.f32.mrb[0].mxu0
    %3409 = vmatprep.mubr.bf16.mxu0 0
    %3410 = vmatmul.mubr.bf16.gmra.mrb[0].mxu0 %v3317
    %v3411 = vpop.f32.mrb[0].mxu0
    %v3412 = vadd.f32 0.0, %v3411
    %v3413 = vpop.f32.mrb[0].mxu0
    %v3414 = vpop.f32.mrb[0].mxu0
    %v3415 = vadd.f32 0.0, %v3414
    %v3416 = vpop.f32.mrb[0].mxu0
    %3417 = vmatprep.mubr.bf16.mxu0 0
    %3418 = vmatmul.mubr.bf16.gmra.mrb[0].mxu0 %v3320
    %v3419 = vpop.f32.mrb[0].mxu0
    %v3420 = vadd.f32 0.0, %v3419
    %v3421 = vpop.f32.mrb[0].mxu0
    %v3422 = vpop.f32.mrb[0].mxu0
    %v3423 = vadd.f32 0.0, %v3422
    %v3424 = vpop.f32.mrb[0].mxu0
    %3425 = vmatprep.mubr.bf16.mxu0 0
    %3426 = vmatmul.mubr.bf16.gmra.mrb[0].mxu0 %v3323
    %v3427 = vpop.f32.mrb[0].mxu0
    %v3428 = vadd.f32 0.0, %v3427
    %v3429 = vpop.f32.mrb[0].mxu0
    %v3430 = vpop.f32.mrb[0].mxu0
    %v3431 = vadd.f32 0.0, %v3430
    %v3432 = vpop.f32.mrb[0].mxu0
    %3433 = vmatprep.mubr.bf16.mxu0 0
    %3434 = vmatmul.mubr.bf16.gmra.mrb[0].mxu0 %v3326
    %v3435 = vpop.f32.mrb[0].mxu0
    %v3436 = vadd.f32 0.0, %v3435
    %v3437 = vpop.f32.mrb[0].mxu0
    %v3438 = vpop.f32.mrb[0].mxu0
    %v3439 = vadd.f32 0.0, %v3438
    %v3440 = vpop.f32.mrb[0].mxu0
    %3441 = vmatprep.mubr.bf16.mxu0 0
    %3442 = vmatmul.mubr.bf16.gmra.mrb[0].mxu0 %v3329
    %v3443 = vpop.f32.mrb[0].mxu0
    %v3444 = vadd.f32 0.0, %v3443
    %v3445 = vpop.f32.mrb[0].mxu0
    %v3446 = vpop.f32.mrb[0].mxu0
    %v3447 = vadd.f32 0.0, %v3446
    %v3448 = vpop.f32.mrb[0].mxu0
    %3449 = vmatprep.mubr.bf16.mxu0 0
    %3450 = vmatmul.mubr.bf16.gmra.mrb[0].mxu0 %v3332
    %v3451 = vpop.f32.mrb[0].mxu0
    %v3452 = vadd.f32 0.0, %v3451
    %v3453 = vpop.f32.mrb[0].mxu0
    %v3454 = vpop.f32.mrb[0].mxu0
    %v3455 = vadd.f32 0.0, %v3454
    %v3456 = vpop.f32.mrb[0].mxu0
    %3457 = vmatprep.mubr.bf16.mxu0 0
    %3458 = vmatmul.mubr.bf16.gmra.mrb[0].mxu0 %v3335
    %v3459 = vpop.f32.mrb[0].mxu0
    %v3460 = vadd.f32 0.0, %v3459
    %v3461 = vpop.f32.mrb[0].mxu0
    %v3462 = vpop.f32.mrb[0].mxu0
    %v3463 = vadd.f32 0.0, %v3462
    %v3464 = vpop.f32.mrb[0].mxu0
    %3465 = vmatprep.mubr.bf16.mxu0 0
    %3466 = vmatmul.mubr.bf16.gmra.mrb[0].mxu0 %v3338
    %v3467 = vpop.f32.mrb[0].mxu0
    %v3468 = vadd.f32 0.0, %v3467
    %v3469 = vpop.f32.mrb[0].mxu0
    %v3470 = vpop.f32.mrb[0].mxu0
    %v3471 = vadd.f32 0.0, %v3470
    %v3472 = vpop.f32.mrb[0].mxu0
    %3473 = vmatprep.mubr.bf16.mxu0 0
    %3474 = vmatmul.mubr.bf16.gmra.mrb[0].mxu0 %v3341
    %v3475 = vpop.f32.mrb[0].mxu0
    %v3476 = vadd.f32 0.0, %v3475
    %v3477 = vpop.f32.mrb[0].mxu0
    %v3478 = vpop.f32.mrb[0].mxu0
    %v3479 = vadd.f32 0.0, %v3478
    %v3480 = vpop.f32.mrb[0].mxu0
    %3481 = vmatprep.mubr.bf16.mxu0 0
    %3482 = vmatmul.mubr.bf16.gmra.mrb[0].mxu0 %v3344
    %v3483 = vpop.f32.mrb[0].mxu0
    %v3484 = vadd.f32 0.0, %v3483
    %v3485 = vpop.f32.mrb[0].mxu0
    %v3486 = vpop.f32.mrb[0].mxu0
    %v3487 = vadd.f32 0.0, %v3486
    %v3488 = vpop.f32.mrb[0].mxu0
    %3489 = vmatprep.mubr.bf16.mxu0 0
    %3490 = vmatmul.mubr.bf16.gmra.mrb[0].mxu0 %v3347
    %v3491 = vpop.f32.mrb[0].mxu0
    %v3492 = vadd.f32 0.0, %v3491
    %v3493 = vpop.f32.mrb[0].mxu0
    %v3494 = vpop.f32.mrb[0].mxu0
    %v3495 = vadd.f32 0.0, %v3494
    %v3496 = vpop.f32.mrb[0].mxu0
    %3497 = vmatprep.mubr.bf16.mxu0 0
    %3498 = vmatmul.mubr.bf16.gmra.mrb[0].mxu0 %v3350
    %v3499 = vpop.f32.mrb[0].mxu0
    %v3500 = vadd.f32 0.0, %v3499
    %v3501 = vpop.f32.mrb[0].mxu0
    %v3502 = vpop.f32.mrb[0].mxu0
    %v3503 = vadd.f32 0.0, %v3502
    %v3504 = vpop.f32.mrb[0].mxu0
    %3505 = vmatprep.mubr.bf16.mxu0 0
    %3506 = vmatmul.mubr.bf16.gmra.mrb[0].mxu0 %v3353
    %v3507 = vpop.f32.mrb[0].mxu0
    %v3508 = vadd.f32 0.0, %v3507
    %v3509 = vpop.f32.mrb[0].mxu0
    %v3510 = vpop.f32.mrb[0].mxu0
    %v3511 = vadd.f32 0.0, %v3510
    %v3512 = vpop.f32.mrb[0].mxu0
    %3513 = vmatprep.mubr.bf16.mxu0 0
    %3514 = vmatmul.mubr.bf16.gmra.mrb[0].mxu0 %v3356
    %v3515 = vpop.f32.mrb[0].mxu0
    %v3516 = vadd.f32 0.0, %v3515
    %v3517 = vpop.f32.mrb[0].mxu0
    %v3518 = vpop.f32.mrb[0].mxu0
    %v3519 = vadd.f32 0.0, %v3518
    %v3520 = vpop.f32.mrb[0].mxu0
    %3521 = vdwg.mxu0
    %v3522 = vadd.f32 %v3052, %v3396
    %v3523 = vadd.f32 %v3053, %v3399
    %v3524 = vadd.f32 %v3054, %v3404
    %v3525 = vadd.f32 %v3055, %v3407
    %v3526 = vadd.f32 %v3056, %v3412
    %v3527 = vadd.f32 %v3057, %v3415
    %v3528 = vadd.f32 %v3058, %v3420
    %v3529 = vadd.f32 %v3059, %v3423
    %v3530 = vadd.f32 %v3060, %v3428
    %v3531 = vadd.f32 %v3061, %v3431
    %v3532 = vadd.f32 %v3062, %v3436
    %v3533 = vadd.f32 %v3063, %v3439
    %v3534 = vadd.f32 %v3064, %v3444
    %v3535 = vadd.f32 %v3065, %v3447
    %v3536 = vadd.f32 %v3066, %v3452
    %v3537 = vadd.f32 %v3067, %v3455
    %v3538 = vadd.f32 %v3068, %v3460
    %v3539 = vadd.f32 %v3069, %v3463
    %v3540 = vadd.f32 %v3070, %v3468
    %v3541 = vadd.f32 %v3071, %v3471
    %v3542 = vadd.f32 %v3072, %v3476
    %v3543 = vadd.f32 %v3073, %v3479
    %v3544 = vadd.f32 %v3074, %v3484
    %v3545 = vadd.f32 %v3075, %v3487
    %v3546 = vadd.f32 %v3076, %v3492
    %v3547 = vadd.f32 %v3077, %v3495
    %v3548 = vadd.f32 %v3078, %v3500
    %v3549 = vadd.f32 %v3079, %v3503
    %v3550 = vadd.f32 %v3080, %v3508
    %v3551 = vadd.f32 %v3081, %v3511
    %v3552 = vadd.f32 %v3082, %v3516
    %v3553 = vadd.f32 %v3083, %v3519
    %s3554 = scalar_lea.vmem [#allocation2], 24
    %v3555 = vld [vmem:[%s3554] sm:$0xf]
    %v3556 = vld [vmem:[%s3554 + $0x4] sm:$0xf]
    %v3557 = vld [vmem:[%s3554 + $0xc] sm:$0xf]
    %v3558 = vld [vmem:[%s3554 + $0x10] sm:$0xf]
    %v3559 = vld [vmem:[%s3554 + $0x18] sm:$0xf]
    %v3560 = vld [vmem:[%s3554 + $0x1c] sm:$0xf]
    %v3561 = vld [vmem:[%s3554 + $0x24] sm:$0xf]
    %v3562 = vld [vmem:[%s3554 + $0x28] sm:$0xf]
    %v3563 = vld [vmem:[%s3554 + $0x30] sm:$0xf]
    %v3564 = vld [vmem:[%s3554 + $0x34] sm:$0xf]
    %v3565 = vld [vmem:[%s3554 + $0x3c] sm:$0xf]
    %v3566 = vld [vmem:[%s3554 + $0x40] sm:$0xf]
    %v3567 = vld [vmem:[%s3554 + $0x48] sm:$0xf]
    %v3568 = vld [vmem:[%s3554 + $0x4c] sm:$0xf]
    %v3569 = vld [vmem:[%s3554 + $0x54] sm:$0xf]
    %v3570 = vld [vmem:[%s3554 + $0x58] sm:$0xf]
    %v3571 = vld [vmem:[%s3554 + $0x60] sm:$0xf]
    %v3572 = vld [vmem:[%s3554 + $0x64] sm:$0xf]
    %v3573 = vld [vmem:[%s3554 + $0x6c] sm:$0xf]
    %v3574 = vld [vmem:[%s3554 + $0x70] sm:$0xf]
    %v3575 = vld [vmem:[%s3554 + $0x78] sm:$0xf]
    %v3576 = vld [vmem:[%s3554 + $0x7c] sm:$0xf]
    %v3577 = vld [vmem:[%s3554 + $0x84] sm:$0xf]
    %v3578 = vld [vmem:[%s3554 + $0x88] sm:$0xf]
    %v3579 = vld [vmem:[%s3554 + $0x90] sm:$0xf]
    %v3580 = vld [vmem:[%s3554 + $0x94] sm:$0xf]
    %v3581 = vld [vmem:[%s3554 + $0x9c] sm:$0xf]
    %v3582 = vld [vmem:[%s3554 + $0xa0] sm:$0xf]
    %v3583 = vld [vmem:[%s3554 + $0xa8] sm:$0xf]
    %v3584 = vld [vmem:[%s3554 + $0xac] sm:$0xf]
    %v3585 = vld [vmem:[%s3554 + $0xb4] sm:$0xf]
    %v3586 = vld [vmem:[%s3554 + $0xb8] sm:$0xf]
    %s3587 = scalar_lea.vmem %s1, 12
    %v3588 = vld [vmem:[%s3587] sm:$0x3]
    %v3621 = vunpack.c.l.b16 %v3555
    %v3622 = vunpack.c.l.b16 %v3556
    %v3623 = vunpack.c.l.b16 %v3557
    %v3624 = vunpack.c.l.b16 %v3558
    %v3625 = vunpack.c.l.b16 %v3559
    %v3626 = vunpack.c.l.b16 %v3560
    %v3627 = vunpack.c.l.b16 %v3561
    %v3628 = vunpack.c.l.b16 %v3562
    %v3629 = vunpack.c.l.b16 %v3563
    %v3630 = vunpack.c.l.b16 %v3564
    %v3631 = vunpack.c.l.b16 %v3565
    %v3632 = vunpack.c.l.b16 %v3566
    %v3633 = vunpack.c.l.b16 %v3567
    %v3634 = vunpack.c.l.b16 %v3568
    %v3635 = vunpack.c.l.b16 %v3569
    %v3636 = vunpack.c.l.b16 %v3570
    %v3637 = vunpack.c.l.b16 %v3571
    %v3638 = vunpack.c.l.b16 %v3572
    %v3639 = vunpack.c.l.b16 %v3573
    %v3640 = vunpack.c.l.b16 %v3574
    %v3641 = vunpack.c.l.b16 %v3575
    %v3642 = vunpack.c.l.b16 %v3576
    %v3643 = vunpack.c.l.b16 %v3577
    %v3644 = vunpack.c.l.b16 %v3578
    %v3645 = vunpack.c.l.b16 %v3579
    %v3646 = vunpack.c.l.b16 %v3580
    %v3647 = vunpack.c.l.b16 %v3581
    %v3648 = vunpack.c.l.b16 %v3582
    %v3649 = vunpack.c.l.b16 %v3583
    %v3650 = vunpack.c.l.b16 %v3584
    %v3651 = vunpack.c.l.b16 %v3585
    %v3652 = vunpack.c.l.b16 %v3586
    %v3653 = vpack.c.b16 %v3622, %v3621
    %v3654 = vpack.c.b16 %v3624, %v3623
    %v3655 = vpack.c.b16 %v3626, %v3625
    %v3656 = vpack.c.b16 %v3628, %v3627
    %v3657 = vpack.c.b16 %v3630, %v3629
    %v3658 = vpack.c.b16 %v3632, %v3631
    %v3659 = vpack.c.b16 %v3634, %v3633
    %v3660 = vpack.c.b16 %v3636, %v3635
    %v3661 = vpack.c.b16 %v3638, %v3637
    %v3662 = vpack.c.b16 %v3640, %v3639
    %v3663 = vpack.c.b16 %v3642, %v3641
    %v3664 = vpack.c.b16 %v3644, %v3643
    %v3665 = vpack.c.b16 %v3646, %v3645
    %v3666 = vpack.c.b16 %v3648, %v3647
    %v3667 = vpack.c.b16 %v3650, %v3649
    %v3668 = vpack.c.b16 %v3652, %v3651
    %v3670 = vsel %vm1034, %v3653, 0
    %v3673 = vsel %vm1034, %v3654, 0
    %v3676 = vsel %vm1034, %v3655, 0
    %v3679 = vsel %vm1034, %v3656, 0
    %v3682 = vsel %vm1034, %v3657, 0
    %v3685 = vsel %vm1034, %v3658, 0
    %v3688 = vsel %vm1034, %v3659, 0
    %v3691 = vsel %vm1034, %v3660, 0
    %v3694 = vsel %vm1034, %v3661, 0
    %v3697 = vsel %vm1034, %v3662, 0
    %v3700 = vsel %vm1034, %v3663, 0
    %v3703 = vsel %vm1034, %v3664, 0
    %v3706 = vsel %vm1034, %v3665, 0
    %v3709 = vsel %vm1034, %v3666, 0
    %v3712 = vsel %vm1034, %v3667, 0
    %v3715 = vsel %vm1034, %v3668, 0
    %v3718 = vand.u32 %v3588, %v1086
    %3720 = vmatprep.subr.bf16.mxu0 0
    %3721 = vmatpush1.bf16.msra.mxu0 %v3718
    %3722 = vmatprep.subr.bf16.mxu0 0
    %3723 = vmatpush1.bf16.msra.mxu0 0
    %3724 = vmatprep.subr.bf16.mxu0 0
    %3725 = vmatpush1.bf16.msra.mxu0 0
    %3726 = vmatprep.subr.bf16.mxu0 0
    %3727 = vmatpush1.bf16.msra.mxu0 0
    %3728 = vmatprep.subr.bf16.mxu0 0
    %3729 = vmatpush1.bf16.msra.mxu0 0
    %3730 = vmatprep.subr.bf16.mxu0 0
    %3731 = vmatpush1.bf16.msra.mxu0 0
    %3732 = vmatprep.subr.bf16.mxu0 0
    %3733 = vmatpush1.bf16.msra.mxu0 0
    %3734 = vmatprep.subr.bf16.mxu0 0
    %3735 = vmatpush1.bf16.msra.mxu0 0
    %3736 = vmatprep.subr.bf16.mxu0 0
    %3737 = vmatpush1.bf16.msra.mxu0 0
    %3738 = vmatprep.subr.bf16.mxu0 0
    %3739 = vmatpush1.bf16.msra.mxu0 0
    %3740 = vmatprep.subr.bf16.mxu0 0
    %3741 = vmatpush1.bf16.msra.mxu0 0
    %3742 = vmatprep.subr.bf16.mxu0 0
    %3743 = vmatpush1.bf16.msra.mxu0 0
    %3744 = vmatprep.subr.bf16.mxu0 0
    %3745 = vmatpush1.bf16.msra.mxu0 0
    %3746 = vmatprep.subr.bf16.mxu0 0
    %3747 = vmatpush1.bf16.msra.mxu0 0
    %3748 = vmatprep.subr.bf16.mxu0 0
    %3749 = vmatpush1.bf16.msra.mxu0 0
    %3750 = vmatprep.subr.bf16.mxu0 0
    %3751 = vmatpush1.bf16.msra.mxu0 0
    %3752 = vmatprep.mubr.bf16.mxu0 0
    %3753 = vmatmul.mubr.bf16.gmra.mrb[0].mxu0 %v3670
    %v3754 = vpop.f32.mrb[0].mxu0
    %v3755 = vadd.f32 0.0, %v3754
    %v3756 = vpop.f32.mrb[0].mxu0
    %v3757 = vpop.f32.mrb[0].mxu0
    %v3758 = vadd.f32 0.0, %v3757
    %v3759 = vpop.f32.mrb[0].mxu0
    %3760 = vmatprep.mubr.bf16.mxu0 0
    %3761 = vmatmul.mubr.bf16.gmra.mrb[0].mxu0 %v3673
    %v3762 = vpop.f32.mrb[0].mxu0
    %v3763 = vadd.f32 0.0, %v3762
    %v3764 = vpop.f32.mrb[0].mxu0
    %v3765 = vpop.f32.mrb[0].mxu0
    %v3766 = vadd.f32 0.0, %v3765
    %v3767 = vpop.f32.mrb[0].mxu0
    %3768 = vmatprep.mubr.bf16.mxu0 0
    %3769 = vmatmul.mubr.bf16.gmra.mrb[0].mxu0 %v3676
    %v3770 = vpop.f32.mrb[0].mxu0
    %v3771 = vadd.f32 0.0, %v3770
    %v3772 = vpop.f32.mrb[0].mxu0
    %v3773 = vpop.f32.mrb[0].mxu0
    %v3774 = vadd.f32 0.0, %v3773
    %v3775 = vpop.f32.mrb[0].mxu0
    %3776 = vmatprep.mubr.bf16.mxu0 0
    %3777 = vmatmul.mubr.bf16.gmra.mrb[0].mxu0 %v3679
    %v3778 = vpop.f32.mrb[0].mxu0
    %v3779 = vadd.f32 0.0, %v3778
    %v3780 = vpop.f32.mrb[0].mxu0
    %v3781 = vpop.f32.mrb[0].mxu0
    %v3782 = vadd.f32 0.0, %v3781
    %v3783 = vpop.f32.mrb[0].mxu0
    %3784 = vmatprep.mubr.bf16.mxu0 0
    %3785 = vmatmul.mubr.bf16.gmra.mrb[0].mxu0 %v3682
    %v3786 = vpop.f32.mrb[0].mxu0
    %v3787 = vadd.f32 0.0, %v3786
    %v3788 = vpop.f32.mrb[0].mxu0
    %v3789 = vpop.f32.mrb[0].mxu0
    %v3790 = vadd.f32 0.0, %v3789
    %v3791 = vpop.f32.mrb[0].mxu0
    %3792 = vmatprep.mubr.bf16.mxu0 0
    %3793 = vmatmul.mubr.bf16.gmra.mrb[0].mxu0 %v3685
    %v3794 = vpop.f32.mrb[0].mxu0
    %v3795 = vadd.f32 0.0, %v3794
    %v3796 = vpop.f32.mrb[0].mxu0
    %v3797 = vpop.f32.mrb[0].mxu0
    %v3798 = vadd.f32 0.0, %v3797
    %v3799 = vpop.f32.mrb[0].mxu0
    %3800 = vmatprep.mubr.bf16.mxu0 0
    %3801 = vmatmul.mubr.bf16.gmra.mrb[0].mxu0 %v3688
    %v3802 = vpop.f32.mrb[0].mxu0
    %v3803 = vadd.f32 0.0, %v3802
    %v3804 = vpop.f32.mrb[0].mxu0
    %v3805 = vpop.f32.mrb[0].mxu0
    %v3806 = vadd.f32 0.0, %v3805
    %v3807 = vpop.f32.mrb[0].mxu0
    %3808 = vmatprep.mubr.bf16.mxu0 0
    %3809 = vmatmul.mubr.bf16.gmra.mrb[0].mxu0 %v3691
    %v3810 = vpop.f32.mrb[0].mxu0
    %v3811 = vadd.f32 0.0, %v3810
    %v3812 = vpop.f32.mrb[0].mxu0
    %v3813 = vpop.f32.mrb[0].mxu0
    %v3814 = vadd.f32 0.0, %v3813
    %v3815 = vpop.f32.mrb[0].mxu0
    %3816 = vmatprep.mubr.bf16.mxu0 0
    %3817 = vmatmul.mubr.bf16.gmra.mrb[0].mxu0 %v3694
    %v3818 = vpop.f32.mrb[0].mxu0
    %v3819 = vadd.f32 0.0, %v3818
    %v3820 = vpop.f32.mrb[0].mxu0
    %v3821 = vpop.f32.mrb[0].mxu0
    %v3822 = vadd.f32 0.0, %v3821
    %v3823 = vpop.f32.mrb[0].mxu0
    %3824 = vmatprep.mubr.bf16.mxu0 0
    %3825 = vmatmul.mubr.bf16.gmra.mrb[0].mxu0 %v3697
    %v3826 = vpop.f32.mrb[0].mxu0
    %v3827 = vadd.f32 0.0, %v3826
    %v3828 = vpop.f32.mrb[0].mxu0
    %v3829 = vpop.f32.mrb[0].mxu0
    %v3830 = vadd.f32 0.0, %v3829
    %v3831 = vpop.f32.mrb[0].mxu0
    %3832 = vmatprep.mubr.bf16.mxu0 0
    %3833 = vmatmul.mubr.bf16.gmra.mrb[0].mxu0 %v3700
    %v3834 = vpop.f32.mrb[0].mxu0
    %v3835 = vadd.f32 0.0, %v3834
    %v3836 = vpop.f32.mrb[0].mxu0
    %v3837 = vpop.f32.mrb[0].mxu0
    %v3838 = vadd.f32 0.0, %v3837
    %v3839 = vpop.f32.mrb[0].mxu0
    %3840 = vmatprep.mubr.bf16.mxu0 0
    %3841 = vmatmul.mubr.bf16.gmra.mrb[0].mxu0 %v3703
    %v3842 = vpop.f32.mrb[0].mxu0
    %v3843 = vadd.f32 0.0, %v3842
    %v3844 = vpop.f32.mrb[0].mxu0
    %v3845 = vpop.f32.mrb[0].mxu0
    %v3846 = vadd.f32 0.0, %v3845
    %v3847 = vpop.f32.mrb[0].mxu0
    %3848 = vmatprep.mubr.bf16.mxu0 0
    %3849 = vmatmul.mubr.bf16.gmra.mrb[0].mxu0 %v3706
    %v3850 = vpop.f32.mrb[0].mxu0
    %v3851 = vadd.f32 0.0, %v3850
    %v3852 = vpop.f32.mrb[0].mxu0
    %v3853 = vpop.f32.mrb[0].mxu0
    %v3854 = vadd.f32 0.0, %v3853
    %v3855 = vpop.f32.mrb[0].mxu0
    %3856 = vmatprep.mubr.bf16.mxu0 0
    %3857 = vmatmul.mubr.bf16.gmra.mrb[0].mxu0 %v3709
    %v3858 = vpop.f32.mrb[0].mxu0
    %v3859 = vadd.f32 0.0, %v3858
    %v3860 = vpop.f32.mrb[0].mxu0
    %v3861 = vpop.f32.mrb[0].mxu0
    %v3862 = vadd.f32 0.0, %v3861
    %v3863 = vpop.f32.mrb[0].mxu0
    %3864 = vmatprep.mubr.bf16.mxu0 0
    %3865 = vmatmul.mubr.bf16.gmra.mrb[0].mxu0 %v3712
    %v3866 = vpop.f32.mrb[0].mxu0
    %v3867 = vadd.f32 0.0, %v3866
    %v3868 = vpop.f32.mrb[0].mxu0
    %v3869 = vpop.f32.mrb[0].mxu0
    %v3870 = vadd.f32 0.0, %v3869
    %v3871 = vpop.f32.mrb[0].mxu0
    %3872 = vmatprep.mubr.bf16.mxu0 0
    %3873 = vmatmul.mubr.bf16.gmra.mrb[0].mxu0 %v3715
    %v3874 = vpop.f32.mrb[0].mxu0
    %v3875 = vadd.f32 0.0, %v3874
    %v3876 = vpop.f32.mrb[0].mxu0
    %v3877 = vpop.f32.mrb[0].mxu0
    %v3878 = vadd.f32 0.0, %v3877
    %v3879 = vpop.f32.mrb[0].mxu0
    %3880 = vdwg.mxu0
    %v3881 = vadd.f32 %v3522, %v3755
    %v3882 = vadd.f32 %v3523, %v3758
    %v3883 = vadd.f32 %v3524, %v3763
    %v3884 = vadd.f32 %v3525, %v3766
    %v3885 = vadd.f32 %v3526, %v3771
    %v3886 = vadd.f32 %v3527, %v3774
    %v3887 = vadd.f32 %v3528, %v3779
    %v3888 = vadd.f32 %v3529, %v3782
    %v3889 = vadd.f32 %v3530, %v3787
    %v3890 = vadd.f32 %v3531, %v3790
    %v3891 = vadd.f32 %v3532, %v3795
    %v3892 = vadd.f32 %v3533, %v3798
    %v3893 = vadd.f32 %v3534, %v3803
    %v3894 = vadd.f32 %v3535, %v3806
    %v3895 = vadd.f32 %v3536, %v3811
    %v3896 = vadd.f32 %v3537, %v3814
    %v3897 = vadd.f32 %v3538, %v3819
    %v3898 = vadd.f32 %v3539, %v3822
    %v3899 = vadd.f32 %v3540, %v3827
    %v3900 = vadd.f32 %v3541, %v3830
    %v3901 = vadd.f32 %v3542, %v3835
    %v3902 = vadd.f32 %v3543, %v3838
    %v3903 = vadd.f32 %v3544, %v3843
    %v3904 = vadd.f32 %v3545, %v3846
    %v3905 = vadd.f32 %v3546, %v3851
    %v3906 = vadd.f32 %v3547, %v3854
    %v3907 = vadd.f32 %v3548, %v3859
    %v3908 = vadd.f32 %v3549, %v3862
    %v3909 = vadd.f32 %v3550, %v3867
    %v3910 = vadd.f32 %v3551, %v3870
    %v3911 = vadd.f32 %v3552, %v3875
    %v3912 = vadd.f32 %v3553, %v3878
    %v3913 = vld [vmem:[%s3554] sm:$0xf]
    %v3914 = vld [vmem:[%s3554 + $0x4] sm:$0xf]
    %v3915 = vld [vmem:[%s3554 + $0x8] sm:$0x1]
    %v3916 = vld [vmem:[%s3554 + $0xc] sm:$0xf]
    %v3917 = vld [vmem:[%s3554 + $0x10] sm:$0xf]
    %v3918 = vld [vmem:[%s3554 + $0x14] sm:$0x1]
    %v3919 = vld [vmem:[%s3554 + $0x18] sm:$0xf]
    %v3920 = vld [vmem:[%s3554 + $0x1c] sm:$0xf]
    %v3921 = vld [vmem:[%s3554 + $0x20] sm:$0x1]
    %v3922 = vld [vmem:[%s3554 + $0x24] sm:$0xf]
    %v3923 = vld [vmem:[%s3554 + $0x28] sm:$0xf]
    %v3924 = vld [vmem:[%s3554 + $0x2c] sm:$0x1]
    %v3925 = vld [vmem:[%s3554 + $0x30] sm:$0xf]
    %v3926 = vld [vmem:[%s3554 + $0x34] sm:$0xf]
    %v3927 = vld [vmem:[%s3554 + $0x38] sm:$0x1]
    %v3928 = vld [vmem:[%s3554 + $0x3c] sm:$0xf]
    %v3929 = vld [vmem:[%s3554 + $0x40] sm:$0xf]
    %v3930 = vld [vmem:[%s3554 + $0x44] sm:$0x1]
    %v3931 = vld [vmem:[%s3554 + $0x48] sm:$0xf]
    %v3932 = vld [vmem:[%s3554 + $0x4c] sm:$0xf]
    %v3933 = vld [vmem:[%s3554 + $0x50] sm:$0x1]
    %v3934 = vld [vmem:[%s3554 + $0x54] sm:$0xf]
    %v3935 = vld [vmem:[%s3554 + $0x58] sm:$0xf]
    %v3936 = vld [vmem:[%s3554 + $0x5c] sm:$0x1]
    %v3937 = vld [vmem:[%s3554 + $0x60] sm:$0xf]
    %v3938 = vld [vmem:[%s3554 + $0x64] sm:$0xf]
    %v3939 = vld [vmem:[%s3554 + $0x68] sm:$0x1]
    %v3940 = vld [vmem:[%s3554 + $0x6c] sm:$0xf]
    %v3941 = vld [vmem:[%s3554 + $0x70] sm:$0xf]
    %v3942 = vld [vmem:[%s3554 + $0x74] sm:$0x1]
    %v3943 = vld [vmem:[%s3554 + $0x78] sm:$0xf]
    %v3944 = vld [vmem:[%s3554 + $0x7c] sm:$0xf]
    %v3945 = vld [vmem:[%s3554 + $0x80] sm:$0x1]
    %v3946 = vld [vmem:[%s3554 + $0x84] sm:$0xf]
    %v3947 = vld [vmem:[%s3554 + $0x88] sm:$0xf]
    %v3948 = vld [vmem:[%s3554 + $0x8c] sm:$0x1]
    %v3949 = vld [vmem:[%s3554 + $0x90] sm:$0xf]
    %v3950 = vld [vmem:[%s3554 + $0x94] sm:$0xf]
    %v3951 = vld [vmem:[%s3554 + $0x98] sm:$0x1]
    %v3952 = vld [vmem:[%s3554 + $0x9c] sm:$0xf]
    %v3953 = vld [vmem:[%s3554 + $0xa0] sm:$0xf]
    %v3954 = vld [vmem:[%s3554 + $0xa4] sm:$0x1]
    %v3955 = vld [vmem:[%s3554 + $0xa8] sm:$0xf]
    %v3956 = vld [vmem:[%s3554 + $0xac] sm:$0xf]
    %v3957 = vld [vmem:[%s3554 + $0xb0] sm:$0x1]
    %v3958 = vld [vmem:[%s3554 + $0xb4] sm:$0xf]
    %v3959 = vld [vmem:[%s3554 + $0xb8] sm:$0xf]
    %v3960 = vld [vmem:[%s3554 + $0xbc] sm:$0x1]
    %v3962 = vshrl.u32 %v3913, 16
    %v3964 = vrot.slane %v3962, 4
    %v3965 = vshll.u32 %v3913, 16
    %v3967 = vrot.slane %v3965, 5
    %v3968 = vor.u32 %v3964, %v3967
    %v3969 = vrot.slane %v3968, 4
    %v3971 = vshll.u32 %v3914, 16
    %v3973 = vrot.slane %v3971, 5
    %v3974 = vsel %vm599, %v3969, %v3973
    %v3975 = vshrl.u32 %v3914, 16
    %v3977 = vrot.slane %v3975, 4
    %v3978 = vor.u32 %v3977, %v3973
    %v3979 = vrot.slane %v3978, 4
    %v3981 = vshll.u32 %v3915, 16
    %v3983 = vrot.slane %v3981, 5
    %v3984 = vsel %vm599, %v3979, %v3983
    %v3986 = vshrl.u32 %v3916, 16
    %v3988 = vrot.slane %v3986, 4
    %v3989 = vshll.u32 %v3916, 16
    %v3991 = vrot.slane %v3989, 5
    %v3992 = vor.u32 %v3988, %v3991
    %v3993 = vrot.slane %v3992, 4
    %v3995 = vshll.u32 %v3917, 16
    %v3997 = vrot.slane %v3995, 5
    %v3998 = vsel %vm599, %v3993, %v3997
    %v3999 = vshrl.u32 %v3917, 16
    %v4001 = vrot.slane %v3999, 4
    %v4002 = vor.u32 %v4001, %v3997
    %v4003 = vrot.slane %v4002, 4
    %v4005 = vshll.u32 %v3918, 16
    %v4007 = vrot.slane %v4005, 5
    %v4008 = vsel %vm599, %v4003, %v4007
    %v4010 = vshrl.u32 %v3919, 16
    %v4012 = vrot.slane %v4010, 4
    %v4013 = vshll.u32 %v3919, 16
    %v4015 = vrot.slane %v4013, 5
    %v4016 = vor.u32 %v4012, %v4015
    %v4017 = vrot.slane %v4016, 4
    %v4019 = vshll.u32 %v3920, 16
    %v4021 = vrot.slane %v4019, 5
    %v4022 = vsel %vm599, %v4017, %v4021
    %v4023 = vshrl.u32 %v3920, 16
    %v4025 = vrot.slane %v4023, 4
    %v4026 = vor.u32 %v4025, %v4021
    %v4027 = vrot.slane %v4026, 4
    %v4029 = vshll.u32 %v3921, 16
    %v4031 = vrot.slane %v4029, 5
    %v4032 = vsel %vm599, %v4027, %v4031
    %v4034 = vshrl.u32 %v3922, 16
    %v4036 = vrot.slane %v4034, 4
    %v4037 = vshll.u32 %v3922, 16
    %v4039 = vrot.slane %v4037, 5
    %v4040 = vor.u32 %v4036, %v4039
    %v4041 = vrot.slane %v4040, 4
    %v4043 = vshll.u32 %v3923, 16
    %v4045 = vrot.slane %v4043, 5
    %v4046 = vsel %vm599, %v4041, %v4045
    %v4047 = vshrl.u32 %v3923, 16
    %v4049 = vrot.slane %v4047, 4
    %v4050 = vor.u32 %v4049, %v4045
    %v4051 = vrot.slane %v4050, 4
    %v4053 = vshll.u32 %v3924, 16
    %v4055 = vrot.slane %v4053, 5
    %v4056 = vsel %vm599, %v4051, %v4055
    %v4058 = vshrl.u32 %v3925, 16
    %v4060 = vrot.slane %v4058, 4
    %v4061 = vshll.u32 %v3925, 16
    %v4063 = vrot.slane %v4061, 5
    %v4064 = vor.u32 %v4060, %v4063
    %v4065 = vrot.slane %v4064, 4
    %v4067 = vshll.u32 %v3926, 16
    %v4069 = vrot.slane %v4067, 5
    %v4070 = vsel %vm599, %v4065, %v4069
    %v4071 = vshrl.u32 %v3926, 16
    %v4073 = vrot.slane %v4071, 4
    %v4074 = vor.u32 %v4073, %v4069
    %v4075 = vrot.slane %v4074, 4
    %v4077 = vshll.u32 %v3927, 16
    %v4079 = vrot.slane %v4077, 5
    %v4080 = vsel %vm599, %v4075, %v4079
    %v4082 = vshrl.u32 %v3928, 16
    %v4084 = vrot.slane %v4082, 4
    %v4085 = vshll.u32 %v3928, 16
    %v4087 = vrot.slane %v4085, 5
    %v4088 = vor.u32 %v4084, %v4087
    %v4089 = vrot.slane %v4088, 4
    %v4091 = vshll.u32 %v3929, 16
    %v4093 = vrot.slane %v4091, 5
    %v4094 = vsel %vm599, %v4089, %v4093
    %v4095 = vshrl.u32 %v3929, 16
    %v4097 = vrot.slane %v4095, 4
    %v4098 = vor.u32 %v4097, %v4093
    %v4099 = vrot.slane %v4098, 4
    %v4101 = vshll.u32 %v3930, 16
    %v4103 = vrot.slane %v4101, 5
    %v4104 = vsel %vm599, %v4099, %v4103
    %v4106 = vshrl.u32 %v3931, 16
    %v4108 = vrot.slane %v4106, 4
    %v4109 = vshll.u32 %v3931, 16
    %v4111 = vrot.slane %v4109, 5
    %v4112 = vor.u32 %v4108, %v4111
    %v4113 = vrot.slane %v4112, 4
    %v4115 = vshll.u32 %v3932, 16
    %v4117 = vrot.slane %v4115, 5
    %v4118 = vsel %vm599, %v4113, %v4117
    %v4119 = vshrl.u32 %v3932, 16
    %v4121 = vrot.slane %v4119, 4
    %v4122 = vor.u32 %v4121, %v4117
    %v4123 = vrot.slane %v4122, 4
    %v4125 = vshll.u32 %v3933, 16
    %v4127 = vrot.slane %v4125, 5
    %v4128 = vsel %vm599, %v4123, %v4127
    %v4130 = vshrl.u32 %v3934, 16
    %v4132 = vrot.slane %v4130, 4
    %v4133 = vshll.u32 %v3934, 16
    %v4135 = vrot.slane %v4133, 5
    %v4136 = vor.u32 %v4132, %v4135
    %v4137 = vrot.slane %v4136, 4
    %v4139 = vshll.u32 %v3935, 16
    %v4141 = vrot.slane %v4139, 5
    %v4142 = vsel %vm599, %v4137, %v4141
    %v4143 = vshrl.u32 %v3935, 16
    %v4145 = vrot.slane %v4143, 4
    %v4146 = vor.u32 %v4145, %v4141
    %v4147 = vrot.slane %v4146, 4
    %v4149 = vshll.u32 %v3936, 16
    %v4151 = vrot.slane %v4149, 5
    %v4152 = vsel %vm599, %v4147, %v4151
    %v4154 = vshrl.u32 %v3937, 16
    %v4156 = vrot.slane %v4154, 4
    %v4157 = vshll.u32 %v3937, 16
    %v4159 = vrot.slane %v4157, 5
    %v4160 = vor.u32 %v4156, %v4159
    %v4161 = vrot.slane %v4160, 4
    %v4163 = vshll.u32 %v3938, 16
    %v4165 = vrot.slane %v4163, 5
    %v4166 = vsel %vm599, %v4161, %v4165
    %v4167 = vshrl.u32 %v3938, 16
    %v4169 = vrot.slane %v4167, 4
    %v4170 = vor.u32 %v4169, %v4165
    %v4171 = vrot.slane %v4170, 4
    %v4173 = vshll.u32 %v3939, 16
    %v4175 = vrot.slane %v4173, 5
    %v4176 = vsel %vm599, %v4171, %v4175
    %v4178 = vshrl.u32 %v3940, 16
    %v4180 = vrot.slane %v4178, 4
    %v4181 = vshll.u32 %v3940, 16
    %v4183 = vrot.slane %v4181, 5
    %v4184 = vor.u32 %v4180, %v4183
    %v4185 = vrot.slane %v4184, 4
    %v4187 = vshll.u32 %v3941, 16
    %v4189 = vrot.slane %v4187, 5
    %v4190 = vsel %vm599, %v4185, %v4189
    %v4191 = vshrl.u32 %v3941, 16
    %v4193 = vrot.slane %v4191, 4
    %v4194 = vor.u32 %v4193, %v4189
    %v4195 = vrot.slane %v4194, 4
    %v4197 = vshll.u32 %v3942, 16
    %v4199 = vrot.slane %v4197, 5
    %v4200 = vsel %vm599, %v4195, %v4199
    %v4202 = vshrl.u32 %v3943, 16
    %v4204 = vrot.slane %v4202, 4
    %v4205 = vshll.u32 %v3943, 16
    %v4207 = vrot.slane %v4205, 5
    %v4208 = vor.u32 %v4204, %v4207
    %v4209 = vrot.slane %v4208, 4
    %v4211 = vshll.u32 %v3944, 16
    %v4213 = vrot.slane %v4211, 5
    %v4214 = vsel %vm599, %v4209, %v4213
    %v4215 = vshrl.u32 %v3944, 16
    %v4217 = vrot.slane %v4215, 4
    %v4218 = vor.u32 %v4217, %v4213
    %v4219 = vrot.slane %v4218, 4
    %v4221 = vshll.u32 %v3945, 16
    %v4223 = vrot.slane %v4221, 5
    %v4224 = vsel %vm599, %v4219, %v4223
    %v4226 = vshrl.u32 %v3946, 16
    %v4228 = vrot.slane %v4226, 4
    %v4229 = vshll.u32 %v3946, 16
    %v4231 = vrot.slane %v4229, 5
    %v4232 = vor.u32 %v4228, %v4231
    %v4233 = vrot.slane %v4232, 4
    %v4235 = vshll.u32 %v3947, 16
    %v4237 = vrot.slane %v4235, 5
    %v4238 = vsel %vm599, %v4233, %v4237
    %v4239 = vshrl.u32 %v3947, 16
    %v4241 = vrot.slane %v4239, 4
    %v4242 = vor.u32 %v4241, %v4237
    %v4243 = vrot.slane %v4242, 4
    %v4245 = vshll.u32 %v3948, 16
    %v4247 = vrot.slane %v4245, 5
    %v4248 = vsel %vm599, %v4243, %v4247
    %v4250 = vshrl.u32 %v3949, 16
    %v4252 = vrot.slane %v4250, 4
    %v4253 = vshll.u32 %v3949, 16
    %v4255 = vrot.slane %v4253, 5
    %v4256 = vor.u32 %v4252, %v4255
    %v4257 = vrot.slane %v4256, 4
    %v4259 = vshll.u32 %v3950, 16
    %v4261 = vrot.slane %v4259, 5
    %v4262 = vsel %vm599, %v4257, %v4261
    %v4263 = vshrl.u32 %v3950, 16
    %v4265 = vrot.slane %v4263, 4
    %v4266 = vor.u32 %v4265, %v4261
    %v4267 = vrot.slane %v4266, 4
    %v4269 = vshll.u32 %v3951, 16
    %v4271 = vrot.slane %v4269, 5
    %v4272 = vsel %vm599, %v4267, %v4271
    %v4274 = vshrl.u32 %v3952, 16
    %v4276 = vrot.slane %v4274, 4
    %v4277 = vshll.u32 %v3952, 16
    %v4279 = vrot.slane %v4277, 5
    %v4280 = vor.u32 %v4276, %v4279
    %v4281 = vrot.slane %v4280, 4
    %v4283 = vshll.u32 %v3953, 16
    %v4285 = vrot.slane %v4283, 5
    %v4286 = vsel %vm599, %v4281, %v4285
    %v4287 = vshrl.u32 %v3953, 16
    %v4289 = vrot.slane %v4287, 4
    %v4290 = vor.u32 %v4289, %v4285
    %v4291 = vrot.slane %v4290, 4
    %v4293 = vshll.u32 %v3954, 16
    %v4295 = vrot.slane %v4293, 5
    %v4296 = vsel %vm599, %v4291, %v4295
    %v4298 = vshrl.u32 %v3955, 16
    %v4300 = vrot.slane %v4298, 4
    %v4301 = vshll.u32 %v3955, 16
    %v4303 = vrot.slane %v4301, 5
    %v4304 = vor.u32 %v4300, %v4303
    %v4305 = vrot.slane %v4304, 4
    %v4307 = vshll.u32 %v3956, 16
    %v4309 = vrot.slane %v4307, 5
    %v4310 = vsel %vm599, %v4305, %v4309
    %v4311 = vshrl.u32 %v3956, 16
    %v4313 = vrot.slane %v4311, 4
    %v4314 = vor.u32 %v4313, %v4309
    %v4315 = vrot.slane %v4314, 4
    %v4317 = vshll.u32 %v3957, 16
    %v4319 = vrot.slane %v4317, 5
    %v4320 = vsel %vm599, %v4315, %v4319
    %v4322 = vshrl.u32 %v3958, 16
    %v4324 = vrot.slane %v4322, 4
    %v4325 = vshll.u32 %v3958, 16
    %v4327 = vrot.slane %v4325, 5
    %v4328 = vor.u32 %v4324, %v4327
    %v4329 = vrot.slane %v4328, 4
    %v4331 = vshll.u32 %v3959, 16
    %v4333 = vrot.slane %v4331, 5
    %v4334 = vsel %vm599, %v4329, %v4333
    %v4335 = vshrl.u32 %v3959, 16
    %v4337 = vrot.slane %v4335, 4
    %v4338 = vor.u32 %v4337, %v4333
    %v4339 = vrot.slane %v4338, 4
    %v4341 = vshll.u32 %v3960, 16
    %v4343 = vrot.slane %v4341, 5
    %v4344 = vsel %vm599, %v4339, %v4343
    %s4345 = scalar_lea.vmem %s1, 14
    %v4346 = vld [vmem:[%s4345] sm:$0x3]
    %v4347 = vunpack.c.l.b16 %v3974
    %v4348 = vunpack.c.l.b16 %v3984
    %v4349 = vunpack.c.l.b16 %v3998
    %v4350 = vunpack.c.l.b16 %v4008
    %v4351 = vunpack.c.l.b16 %v4022
    %v4352 = vunpack.c.l.b16 %v4032
    %v4353 = vunpack.c.l.b16 %v4046
    %v4354 = vunpack.c.l.b16 %v4056
    %v4355 = vunpack.c.l.b16 %v4070
    %v4356 = vunpack.c.l.b16 %v4080
    %v4357 = vunpack.c.l.b16 %v4094
    %v4358 = vunpack.c.l.b16 %v4104
    %v4359 = vunpack.c.l.b16 %v4118
    %v4360 = vunpack.c.l.b16 %v4128
    %v4361 = vunpack.c.l.b16 %v4142
    %v4362 = vunpack.c.l.b16 %v4152
    %v4363 = vunpack.c.l.b16 %v4166
    %v4364 = vunpack.c.l.b16 %v4176
    %v4365 = vunpack.c.l.b16 %v4190
    %v4366 = vunpack.c.l.b16 %v4200
    %v4367 = vunpack.c.l.b16 %v4214
    %v4368 = vunpack.c.l.b16 %v4224
    %v4369 = vunpack.c.l.b16 %v4238
    %v4370 = vunpack.c.l.b16 %v4248
    %v4371 = vunpack.c.l.b16 %v4262
    %v4372 = vunpack.c.l.b16 %v4272
    %v4373 = vunpack.c.l.b16 %v4286
    %v4374 = vunpack.c.l.b16 %v4296
    %v4375 = vunpack.c.l.b16 %v4310
    %v4376 = vunpack.c.l.b16 %v4320
    %v4377 = vunpack.c.l.b16 %v4334
    %v4378 = vunpack.c.l.b16 %v4344
    %v4379 = vpack.c.b16 %v4348, %v4347
    %v4380 = vpack.c.b16 %v4350, %v4349
    %v4381 = vpack.c.b16 %v4352, %v4351
    %v4382 = vpack.c.b16 %v4354, %v4353
    %v4383 = vpack.c.b16 %v4356, %v4355
    %v4384 = vpack.c.b16 %v4358, %v4357
    %v4385 = vpack.c.b16 %v4360, %v4359
    %v4386 = vpack.c.b16 %v4362, %v4361
    %v4387 = vpack.c.b16 %v4364, %v4363
    %v4388 = vpack.c.b16 %v4366, %v4365
    %v4389 = vpack.c.b16 %v4368, %v4367
    %v4390 = vpack.c.b16 %v4370, %v4369
    %v4391 = vpack.c.b16 %v4372, %v4371
    %v4392 = vpack.c.b16 %v4374, %v4373
    %v4393 = vpack.c.b16 %v4376, %v4375
    %v4394 = vpack.c.b16 %v4378, %v4377
    %v4396 = vsel %vm1034, %v4379, 0
    %v4399 = vsel %vm1034, %v4380, 0
    %v4402 = vsel %vm1034, %v4381, 0
    %v4405 = vsel %vm1034, %v4382, 0
    %v4408 = vsel %vm1034, %v4383, 0
    %v4411 = vsel %vm1034, %v4384, 0
    %v4414 = vsel %vm1034, %v4385, 0
    %v4417 = vsel %vm1034, %v4386, 0
    %v4420 = vsel %vm1034, %v4387, 0
    %v4423 = vsel %vm1034, %v4388, 0
    %v4426 = vsel %vm1034, %v4389, 0
    %v4429 = vsel %vm1034, %v4390, 0
    %v4432 = vsel %vm1034, %v4391, 0
    %v4435 = vsel %vm1034, %v4392, 0
    %v4438 = vsel %vm1034, %v4393, 0
    %v4441 = vsel %vm1034, %v4394, 0
    %v4444 = vand.u32 %v4346, %v1086
    %4446 = vmatprep.subr.bf16.mxu0 0
    %4447 = vmatpush1.bf16.msra.mxu0 %v4444
    %4448 = vmatprep.subr.bf16.mxu0 0
    %4449 = vmatpush1.bf16.msra.mxu0 0
    %4450 = vmatprep.subr.bf16.mxu0 0
    %4451 = vmatpush1.bf16.msra.mxu0 0
    %4452 = vmatprep.subr.bf16.mxu0 0
    %4453 = vmatpush1.bf16.msra.mxu0 0
    %4454 = vmatprep.subr.bf16.mxu0 0
    %4455 = vmatpush1.bf16.msra.mxu0 0
    %4456 = vmatprep.subr.bf16.mxu0 0
    %4457 = vmatpush1.bf16.msra.mxu0 0
    %4458 = vmatprep.subr.bf16.mxu0 0
    %4459 = vmatpush1.bf16.msra.mxu0 0
    %4460 = vmatprep.subr.bf16.mxu0 0
    %4461 = vmatpush1.bf16.msra.mxu0 0
    %4462 = vmatprep.subr.bf16.mxu0 0
    %4463 = vmatpush1.bf16.msra.mxu0 0
    %4464 = vmatprep.subr.bf16.mxu0 0
    %4465 = vmatpush1.bf16.msra.mxu0 0
    %4466 = vmatprep.subr.bf16.mxu0 0
    %4467 = vmatpush1.bf16.msra.mxu0 0
    %4468 = vmatprep.subr.bf16.mxu0 0
    %4469 = vmatpush1.bf16.msra.mxu0 0
    %4470 = vmatprep.subr.bf16.mxu0 0
    %4471 = vmatpush1.bf16.msra.mxu0 0
    %4472 = vmatprep.subr.bf16.mxu0 0
    %4473 = vmatpush1.bf16.msra.mxu0 0
    %4474 = vmatprep.subr.bf16.mxu0 0
    %4475 = vmatpush1.bf16.msra.mxu0 0
    %4476 = vmatprep.subr.bf16.mxu0 0
    %4477 = vmatpush1.bf16.msra.mxu0 0
    %4478 = vmatprep.mubr.bf16.mxu0 0
    %4479 = vmatmul.mubr.bf16.gmra.mrb[0].mxu0 %v4396
    %v4480 = vpop.f32.mrb[0].mxu0
    %v4481 = vadd.f32 0.0, %v4480
    %v4482 = vpop.f32.mrb[0].mxu0
    %v4483 = vpop.f32.mrb[0].mxu0
    %v4484 = vadd.f32 0.0, %v4483
    %v4485 = vpop.f32.mrb[0].mxu0
    %4486 = vmatprep.mubr.bf16.mxu0 0
    %4487 = vmatmul.mubr.bf16.gmra.mrb[0].mxu0 %v4399
    %v4488 = vpop.f32.mrb[0].mxu0
    %v4489 = vadd.f32 0.0, %v4488
    %v4490 = vpop.f32.mrb[0].mxu0
    %v4491 = vpop.f32.mrb[0].mxu0
    %v4492 = vadd.f32 0.0, %v4491
    %v4493 = vpop.f32.mrb[0].mxu0
    %4494 = vmatprep.mubr.bf16.mxu0 0
    %4495 = vmatmul.mubr.bf16.gmra.mrb[0].mxu0 %v4402
    %v4496 = vpop.f32.mrb[0].mxu0
    %v4497 = vadd.f32 0.0, %v4496
    %v4498 = vpop.f32.mrb[0].mxu0
    %v4499 = vpop.f32.mrb[0].mxu0
    %v4500 = vadd.f32 0.0, %v4499
    %v4501 = vpop.f32.mrb[0].mxu0
    %4502 = vmatprep.mubr.bf16.mxu0 0
    %4503 = vmatmul.mubr.bf16.gmra.mrb[0].mxu0 %v4405
    %v4504 = vpop.f32.mrb[0].mxu0
    %v4505 = vadd.f32 0.0, %v4504
    %v4506 = vpop.f32.mrb[0].mxu0
    %v4507 = vpop.f32.mrb[0].mxu0
    %v4508 = vadd.f32 0.0, %v4507
    %v4509 = vpop.f32.mrb[0].mxu0
    %4510 = vmatprep.mubr.bf16.mxu0 0
    %4511 = vmatmul.mubr.bf16.gmra.mrb[0].mxu0 %v4408
    %v4512 = vpop.f32.mrb[0].mxu0
    %v4513 = vadd.f32 0.0, %v4512
    %v4514 = vpop.f32.mrb[0].mxu0
    %v4515 = vpop.f32.mrb[0].mxu0
    %v4516 = vadd.f32 0.0, %v4515
    %v4517 = vpop.f32.mrb[0].mxu0
    %4518 = vmatprep.mubr.bf16.mxu0 0
    %4519 = vmatmul.mubr.bf16.gmra.mrb[0].mxu0 %v4411
    %v4520 = vpop.f32.mrb[0].mxu0
    %v4521 = vadd.f32 0.0, %v4520
    %v4522 = vpop.f32.mrb[0].mxu0
    %v4523 = vpop.f32.mrb[0].mxu0
    %v4524 = vadd.f32 0.0, %v4523
    %v4525 = vpop.f32.mrb[0].mxu0
    %4526 = vmatprep.mubr.bf16.mxu0 0
    %4527 = vmatmul.mubr.bf16.gmra.mrb[0].mxu0 %v4414
    %v4528 = vpop.f32.mrb[0].mxu0
    %v4529 = vadd.f32 0.0, %v4528
    %v4530 = vpop.f32.mrb[0].mxu0
    %v4531 = vpop.f32.mrb[0].mxu0
    %v4532 = vadd.f32 0.0, %v4531
    %v4533 = vpop.f32.mrb[0].mxu0
    %4534 = vmatprep.mubr.bf16.mxu0 0
    %4535 = vmatmul.mubr.bf16.gmra.mrb[0].mxu0 %v4417
    %v4536 = vpop.f32.mrb[0].mxu0
    %v4537 = vadd.f32 0.0, %v4536
    %v4538 = vpop.f32.mrb[0].mxu0
    %v4539 = vpop.f32.mrb[0].mxu0
    %v4540 = vadd.f32 0.0, %v4539
    %v4541 = vpop.f32.mrb[0].mxu0
    %4542 = vmatprep.mubr.bf16.mxu0 0
    %4543 = vmatmul.mubr.bf16.gmra.mrb[0].mxu0 %v4420
    %v4544 = vpop.f32.mrb[0].mxu0
    %v4545 = vadd.f32 0.0, %v4544
    %v4546 = vpop.f32.mrb[0].mxu0
    %v4547 = vpop.f32.mrb[0].mxu0
    %v4548 = vadd.f32 0.0, %v4547
    %v4549 = vpop.f32.mrb[0].mxu0
    %4550 = vmatprep.mubr.bf16.mxu0 0
    %4551 = vmatmul.mubr.bf16.gmra.mrb[0].mxu0 %v4423
    %v4552 = vpop.f32.mrb[0].mxu0
    %v4553 = vadd.f32 0.0, %v4552
    %v4554 = vpop.f32.mrb[0].mxu0
    %v4555 = vpop.f32.mrb[0].mxu0
    %v4556 = vadd.f32 0.0, %v4555
    %v4557 = vpop.f32.mrb[0].mxu0
    %4558 = vmatprep.mubr.bf16.mxu0 0
    %4559 = vmatmul.mubr.bf16.gmra.mrb[0].mxu0 %v4426
    %v4560 = vpop.f32.mrb[0].mxu0
    %v4561 = vadd.f32 0.0, %v4560
    %v4562 = vpop.f32.mrb[0].mxu0
    %v4563 = vpop.f32.mrb[0].mxu0
    %v4564 = vadd.f32 0.0, %v4563
    %v4565 = vpop.f32.mrb[0].mxu0
    %4566 = vmatprep.mubr.bf16.mxu0 0
    %4567 = vmatmul.mubr.bf16.gmra.mrb[0].mxu0 %v4429
    %v4568 = vpop.f32.mrb[0].mxu0
    %v4569 = vadd.f32 0.0, %v4568
    %v4570 = vpop.f32.mrb[0].mxu0
    %v4571 = vpop.f32.mrb[0].mxu0
    %v4572 = vadd.f32 0.0, %v4571
    %v4573 = vpop.f32.mrb[0].mxu0
    %4574 = vmatprep.mubr.bf16.mxu0 0
    %4575 = vmatmul.mubr.bf16.gmra.mrb[0].mxu0 %v4432
    %v4576 = vpop.f32.mrb[0].mxu0
    %v4577 = vadd.f32 0.0, %v4576
    %v4578 = vpop.f32.mrb[0].mxu0
    %v4579 = vpop.f32.mrb[0].mxu0
    %v4580 = vadd.f32 0.0, %v4579
    %v4581 = vpop.f32.mrb[0].mxu0
    %4582 = vmatprep.mubr.bf16.mxu0 0
    %4583 = vmatmul.mubr.bf16.gmra.mrb[0].mxu0 %v4435
    %v4584 = vpop.f32.mrb[0].mxu0
    %v4585 = vadd.f32 0.0, %v4584
    %v4586 = vpop.f32.mrb[0].mxu0
    %v4587 = vpop.f32.mrb[0].mxu0
    %v4588 = vadd.f32 0.0, %v4587
    %v4589 = vpop.f32.mrb[0].mxu0
    %4590 = vmatprep.mubr.bf16.mxu0 0
    %4591 = vmatmul.mubr.bf16.gmra.mrb[0].mxu0 %v4438
    %v4592 = vpop.f32.mrb[0].mxu0
    %v4593 = vadd.f32 0.0, %v4592
    %v4594 = vpop.f32.mrb[0].mxu0
    %v4595 = vpop.f32.mrb[0].mxu0
    %v4596 = vadd.f32 0.0, %v4595
    %v4597 = vpop.f32.mrb[0].mxu0
    %4598 = vmatprep.mubr.bf16.mxu0 0
    %4599 = vmatmul.mubr.bf16.gmra.mrb[0].mxu0 %v4441
    %v4600 = vpop.f32.mrb[0].mxu0
    %v4601 = vadd.f32 0.0, %v4600
    %v4602 = vpop.f32.mrb[0].mxu0
    %v4603 = vpop.f32.mrb[0].mxu0
    %v4604 = vadd.f32 0.0, %v4603
    %v4605 = vpop.f32.mrb[0].mxu0
    %4606 = vdwg.mxu0
    %v4607 = vadd.f32 %v3881, %v4481
    %v4608 = vadd.f32 %v3882, %v4484
    %v4609 = vadd.f32 %v3883, %v4489
    %v4610 = vadd.f32 %v3884, %v4492
    %v4611 = vadd.f32 %v3885, %v4497
    %v4612 = vadd.f32 %v3886, %v4500
    %v4613 = vadd.f32 %v3887, %v4505
    %v4614 = vadd.f32 %v3888, %v4508
    %v4615 = vadd.f32 %v3889, %v4513
    %v4616 = vadd.f32 %v3890, %v4516
    %v4617 = vadd.f32 %v3891, %v4521
    %v4618 = vadd.f32 %v3892, %v4524
    %v4619 = vadd.f32 %v3893, %v4529
    %v4620 = vadd.f32 %v3894, %v4532
    %v4621 = vadd.f32 %v3895, %v4537
    %v4622 = vadd.f32 %v3896, %v4540
    %v4623 = vadd.f32 %v3897, %v4545
    %v4624 = vadd.f32 %v3898, %v4548
    %v4625 = vadd.f32 %v3899, %v4553
    %v4626 = vadd.f32 %v3900, %v4556
    %v4627 = vadd.f32 %v3901, %v4561
    %v4628 = vadd.f32 %v3902, %v4564
    %v4629 = vadd.f32 %v3903, %v4569
    %v4630 = vadd.f32 %v3904, %v4572
    %v4631 = vadd.f32 %v3905, %v4577
    %v4632 = vadd.f32 %v3906, %v4580
    %v4633 = vadd.f32 %v3907, %v4585
    %v4634 = vadd.f32 %v3908, %v4588
    %v4635 = vadd.f32 %v3909, %v4593
    %v4636 = vadd.f32 %v3910, %v4596
    %v4637 = vadd.f32 %v3911, %v4601
    %v4638 = vadd.f32 %v3912, %v4604
    %v4639 = vld [vmem:[%s3554] sm:$0xe]
    %v4640 = vld [vmem:[%s3554 + $0xc] sm:$0xe]
    %v4641 = vld [vmem:[%s3554 + $0x18] sm:$0xe]
    %v4642 = vld [vmem:[%s3554 + $0x24] sm:$0xe]
    %v4643 = vld [vmem:[%s3554 + $0x30] sm:$0xe]
    %v4644 = vld [vmem:[%s3554 + $0x3c] sm:$0xe]
    %v4645 = vld [vmem:[%s3554 + $0x48] sm:$0xe]
    %v4646 = vld [vmem:[%s3554 + $0x54] sm:$0xe]
    %v4647 = vld [vmem:[%s3554 + $0x60] sm:$0xe]
    %v4648 = vld [vmem:[%s3554 + $0x6c] sm:$0xe]
    %v4649 = vld [vmem:[%s3554 + $0x78] sm:$0xe]
    %v4650 = vld [vmem:[%s3554 + $0x84] sm:$0xe]
    %v4651 = vld [vmem:[%s3554 + $0x90] sm:$0xe]
    %v4652 = vld [vmem:[%s3554 + $0x9c] sm:$0xe]
    %v4653 = vld [vmem:[%s3554 + $0xa8] sm:$0xe]
    %v4654 = vld [vmem:[%s3554 + $0xb4] sm:$0xe]
    %v4703 = vrot.slane %v4639, 5
    %v4704 = vrot.slane %v4703, 4
    %v4705 = vrot.slane %v3914, 5
    %v4706 = vsel %vm1593, %v4704, %v4705
    %v4707 = vrot.slane %v4705, 4
    %v4708 = vrot.slane %v3915, 5
    %v4709 = vsel %vm1593, %v4707, %v4708
    %v4710 = vrot.slane %v4640, 5
    %v4711 = vrot.slane %v4710, 4
    %v4712 = vrot.slane %v3917, 5
    %v4713 = vsel %vm1593, %v4711, %v4712
    %v4714 = vrot.slane %v4712, 4
    %v4715 = vrot.slane %v3918, 5
    %v4716 = vsel %vm1593, %v4714, %v4715
    %v4717 = vrot.slane %v4641, 5
    %v4718 = vrot.slane %v4717, 4
    %v4719 = vrot.slane %v3920, 5
    %v4720 = vsel %vm1593, %v4718, %v4719
    %v4721 = vrot.slane %v4719, 4
    %v4722 = vrot.slane %v3921, 5
    %v4723 = vsel %vm1593, %v4721, %v4722
    %v4724 = vrot.slane %v4642, 5
    %v4725 = vrot.slane %v4724, 4
    %v4726 = vrot.slane %v3923, 5
    %v4727 = vsel %vm1593, %v4725, %v4726
    %v4728 = vrot.slane %v4726, 4
    %v4729 = vrot.slane %v3924, 5
    %v4730 = vsel %vm1593, %v4728, %v4729
    %v4731 = vrot.slane %v4643, 5
    %v4732 = vrot.slane %v4731, 4
    %v4733 = vrot.slane %v3926, 5
    %v4734 = vsel %vm1593, %v4732, %v4733
    %v4735 = vrot.slane %v4733, 4
    %v4736 = vrot.slane %v3927, 5
    %v4737 = vsel %vm1593, %v4735, %v4736
    %v4738 = vrot.slane %v4644, 5
    %v4739 = vrot.slane %v4738, 4
    %v4740 = vrot.slane %v3929, 5
    %v4741 = vsel %vm1593, %v4739, %v4740
    %v4742 = vrot.slane %v4740, 4
    %v4743 = vrot.slane %v3930, 5
    %v4744 = vsel %vm1593, %v4742, %v4743
    %v4745 = vrot.slane %v4645, 5
    %v4746 = vrot.slane %v4745, 4
    %v4747 = vrot.slane %v3932, 5
    %v4748 = vsel %vm1593, %v4746, %v4747
    %v4749 = vrot.slane %v4747, 4
    %v4750 = vrot.slane %v3933, 5
    %v4751 = vsel %vm1593, %v4749, %v4750
    %v4752 = vrot.slane %v4646, 5
    %v4753 = vrot.slane %v4752, 4
    %v4754 = vrot.slane %v3935, 5
    %v4755 = vsel %vm1593, %v4753, %v4754
    %v4756 = vrot.slane %v4754, 4
    %v4757 = vrot.slane %v3936, 5
    %v4758 = vsel %vm1593, %v4756, %v4757
    %v4759 = vrot.slane %v4647, 5
    %v4760 = vrot.slane %v4759, 4
    %v4761 = vrot.slane %v3938, 5
    %v4762 = vsel %vm1593, %v4760, %v4761
    %v4763 = vrot.slane %v4761, 4
    %v4764 = vrot.slane %v3939, 5
    %v4765 = vsel %vm1593, %v4763, %v4764
    %v4766 = vrot.slane %v4648, 5
    %v4767 = vrot.slane %v4766, 4
    %v4768 = vrot.slane %v3941, 5
    %v4769 = vsel %vm1593, %v4767, %v4768
    %v4770 = vrot.slane %v4768, 4
    %v4771 = vrot.slane %v3942, 5
    %v4772 = vsel %vm1593, %v4770, %v4771
    %v4773 = vrot.slane %v4649, 5
    %v4774 = vrot.slane %v4773, 4
    %v4775 = vrot.slane %v3944, 5
    %v4776 = vsel %vm1593, %v4774, %v4775
    %v4777 = vrot.slane %v4775, 4
    %v4778 = vrot.slane %v3945, 5
    %v4779 = vsel %vm1593, %v4777, %v4778
    %v4780 = vrot.slane %v4650, 5
    %v4781 = vrot.slane %v4780, 4
    %v4782 = vrot.slane %v3947, 5
    %v4783 = vsel %vm1593, %v4781, %v4782
    %v4784 = vrot.slane %v4782, 4
    %v4785 = vrot.slane %v3948, 5
    %v4786 = vsel %vm1593, %v4784, %v4785
    %v4787 = vrot.slane %v4651, 5
    %v4788 = vrot.slane %v4787, 4
    %v4789 = vrot.slane %v3950, 5
    %v4790 = vsel %vm1593, %v4788, %v4789
    %v4791 = vrot.slane %v4789, 4
    %v4792 = vrot.slane %v3951, 5
    %v4793 = vsel %vm1593, %v4791, %v4792
    %v4794 = vrot.slane %v4652, 5
    %v4795 = vrot.slane %v4794, 4
    %v4796 = vrot.slane %v3953, 5
    %v4797 = vsel %vm1593, %v4795, %v4796
    %v4798 = vrot.slane %v4796, 4
    %v4799 = vrot.slane %v3954, 5
    %v4800 = vsel %vm1593, %v4798, %v4799
    %v4801 = vrot.slane %v4653, 5
    %v4802 = vrot.slane %v4801, 4
    %v4803 = vrot.slane %v3956, 5
    %v4804 = vsel %vm1593, %v4802, %v4803
    %v4805 = vrot.slane %v4803, 4
    %v4806 = vrot.slane %v3957, 5
    %v4807 = vsel %vm1593, %v4805, %v4806
    %v4808 = vrot.slane %v4654, 5
    %v4809 = vrot.slane %v4808, 4
    %v4810 = vrot.slane %v3959, 5
    %v4811 = vsel %vm1593, %v4809, %v4810
    %v4812 = vrot.slane %v4810, 4
    %v4813 = vrot.slane %v3960, 5
    %v4814 = vsel %vm1593, %v4812, %v4813
    %s4815 = scalar_lea.vmem %s1, 16
    %v4816 = vld [vmem:[%s4815] sm:$0x3]
    %v4817 = vunpack.c.l.b16 %v4706
    %v4818 = vunpack.c.l.b16 %v4709
    %v4819 = vunpack.c.l.b16 %v4713
    %v4820 = vunpack.c.l.b16 %v4716
    %v4821 = vunpack.c.l.b16 %v4720
    %v4822 = vunpack.c.l.b16 %v4723
    %v4823 = vunpack.c.l.b16 %v4727
    %v4824 = vunpack.c.l.b16 %v4730
    %v4825 = vunpack.c.l.b16 %v4734
    %v4826 = vunpack.c.l.b16 %v4737
    %v4827 = vunpack.c.l.b16 %v4741
    %v4828 = vunpack.c.l.b16 %v4744
    %v4829 = vunpack.c.l.b16 %v4748
    %v4830 = vunpack.c.l.b16 %v4751
    %v4831 = vunpack.c.l.b16 %v4755
    %v4832 = vunpack.c.l.b16 %v4758
    %v4833 = vunpack.c.l.b16 %v4762
    %v4834 = vunpack.c.l.b16 %v4765
    %v4835 = vunpack.c.l.b16 %v4769
    %v4836 = vunpack.c.l.b16 %v4772
    %v4837 = vunpack.c.l.b16 %v4776
    %v4838 = vunpack.c.l.b16 %v4779
    %v4839 = vunpack.c.l.b16 %v4783
    %v4840 = vunpack.c.l.b16 %v4786
    %v4841 = vunpack.c.l.b16 %v4790
    %v4842 = vunpack.c.l.b16 %v4793
    %v4843 = vunpack.c.l.b16 %v4797
    %v4844 = vunpack.c.l.b16 %v4800
    %v4845 = vunpack.c.l.b16 %v4804
    %v4846 = vunpack.c.l.b16 %v4807
    %v4847 = vunpack.c.l.b16 %v4811
    %v4848 = vunpack.c.l.b16 %v4814
    %v4849 = vpack.c.b16 %v4818, %v4817
    %v4850 = vpack.c.b16 %v4820, %v4819
    %v4851 = vpack.c.b16 %v4822, %v4821
    %v4852 = vpack.c.b16 %v4824, %v4823
    %v4853 = vpack.c.b16 %v4826, %v4825
    %v4854 = vpack.c.b16 %v4828, %v4827
    %v4855 = vpack.c.b16 %v4830, %v4829
    %v4856 = vpack.c.b16 %v4832, %v4831
    %v4857 = vpack.c.b16 %v4834, %v4833
    %v4858 = vpack.c.b16 %v4836, %v4835
    %v4859 = vpack.c.b16 %v4838, %v4837
    %v4860 = vpack.c.b16 %v4840, %v4839
    %v4861 = vpack.c.b16 %v4842, %v4841
    %v4862 = vpack.c.b16 %v4844, %v4843
    %v4863 = vpack.c.b16 %v4846, %v4845
    %v4864 = vpack.c.b16 %v4848, %v4847
    %v4866 = vsel %vm1034, %v4849, 0
    %v4869 = vsel %vm1034, %v4850, 0
    %v4872 = vsel %vm1034, %v4851, 0
    %v4875 = vsel %vm1034, %v4852, 0
    %v4878 = vsel %vm1034, %v4853, 0
    %v4881 = vsel %vm1034, %v4854, 0
    %v4884 = vsel %vm1034, %v4855, 0
    %v4887 = vsel %vm1034, %v4856, 0
    %v4890 = vsel %vm1034, %v4857, 0
    %v4893 = vsel %vm1034, %v4858, 0
    %v4896 = vsel %vm1034, %v4859, 0
    %v4899 = vsel %vm1034, %v4860, 0
    %v4902 = vsel %vm1034, %v4861, 0
    %v4905 = vsel %vm1034, %v4862, 0
    %v4908 = vsel %vm1034, %v4863, 0
    %v4911 = vsel %vm1034, %v4864, 0
    %v4914 = vand.u32 %v4816, %v1086
    %4916 = vmatprep.subr.bf16.mxu0 0
    %4917 = vmatpush1.bf16.msra.mxu0 %v4914
    %4918 = vmatprep.subr.bf16.mxu0 0
    %4919 = vmatpush1.bf16.msra.mxu0 0
    %4920 = vmatprep.subr.bf16.mxu0 0
    %4921 = vmatpush1.bf16.msra.mxu0 0
    %4922 = vmatprep.subr.bf16.mxu0 0
    %4923 = vmatpush1.bf16.msra.mxu0 0
    %4924 = vmatprep.subr.bf16.mxu0 0
    %4925 = vmatpush1.bf16.msra.mxu0 0
    %4926 = vmatprep.subr.bf16.mxu0 0
    %4927 = vmatpush1.bf16.msra.mxu0 0
    %4928 = vmatprep.subr.bf16.mxu0 0
    %4929 = vmatpush1.bf16.msra.mxu0 0
    %4930 = vmatprep.subr.bf16.mxu0 0
    %4931 = vmatpush1.bf16.msra.mxu0 0
    %4932 = vmatprep.subr.bf16.mxu0 0
    %4933 = vmatpush1.bf16.msra.mxu0 0
    %4934 = vmatprep.subr.bf16.mxu0 0
    %4935 = vmatpush1.bf16.msra.mxu0 0
    %4936 = vmatprep.subr.bf16.mxu0 0
    %4937 = vmatpush1.bf16.msra.mxu0 0
    %4938 = vmatprep.subr.bf16.mxu0 0
    %4939 = vmatpush1.bf16.msra.mxu0 0
    %4940 = vmatprep.subr.bf16.mxu0 0
    %4941 = vmatpush1.bf16.msra.mxu0 0
    %4942 = vmatprep.subr.bf16.mxu0 0
    %4943 = vmatpush1.bf16.msra.mxu0 0
    %4944 = vmatprep.subr.bf16.mxu0 0
    %4945 = vmatpush1.bf16.msra.mxu0 0
    %4946 = vmatprep.subr.bf16.mxu0 0
    %4947 = vmatpush1.bf16.msra.mxu0 0
    %4948 = vmatprep.mubr.bf16.mxu0 0
    %4949 = vmatmul.mubr.bf16.gmra.mrb[0].mxu0 %v4866
    %v4950 = vpop.f32.mrb[0].mxu0
    %v4951 = vadd.f32 0.0, %v4950
    %v4952 = vpop.f32.mrb[0].mxu0
    %v4953 = vpop.f32.mrb[0].mxu0
    %v4954 = vadd.f32 0.0, %v4953
    %v4955 = vpop.f32.mrb[0].mxu0
    %4956 = vmatprep.mubr.bf16.mxu0 0
    %4957 = vmatmul.mubr.bf16.gmra.mrb[0].mxu0 %v4869
    %v4958 = vpop.f32.mrb[0].mxu0
    %v4959 = vadd.f32 0.0, %v4958
    %v4960 = vpop.f32.mrb[0].mxu0
    %v4961 = vpop.f32.mrb[0].mxu0
    %v4962 = vadd.f32 0.0, %v4961
    %v4963 = vpop.f32.mrb[0].mxu0
    %4964 = vmatprep.mubr.bf16.mxu0 0
    %4965 = vmatmul.mubr.bf16.gmra.mrb[0].mxu0 %v4872
    %v4966 = vpop.f32.mrb[0].mxu0
    %v4967 = vadd.f32 0.0, %v4966
    %v4968 = vpop.f32.mrb[0].mxu0
    %v4969 = vpop.f32.mrb[0].mxu0
    %v4970 = vadd.f32 0.0, %v4969
    %v4971 = vpop.f32.mrb[0].mxu0
    %4972 = vmatprep.mubr.bf16.mxu0 0
    %4973 = vmatmul.mubr.bf16.gmra.mrb[0].mxu0 %v4875
    %v4974 = vpop.f32.mrb[0].mxu0
    %v4975 = vadd.f32 0.0, %v4974
    %v4976 = vpop.f32.mrb[0].mxu0
    %v4977 = vpop.f32.mrb[0].mxu0
    %v4978 = vadd.f32 0.0, %v4977
    %v4979 = vpop.f32.mrb[0].mxu0
    %4980 = vmatprep.mubr.bf16.mxu0 0
    %4981 = vmatmul.mubr.bf16.gmra.mrb[0].mxu0 %v4878
    %v4982 = vpop.f32.mrb[0].mxu0
    %v4983 = vadd.f32 0.0, %v4982
    %v4984 = vpop.f32.mrb[0].mxu0
    %v4985 = vpop.f32.mrb[0].mxu0
    %v4986 = vadd.f32 0.0, %v4985
    %v4987 = vpop.f32.mrb[0].mxu0
    %4988 = vmatprep.mubr.bf16.mxu0 0
    %4989 = vmatmul.mubr.bf16.gmra.mrb[0].mxu0 %v4881
    %v4990 = vpop.f32.mrb[0].mxu0
    %v4991 = vadd.f32 0.0, %v4990
    %v4992 = vpop.f32.mrb[0].mxu0
    %v4993 = vpop.f32.mrb[0].mxu0
    %v4994 = vadd.f32 0.0, %v4993
    %v4995 = vpop.f32.mrb[0].mxu0
    %4996 = vmatprep.mubr.bf16.mxu0 0
    %4997 = vmatmul.mubr.bf16.gmra.mrb[0].mxu0 %v4884
    %v4998 = vpop.f32.mrb[0].mxu0
    %v4999 = vadd.f32 0.0, %v4998
    %v5000 = vpop.f32.mrb[0].mxu0
    %v5001 = vpop.f32.mrb[0].mxu0
    %v5002 = vadd.f32 0.0, %v5001
    %v5003 = vpop.f32.mrb[0].mxu0
    %5004 = vmatprep.mubr.bf16.mxu0 0
    %5005 = vmatmul.mubr.bf16.gmra.mrb[0].mxu0 %v4887
    %v5006 = vpop.f32.mrb[0].mxu0
    %v5007 = vadd.f32 0.0, %v5006
    %v5008 = vpop.f32.mrb[0].mxu0
    %v5009 = vpop.f32.mrb[0].mxu0
    %v5010 = vadd.f32 0.0, %v5009
    %v5011 = vpop.f32.mrb[0].mxu0
    %5012 = vmatprep.mubr.bf16.mxu0 0
    %5013 = vmatmul.mubr.bf16.gmra.mrb[0].mxu0 %v4890
    %v5014 = vpop.f32.mrb[0].mxu0
    %v5015 = vadd.f32 0.0, %v5014
    %v5016 = vpop.f32.mrb[0].mxu0
    %v5017 = vpop.f32.mrb[0].mxu0
    %v5018 = vadd.f32 0.0, %v5017
    %v5019 = vpop.f32.mrb[0].mxu0
    %5020 = vmatprep.mubr.bf16.mxu0 0
    %5021 = vmatmul.mubr.bf16.gmra.mrb[0].mxu0 %v4893
    %v5022 = vpop.f32.mrb[0].mxu0
    %v5023 = vadd.f32 0.0, %v5022
    %v5024 = vpop.f32.mrb[0].mxu0
    %v5025 = vpop.f32.mrb[0].mxu0
    %v5026 = vadd.f32 0.0, %v5025
    %v5027 = vpop.f32.mrb[0].mxu0
    %5028 = vmatprep.mubr.bf16.mxu0 0
    %5029 = vmatmul.mubr.bf16.gmra.mrb[0].mxu0 %v4896
    %v5030 = vpop.f32.mrb[0].mxu0
    %v5031 = vadd.f32 0.0, %v5030
    %v5032 = vpop.f32.mrb[0].mxu0
    %v5033 = vpop.f32.mrb[0].mxu0
    %v5034 = vadd.f32 0.0, %v5033
    %v5035 = vpop.f32.mrb[0].mxu0
    %5036 = vmatprep.mubr.bf16.mxu0 0
    %5037 = vmatmul.mubr.bf16.gmra.mrb[0].mxu0 %v4899
    %v5038 = vpop.f32.mrb[0].mxu0
    %v5039 = vadd.f32 0.0, %v5038
    %v5040 = vpop.f32.mrb[0].mxu0
    %v5041 = vpop.f32.mrb[0].mxu0
    %v5042 = vadd.f32 0.0, %v5041
    %v5043 = vpop.f32.mrb[0].mxu0
    %5044 = vmatprep.mubr.bf16.mxu0 0
    %5045 = vmatmul.mubr.bf16.gmra.mrb[0].mxu0 %v4902
    %v5046 = vpop.f32.mrb[0].mxu0
    %v5047 = vadd.f32 0.0, %v5046
    %v5048 = vpop.f32.mrb[0].mxu0
    %v5049 = vpop.f32.mrb[0].mxu0
    %v5050 = vadd.f32 0.0, %v5049
    %v5051 = vpop.f32.mrb[0].mxu0
    %5052 = vmatprep.mubr.bf16.mxu0 0
    %5053 = vmatmul.mubr.bf16.gmra.mrb[0].mxu0 %v4905
    %v5054 = vpop.f32.mrb[0].mxu0
    %v5055 = vadd.f32 0.0, %v5054
    %v5056 = vpop.f32.mrb[0].mxu0
    %v5057 = vpop.f32.mrb[0].mxu0
    %v5058 = vadd.f32 0.0, %v5057
    %v5059 = vpop.f32.mrb[0].mxu0
    %5060 = vmatprep.mubr.bf16.mxu0 0
    %5061 = vmatmul.mubr.bf16.gmra.mrb[0].mxu0 %v4908
    %v5062 = vpop.f32.mrb[0].mxu0
    %v5063 = vadd.f32 0.0, %v5062
    %v5064 = vpop.f32.mrb[0].mxu0
    %v5065 = vpop.f32.mrb[0].mxu0
    %v5066 = vadd.f32 0.0, %v5065
    %v5067 = vpop.f32.mrb[0].mxu0
    %5068 = vmatprep.mubr.bf16.mxu0 0
    %5069 = vmatmul.mubr.bf16.gmra.mrb[0].mxu0 %v4911
    %v5070 = vpop.f32.mrb[0].mxu0
    %v5071 = vadd.f32 0.0, %v5070
    %v5072 = vpop.f32.mrb[0].mxu0
    %v5073 = vpop.f32.mrb[0].mxu0
    %v5074 = vadd.f32 0.0, %v5073
    %v5075 = vpop.f32.mrb[0].mxu0
    %5076 = vdwg.mxu0
    %v5077 = vadd.f32 %v4607, %v4951
    %v5078 = vadd.f32 %v4608, %v4954
    %v5079 = vadd.f32 %v4609, %v4959
    %v5080 = vadd.f32 %v4610, %v4962
    %v5081 = vadd.f32 %v4611, %v4967
    %v5082 = vadd.f32 %v4612, %v4970
    %v5083 = vadd.f32 %v4613, %v4975
    %v5084 = vadd.f32 %v4614, %v4978
    %v5085 = vadd.f32 %v4615, %v4983
    %v5086 = vadd.f32 %v4616, %v4986
    %v5087 = vadd.f32 %v4617, %v4991
    %v5088 = vadd.f32 %v4618, %v4994
    %v5089 = vadd.f32 %v4619, %v4999
    %v5090 = vadd.f32 %v4620, %v5002
    %v5091 = vadd.f32 %v4621, %v5007
    %v5092 = vadd.f32 %v4622, %v5010
    %v5093 = vadd.f32 %v4623, %v5015
    %v5094 = vadd.f32 %v4624, %v5018
    %v5095 = vadd.f32 %v4625, %v5023
    %v5096 = vadd.f32 %v4626, %v5026
    %v5097 = vadd.f32 %v4627, %v5031
    %v5098 = vadd.f32 %v4628, %v5034
    %v5099 = vadd.f32 %v4629, %v5039
    %v5100 = vadd.f32 %v4630, %v5042
    %v5101 = vadd.f32 %v4631, %v5047
    %v5102 = vadd.f32 %v4632, %v5050
    %v5103 = vadd.f32 %v4633, %v5055
    %v5104 = vadd.f32 %v4634, %v5058
    %v5105 = vadd.f32 %v4635, %v5063
    %v5106 = vadd.f32 %v4636, %v5066
    %v5107 = vadd.f32 %v4637, %v5071
    %v5108 = vadd.f32 %v4638, %v5074
    %v5109 = vld [vmem:[%s2] sm:$0x1]
    %v5111 = vlaneseq
    %v5112 = vshrl.u32 %v5111, 7
    %v5113 = vsub.s32 0, %v5112
    %v5114 = vrot.slane %v5109, %v5113
    %v5116 = vmul.f32 %v5077, %v5114
    %v5117 = vmul.f32 %v5078, %v5114
    %v5118 = vmul.f32 %v5079, %v5114
    %v5119 = vmul.f32 %v5080, %v5114
    %v5120 = vmul.f32 %v5081, %v5114
    %v5121 = vmul.f32 %v5082, %v5114
    %v5122 = vmul.f32 %v5083, %v5114
    %v5123 = vmul.f32 %v5084, %v5114
    %v5124 = vmul.f32 %v5085, %v5114
    %v5125 = vmul.f32 %v5086, %v5114
    %v5126 = vmul.f32 %v5087, %v5114
    %v5127 = vmul.f32 %v5088, %v5114
    %v5128 = vmul.f32 %v5089, %v5114
    %v5129 = vmul.f32 %v5090, %v5114
    %v5130 = vmul.f32 %v5091, %v5114
    %v5131 = vmul.f32 %v5092, %v5114
    %v5132 = vmul.f32 %v5093, %v5114
    %v5133 = vmul.f32 %v5094, %v5114
    %v5134 = vmul.f32 %v5095, %v5114
    %v5135 = vmul.f32 %v5096, %v5114
    %v5136 = vmul.f32 %v5097, %v5114
    %v5137 = vmul.f32 %v5098, %v5114
    %v5138 = vmul.f32 %v5099, %v5114
    %v5139 = vmul.f32 %v5100, %v5114
    %v5140 = vmul.f32 %v5101, %v5114
    %v5141 = vmul.f32 %v5102, %v5114
    %v5142 = vmul.f32 %v5103, %v5114
    %v5143 = vmul.f32 %v5104, %v5114
    %v5144 = vmul.f32 %v5105, %v5114
    %v5145 = vmul.f32 %v5106, %v5114
    %v5146 = vmul.f32 %v5107, %v5114
    %v5147 = vmul.f32 %v5108, %v5114
    %v5148 = vld [vmem:[%s3] sm:$0x1]
    %v5150 = vlaneseq
    %v5151 = vshrl.u32 %v5150, 7
    %v5152 = vsub.s32 0, %v5151
    %v5153 = vrot.slane %v5148, %v5152
    %v5155 = vadd.f32 %v5116, %v5153
    %v5156 = vadd.f32 %v5117, %v5153
    %v5157 = vadd.f32 %v5118, %v5153
    %v5158 = vadd.f32 %v5119, %v5153
    %v5159 = vadd.f32 %v5120, %v5153
    %v5160 = vadd.f32 %v5121, %v5153
    %v5161 = vadd.f32 %v5122, %v5153
    %v5162 = vadd.f32 %v5123, %v5153
    %v5163 = vadd.f32 %v5124, %v5153
    %v5164 = vadd.f32 %v5125, %v5153
    %v5165 = vadd.f32 %v5126, %v5153
    %v5166 = vadd.f32 %v5127, %v5153
    %v5167 = vadd.f32 %v5128, %v5153
    %v5168 = vadd.f32 %v5129, %v5153
    %v5169 = vadd.f32 %v5130, %v5153
    %v5170 = vadd.f32 %v5131, %v5153
    %v5171 = vadd.f32 %v5132, %v5153
    %v5172 = vadd.f32 %v5133, %v5153
    %v5173 = vadd.f32 %v5134, %v5153
    %v5174 = vadd.f32 %v5135, %v5153
    %v5175 = vadd.f32 %v5136, %v5153
    %v5176 = vadd.f32 %v5137, %v5153
    %v5177 = vadd.f32 %v5138, %v5153
    %v5178 = vadd.f32 %v5139, %v5153
    %v5179 = vadd.f32 %v5140, %v5153
    %v5180 = vadd.f32 %v5141, %v5153
    %v5181 = vadd.f32 %v5142, %v5153
    %v5182 = vadd.f32 %v5143, %v5153
    %v5183 = vadd.f32 %v5144, %v5153
    %v5184 = vadd.f32 %v5145, %v5153
    %v5185 = vadd.f32 %v5146, %v5153
    %v5186 = vadd.f32 %v5147, %v5153
    %v5187 = vmax.f32 %v5155, 0.0
    %v5188 = vmax.f32 %v5156, 0.0
    %v5189 = vmax.f32 %v5157, 0.0
    %v5190 = vmax.f32 %v5158, 0.0
    %v5191 = vmax.f32 %v5159, 0.0
    %v5192 = vmax.f32 %v5160, 0.0
    %v5193 = vmax.f32 %v5161, 0.0
    %v5194 = vmax.f32 %v5162, 0.0
    %v5195 = vmax.f32 %v5163, 0.0
    %v5196 = vmax.f32 %v5164, 0.0
    %v5197 = vmax.f32 %v5165, 0.0
    %v5198 = vmax.f32 %v5166, 0.0
    %v5199 = vmax.f32 %v5167, 0.0
    %v5200 = vmax.f32 %v5168, 0.0
    %v5201 = vmax.f32 %v5169, 0.0
    %v5202 = vmax.f32 %v5170, 0.0
    %v5203 = vmax.f32 %v5171, 0.0
    %v5204 = vmax.f32 %v5172, 0.0
    %v5205 = vmax.f32 %v5173, 0.0
    %v5206 = vmax.f32 %v5174, 0.0
    %v5207 = vmax.f32 %v5175, 0.0
    %v5208 = vmax.f32 %v5176, 0.0
    %v5209 = vmax.f32 %v5177, 0.0
    %v5210 = vmax.f32 %v5178, 0.0
    %v5211 = vmax.f32 %v5179, 0.0
    %v5212 = vmax.f32 %v5180, 0.0
    %v5213 = vmax.f32 %v5181, 0.0
    %v5214 = vmax.f32 %v5182, 0.0
    %v5215 = vmax.f32 %v5183, 0.0
    %v5216 = vmax.f32 %v5184, 0.0
    %v5217 = vmax.f32 %v5185, 0.0
    %v5218 = vmax.f32 %v5186, 0.0
    %v5219 = vpack.c.bf16 %v5188, %v5187
    %v5220 = vpack.c.bf16 %v5190, %v5189
    %v5221 = vpack.c.bf16 %v5192, %v5191
    %v5222 = vpack.c.bf16 %v5194, %v5193
    %v5223 = vpack.c.bf16 %v5196, %v5195
    %v5224 = vpack.c.bf16 %v5198, %v5197
    %v5225 = vpack.c.bf16 %v5200, %v5199
    %v5226 = vpack.c.bf16 %v5202, %v5201
    %v5227 = vpack.c.bf16 %v5204, %v5203
    %v5228 = vpack.c.bf16 %v5206, %v5205
    %v5229 = vpack.c.bf16 %v5208, %v5207
    %v5230 = vpack.c.bf16 %v5210, %v5209
    %v5231 = vpack.c.bf16 %v5212, %v5211
    %v5232 = vpack.c.bf16 %v5214, %v5213
    %v5233 = vpack.c.bf16 %v5216, %v5215
    %v5234 = vpack.c.bf16 %v5218, %v5217
    %v5251 = vunpack.c.l.b16 %v5219
    %v5252 = vunpack.c.h.b16 %v5219
    %v5253 = vunpack.c.l.b16 %v5220
    %v5254 = vunpack.c.h.b16 %v5220
    %v5255 = vunpack.c.l.b16 %v5221
    %v5256 = vunpack.c.h.b16 %v5221
    %v5257 = vunpack.c.l.b16 %v5222
    %v5258 = vunpack.c.h.b16 %v5222
    %v5259 = vunpack.c.l.b16 %v5223
    %v5260 = vunpack.c.h.b16 %v5223
    %v5261 = vunpack.c.l.b16 %v5224
    %v5262 = vunpack.c.h.b16 %v5224
    %v5263 = vunpack.c.l.b16 %v5225
    %v5264 = vunpack.c.h.b16 %v5225
    %v5265 = vunpack.c.l.b16 %v5226
    %v5266 = vunpack.c.h.b16 %v5226
    %v5267 = vunpack.c.l.b16 %v5227
    %v5268 = vunpack.c.h.b16 %v5227
    %v5269 = vunpack.c.l.b16 %v5228
    %v5270 = vunpack.c.h.b16 %v5228
    %v5271 = vunpack.c.l.b16 %v5229
    %v5272 = vunpack.c.h.b16 %v5229
    %v5273 = vunpack.c.l.b16 %v5230
    %v5274 = vunpack.c.h.b16 %v5230
    %v5275 = vunpack.c.l.b16 %v5231
    %v5276 = vunpack.c.h.b16 %v5231
    %v5277 = vunpack.c.l.b16 %v5232
    %v5278 = vunpack.c.h.b16 %v5232
    %v5279 = vunpack.c.l.b16 %v5233
    %v5280 = vunpack.c.h.b16 %v5233
    %v5281 = vunpack.c.l.b16 %v5234
    %v5282 = vunpack.c.h.b16 %v5234
    %v5283 = vpack.c.b16 %v5251, %v5251
    %v5284 = vpack.c.b16 %v5252, %v5252
    %v5285 = vpack.c.b16 %v5253, %v5253
    %v5286 = vpack.c.b16 %v5254, %v5254
    %v5287 = vpack.c.b16 %v5255, %v5255
    %v5288 = vpack.c.b16 %v5256, %v5256
    %v5289 = vpack.c.b16 %v5257, %v5257
    %v5290 = vpack.c.b16 %v5258, %v5258
    %v5291 = vpack.c.b16 %v5259, %v5259
    %v5292 = vpack.c.b16 %v5260, %v5260
    %v5293 = vpack.c.b16 %v5261, %v5261
    %v5294 = vpack.c.b16 %v5262, %v5262
    %v5295 = vpack.c.b16 %v5263, %v5263
    %v5296 = vpack.c.b16 %v5264, %v5264
    %v5297 = vpack.c.b16 %v5265, %v5265
    %v5298 = vpack.c.b16 %v5266, %v5266
    %v5299 = vpack.c.b16 %v5267, %v5267
    %v5300 = vpack.c.b16 %v5268, %v5268
    %v5301 = vpack.c.b16 %v5269, %v5269
    %v5302 = vpack.c.b16 %v5270, %v5270
    %v5303 = vpack.c.b16 %v5271, %v5271
    %v5304 = vpack.c.b16 %v5272, %v5272
    %v5305 = vpack.c.b16 %v5273, %v5273
    %v5306 = vpack.c.b16 %v5274, %v5274
    %v5307 = vpack.c.b16 %v5275, %v5275
    %v5308 = vpack.c.b16 %v5276, %v5276
    %v5309 = vpack.c.b16 %v5277, %v5277
    %v5310 = vpack.c.b16 %v5278, %v5278
    %v5311 = vpack.c.b16 %v5279, %v5279
    %v5312 = vpack.c.b16 %v5280, %v5280
    %v5313 = vpack.c.b16 %v5281, %v5281
    %v5314 = vpack.c.b16 %v5282, %v5282
    %vm5347 = vcmask 519168
    %5348 = vst.msk [vmem:[#allocation3] sm:$0xf] %vm5347, %v5283
    %5349 = vst.msk [vmem:[#allocation3 + $0x4] sm:$0xf] %vm5347, %v5284
    %5350 = vst.msk [vmem:[#allocation3 + $0x8] sm:$0xf] %vm5347, %v5285
    %5351 = vst.msk [vmem:[#allocation3 + $0xc] sm:$0xf] %vm5347, %v5286
    %5352 = vst.msk [vmem:[#allocation3 + $0x10] sm:$0xf] %vm5347, %v5287
    %5353 = vst.msk [vmem:[#allocation3 + $0x14] sm:$0xf] %vm5347, %v5288
    %5354 = vst.msk [vmem:[#allocation3 + $0x18] sm:$0xf] %vm5347, %v5289
    %5355 = vst.msk [vmem:[#allocation3 + $0x1c] sm:$0xf] %vm5347, %v5290
    %5356 = vst.msk [vmem:[#allocation3 + $0x20] sm:$0xf] %vm5347, %v5291
    %5357 = vst.msk [vmem:[#allocation3 + $0x24] sm:$0xf] %vm5347, %v5292
    %5358 = vst.msk [vmem:[#allocation3 + $0x28] sm:$0xf] %vm5347, %v5293
    %5359 = vst.msk [vmem:[#allocation3 + $0x2c] sm:$0xf] %vm5347, %v5294
    %5360 = vst.msk [vmem:[#allocation3 + $0x30] sm:$0xf] %vm5347, %v5295
    %5361 = vst.msk [vmem:[#allocation3 + $0x34] sm:$0xf] %vm5347, %v5296
    %5362 = vst.msk [vmem:[#allocation3 + $0x38] sm:$0xf] %vm5347, %v5297
    %5363 = vst.msk [vmem:[#allocation3 + $0x3c] sm:$0xf] %vm5347, %v5298
    %5364 = vst.msk [vmem:[#allocation3 + $0x40] sm:$0xf] %vm5347, %v5299
    %5365 = vst.msk [vmem:[#allocation3 + $0x44] sm:$0xf] %vm5347, %v5300
    %5366 = vst.msk [vmem:[#allocation3 + $0x48] sm:$0xf] %vm5347, %v5301
    %5367 = vst.msk [vmem:[#allocation3 + $0x4c] sm:$0xf] %vm5347, %v5302
    %5368 = vst.msk [vmem:[#allocation3 + $0x50] sm:$0xf] %vm5347, %v5303
    %5369 = vst.msk [vmem:[#allocation3 + $0x54] sm:$0xf] %vm5347, %v5304
    %5370 = vst.msk [vmem:[#allocation3 + $0x58] sm:$0xf] %vm5347, %v5305
    %5371 = vst.msk [vmem:[#allocation3 + $0x5c] sm:$0xf] %vm5347, %v5306
    %5372 = vst.msk [vmem:[#allocation3 + $0x60] sm:$0xf] %vm5347, %v5307
    %5373 = vst.msk [vmem:[#allocation3 + $0x64] sm:$0xf] %vm5347, %v5308
    %5374 = vst.msk [vmem:[#allocation3 + $0x68] sm:$0xf] %vm5347, %v5309
    %5375 = vst.msk [vmem:[#allocation3 + $0x6c] sm:$0xf] %vm5347, %v5310
    %5376 = vst.msk [vmem:[#allocation3 + $0x70] sm:$0xf] %vm5347, %v5311
    %5377 = vst.msk [vmem:[#allocation3 + $0x74] sm:$0xf] %vm5347, %v5312
    %5378 = vst.msk [vmem:[#allocation3 + $0x78] sm:$0xf] %vm5347, %v5313
    %5379 = vst.msk [vmem:[#allocation3 + $0x7c] sm:$0xf] %vm5347, %v5314
    // Predicated region
    $region18: #{tpu_custom_call.1} parent=1 // pred_check
      _
    $region19: #{tpu_custom_call.1} parent=1 // pred_check_branch
      %5381 = sbr.rel (0) target = $region21
    $region20: #{tpu_custom_call.1} parent=1 // pred_region
      %s5383 = ssub.s32 2048, 2048
      %5384 = vsyncadd [#allocation4], %s5383
      %s5385 = sshll.u32 [#allocation3], 4
      %s5386 = int_to_ptr.vmem [resolvable:$true] %s5385
      %5391 = dma.vmem_to_hbm [thread:$0]  %s5386, 2048, %s4, [#allocation4], 64, 64, 4
    $region21: #{tpu_custom_call.1} parent=1 // pred_fallthru
      _
    // Predicated region
    $region22: #{tpu_custom_call.1} parent=1 // pred_check
      _
    $region23: #{tpu_custom_call.1} parent=1 // pred_check_branch
      %5393 = sbr.rel (0) target = $region25
    $region24: #{tpu_custom_call.1} parent=1 // pred_region
      %5394 = dma.done [#allocation4], 2048
    $region25: #{tpu_custom_call.1} parent=1 // pred_fallthru
      _
    %5395 = vsyncpa [#allocation4], 1

</llo_original>
